<compile_context>
chip_gen: v6e
topology: v6e:2x2x1
jax: 0.10.0
libtpu: 0.0.40
codegen_flags: <defaults>
</compile_context>

<pallas_src>
import functools
import math

import jax
import jax.numpy as jnp
from jax.experimental import pallas as pl
from jax.experimental.pallas import tpu as pltpu

# ----------------------------- model config ---------------------------------
B = 2              # batch
L = 16             # sequence length (== seq_len)
DIM = 32           # transformer dim
HEAD_DIM = 16      # attention head dim -> 2 heads
NUM_HEADS = DIM // HEAD_DIM
DEPTH = 2          # number of transformer layers
MLP_RATIO = 4.0
HIDDEN = int(DIM * MLP_RATIO)   # 128
VOCAB = 64         # vocabulary size
VOCAB_PAD = ((VOCAB + 127) // 128) * 128    # 128: lane-dense logits
LN_EPS = 1e-6
INIT_STD = 0.02
IGNORE_INDEX = -100


# ----------------------------- in-kernel helpers ----------------------------
def _layernorm(x, w, b):
    mu = jnp.mean(x, axis=-1, keepdims=True)
    var = jnp.mean(jnp.square(x - mu), axis=-1, keepdims=True)
    return (x - mu) * jax.lax.rsqrt(var + LN_EPS) * w + b


# ----------------------------- fused forward kernel -------------------------
def fused_forward_kernel(seq_ref, mask_ref, emb_ref, pos_ref, mtok_ref,
                         wq_ref, wk_ref, wv_ref, wproj_ref,
                         wfc1_ref, wfc2_ref,
                         ln1w_ref, ln1b_ref, ln2w_ref, ln2b_ref,
                         outlnw_ref, outlnb_ref, wout_ref,
                         logits_ref, loss_ref,
                         *, depth, num_heads, head_dim, batch, seq_len,
                         vocab, vocab_pad, dim):
    n = batch * seq_len
    scale = 1.0 / math.sqrt(head_dim)

    seq = seq_ref[...]                                   # (N, 1) int32
    maskb = mask_ref[...] != 0                           # (N, 1) bool

    # ---- fused glue: embedding gather (one-hot matmul), mask token, pos ----
    vocab_iota = jax.lax.broadcasted_iota(jnp.int32, (n, vocab), 1)
    onehot = (vocab_iota == seq).astype(jnp.float32)     # (N, V)
    x = jnp.dot(onehot, emb_ref[...],
                preferred_element_type=jnp.float32)      # (N, D)
    x = jnp.where(maskb, mtok_ref[...], x)               # mask-token substitution
    pos_full = jnp.concatenate([pos_ref[...]] * batch, axis=0)   # (N, D)
    x = x + pos_full

    # ---- transformer trunk (unrolled; static weight indexing) ----
    for layer in range(depth):
        # pre-LN multi-head self-attention (bi-directional, no bias)
        h = _layernorm(x, ln1w_ref[layer], ln1b_ref[layer])
        attn_out = jnp.zeros((n, dim), jnp.float32)
        for hd_i in range(num_heads):
            w_idx = layer * num_heads + hd_i
            # per-head projection weights -> no lane slicing of activations
            q = jnp.dot(h, wq_ref[w_idx],
                        preferred_element_type=jnp.float32) * scale   # (N, hd)
            k = jnp.dot(h, wk_ref[w_idx],
                        preferred_element_type=jnp.float32)
            v = jnp.dot(h, wv_ref[w_idx],
                        preferred_element_type=jnp.float32)
            q3 = q.reshape(batch, seq_len, head_dim)
            k3 = k.reshape(batch, seq_len, head_dim)
            v3 = v.reshape(batch, seq_len, head_dim)
            s = jnp.einsum('bqd,bkd->bqk', q3, k3,
                           preferred_element_type=jnp.float32)        # (B,L,L)
            m = jnp.max(s, axis=-1, keepdims=True)
            p = jnp.exp(s - m)
            inv = pl.reciprocal(jnp.sum(p, axis=-1, keepdims=True), approx=True)
            o = jnp.einsum('bqk,bkd->bqd', p * inv, v3,
                           preferred_element_type=jnp.float32)        # (B,L,hd)
            # accumulate per-head output projections (== concat + full proj)
            attn_out = attn_out + jnp.dot(
                o.reshape(n, head_dim), wproj_ref[w_idx],
                preferred_element_type=jnp.float32)
        x = x + attn_out

        # pre-LN MLP
        h2 = _layernorm(x, ln2w_ref[layer], ln2b_ref[layer])
        ff = jnp.dot(h2, wfc1_ref[layer], preferred_element_type=jnp.float32)
        # TODO(synk): PyTorch nn.GELU() default is the exact erf form; tanh
        # approximation used here for Mosaic-safe lowering.
        ff = jax.nn.gelu(ff, approximate=True)
        x = x + jnp.dot(ff, wfc2_ref[layer], preferred_element_type=jnp.float32)

    # ---- final LayerNorm + to_logits (lane-dense: vocab padded to 128) ----
    hf = _layernorm(x, outlnw_ref[...], outlnb_ref[...])
    logits = jnp.dot(hf, wout_ref[...],
                     preferred_element_type=jnp.float32)              # (N, VPAD)
    logits_ref[...] = logits

    # ---- masked cross-entropy on the same VMEM-resident logits ----
    col = jax.lax.broadcasted_iota(jnp.int32, (n, vocab_pad), 1)
    logits_m = jnp.where(col < vocab, logits, jnp.float32(-1e30))     # mask pad cols
    tgt = jnp.where(maskb, seq, IGNORE_INDEX)                         # (N, 1) int32
    m = jnp.max(logits_m, axis=-1, keepdims=True)
    lse = jnp.log(jnp.sum(jnp.exp(logits_m - m), axis=-1, keepdims=True)) + m
    tgt_logit = jnp.sum(jnp.where(col == tgt, logits, 0.0),
                        axis=-1, keepdims=True)                       # (N, 1)
    valid = tgt != IGNORE_INDEX
    per_tok = jnp.where(valid, lse - tgt_logit, 0.0)
    total = jnp.sum(per_tok).reshape(1, 1)
    cnt = jnp.sum(valid.astype(jnp.float32)).reshape(1, 1)
    # NOTE: returns 0 when nothing is masked (PyTorch CE would give NaN);
    # benign here because generate_random_mask guarantees >= 1 masked token.
    loss_ref[...] = total / jnp.maximum(cnt, 1.0)


def _full_spec(shape):
    nd = len(shape)
    return pl.BlockSpec(shape, lambda i, _nd=nd: (0,) * _nd)


def fused_forward(params, seq2d, mask2d):
    """seq2d/mask2d: (B*L, 1) int32. Returns padded logits (B*L, VOCAB_PAD), loss (1,1)."""
    n = seq2d.shape[0]
    kernel = functools.partial(
        fused_forward_kernel, depth=DEPTH, num_heads=NUM_HEADS,
        head_dim=HEAD_DIM, batch=B, seq_len=L,
        vocab=VOCAB, vocab_pad=VOCAB_PAD, dim=DIM)
    in_arrays = (seq2d, mask2d,
                 params['emb'], params['pos'], params['mask_token'],
                 params['w_q'], params['w_k'], params['w_v'], params['w_proj'],
                 params['w_fc1'], params['w_fc2'],
                 params['ln1_w'], params['ln1_b'],
                 params['ln2_w'], params['ln2_b'],
                 params['out_ln_w'], params['out_ln_b'], params['w_out'])
    in_specs = [_full_spec(a.shape) for a in in_arrays]
    logits, loss2d = pl.pallas_call(
        kernel,
        out_shape=(jax.ShapeDtypeStruct((n, VOCAB_PAD), jnp.float32),
                   jax.ShapeDtypeStruct((1, 1), jnp.float32)),
        grid=(1,),
        in_specs=in_specs,
        out_specs=(_full_spec((n, VOCAB_PAD)), _full_spec((1, 1))),
        compiler_params=pltpu.CompilerParams(
            dimension_semantics=("arbitrary",)),
    )(*in_arrays)
    return logits, loss2d


# ----------------------------- parameters -----------------------------------
def init_params(key):
    ks = jax.random.split(key, 8)

    def nrm(k, shape):
        return INIT_STD * jax.random.normal(k, shape, jnp.float32)

    return {
        'emb': nrm(ks[0], (VOCAB, DIM)),
        'pos': nrm(ks[1], (L, DIM)),
        'mask_token': nrm(ks[2], (1, DIM)),
        'out_ln_w': jnp.ones((1, DIM), jnp.float32),
        'out_ln_b': jnp.zeros((1, DIM), jnp.float32),
        # Faithful to the reference: to_logits is zero-initialised; padded to
        # 128 lanes so the logits store path is lane-dense.
        'w_out': jnp.zeros((DIM, VOCAB_PAD), jnp.float32),
        # Per-layer, per-head weights stacked on a leading DEPTH*H axis so the
        # kernel never lane-slices activations at 16/32-element offsets.
        'w_q': nrm(ks[3], (DEPTH * NUM_HEADS, DIM, HEAD_DIM)),
        'w_k': nrm(ks[4], (DEPTH * NUM_HEADS, DIM, HEAD_DIM)),
        'w_v': nrm(ks[5], (DEPTH * NUM_HEADS, DIM, HEAD_DIM)),
        'w_proj': nrm(ks[6], (DEPTH * NUM_HEADS, HEAD_DIM, DIM)),
        'w_fc1': nrm(ks[7], (DEPTH, DIM, HIDDEN)),
        'w_fc2': nrm(jax.random.fold_in(key, 99), (DEPTH, HIDDEN, DIM)),
        'ln1_w': jnp.ones((DEPTH, 1, DIM), jnp.float32),
        'ln1_b': jnp.zeros((DEPTH, 1, DIM), jnp.float32),
        'ln2_w': jnp.ones((DEPTH, 1, DIM), jnp.float32),
        'ln2_b': jnp.zeros((DEPTH, 1, DIM), jnp.float32),
    }


# ----------------------------- forward ---------------------------------------
def generate_random_mask(key, b, l):
    """Each sample masks a uniform-random number of tokens in [1, L]."""
    k1, k2 = jax.random.split(key)
    num_trues = jax.random.randint(k1, (b,), 1, l + 1)
    scores = jax.random.uniform(k2, (b, l))
    ranks = jnp.argsort(jnp.argsort(scores, axis=-1), axis=-1)
    return ranks < num_trues[:, None]


@jax.jit
def maskgit_forward(params, seq, mask_key):
    b, l = seq.shape
    mask = generate_random_mask(mask_key, b, l)

    seq2d = seq.reshape(b * l, 1).astype(jnp.int32)
    mask2d = mask.reshape(b * l, 1).astype(jnp.int32)

    logits_pad, loss2d = fused_forward(params, seq2d, mask2d)
    logits = logits_pad[:, :VOCAB].reshape(b, l, VOCAB)
    loss = loss2d[0, 0]
    ppl = jnp.exp(loss)
    return loss, ppl, logits


# ----------------------------- main ------------------------------------------
if __name__ == "__main__":
    root = jax.random.PRNGKey(0)
    k_params, k_seq, k_mask, k_head = jax.random.split(root, 4)

    params = init_params(k_params)
    seq = jax.random.randint(k_seq, (B, L), 0, VOCAB, dtype=jnp.int32)

    # Run 1: faithful init (to_logits == 0) => loss must be exactly log(VOCAB).
    loss, ppl, logits = maskgit_forward(params, seq, k_mask)
    jax.block_until_ready((loss, ppl, logits))
    assert logits.shape == (B, L, VOCAB)
    assert jnp.isfinite(loss) and jnp.isfinite(ppl)
    assert abs(float(loss) - math.log(VOCAB)) < 1e-3, float(loss)
    assert abs(float(ppl) - VOCAB) < 0.5, float(ppl)

    # Run 2: randomly-initialised head to exercise the projection + CE numerics.
    w_out_small = INIT_STD * jax.random.normal(k_head, (DIM, VOCAB), jnp.float32)
    params_ex = dict(params)
    params_ex['w_out'] = jnp.pad(w_out_small, ((0, 0), (0, VOCAB_PAD - VOCAB)))
    loss2, ppl2, logits2 = maskgit_forward(params_ex, seq, k_mask)
    jax.block_until_ready((loss2, ppl2, logits2))
    assert jnp.isfinite(loss2) and jnp.isfinite(ppl2)
    assert bool(jnp.all(jnp.isfinite(logits2)))
    assert float(jnp.std(logits2)) > 0.0

    print("KERNEL_OK")
</pallas_src>

<mosaic_0001>
module attributes {stable_mosaic.version = 11 : i64} {
  func.func @fused_forward_kernel(%arg0: i32, %arg1: memref<32x1xi32, #tpu.memory_space<vmem>>, %arg2: memref<32x1xi32, #tpu.memory_space<vmem>>, %arg3: memref<64x32xf32, #tpu.memory_space<vmem>>, %arg4: memref<16x32xf32, #tpu.memory_space<vmem>>, %arg5: memref<1x32xf32, #tpu.memory_space<vmem>>, %arg6: memref<4x32x16xf32, #tpu.memory_space<vmem>>, %arg7: memref<4x32x16xf32, #tpu.memory_space<vmem>>, %arg8: memref<4x32x16xf32, #tpu.memory_space<vmem>>, %arg9: memref<4x16x32xf32, #tpu.memory_space<vmem>>, %arg10: memref<2x32x128xf32, #tpu.memory_space<vmem>>, %arg11: memref<2x128x32xf32, #tpu.memory_space<vmem>>, %arg12: memref<2x1x32xf32, #tpu.memory_space<vmem>>, %arg13: memref<2x1x32xf32, #tpu.memory_space<vmem>>, %arg14: memref<2x1x32xf32, #tpu.memory_space<vmem>>, %arg15: memref<2x1x32xf32, #tpu.memory_space<vmem>>, %arg16: memref<1x32xf32, #tpu.memory_space<vmem>>, %arg17: memref<1x32xf32, #tpu.memory_space<vmem>>, %arg18: memref<32x128xf32, #tpu.memory_space<vmem>>, %arg19: memref<32x128xf32, #tpu.memory_space<vmem>>, %arg20: memref<1x1xf32, #tpu.memory_space<vmem>>) attributes {dimension_semantics = [#tpu.dimension_semantics<arbitrary>], iteration_bounds = array<i64: 1>, scalar_prefetch = 0 : i64, scratch_operands = 0 : i64, tpu.core_type = #tpu.core_type<tc>, window_params = [{pipeline_mode = #tpu.pipeline_mode<synchronous>, transform_indices = @transform_0, window_bounds = array<i64: 32, 1>}, {pipeline_mode = #tpu.pipeline_mode<synchronous>, transform_indices = @transform_1, window_bounds = array<i64: 32, 1>}, {pipeline_mode = #tpu.pipeline_mode<synchronous>, transform_indices = @transform_2, window_bounds = array<i64: 64, 32>}, {pipeline_mode = #tpu.pipeline_mode<synchronous>, transform_indices = @transform_3, window_bounds = array<i64: 16, 32>}, {pipeline_mode = #tpu.pipeline_mode<synchronous>, transform_indices = @transform_4, window_bounds = array<i64: 1, 32>}, {pipeline_mode = #tpu.pipeline_mode<synchronous>, transform_indices = @transform_5, window_bounds = array<i64: 4, 32, 16>}, {pipeline_mode = #tpu.pipeline_mode<synchronous>, transform_indices = @transform_6, window_bounds = array<i64: 4, 32, 16>}, {pipeline_mode = #tpu.pipeline_mode<synchronous>, transform_indices = @transform_7, window_bounds = array<i64: 4, 32, 16>}, {pipeline_mode = #tpu.pipeline_mode<synchronous>, transform_indices = @transform_8, window_bounds = array<i64: 4, 16, 32>}, {pipeline_mode = #tpu.pipeline_mode<synchronous>, transform_indices = @transform_9, window_bounds = array<i64: 2, 32, 128>}, {pipeline_mode = #tpu.pipeline_mode<synchronous>, transform_indices = @transform_10, window_bounds = array<i64: 2, 128, 32>}, {pipeline_mode = #tpu.pipeline_mode<synchronous>, transform_indices = @transform_11, window_bounds = array<i64: 2, 1, 32>}, {pipeline_mode = #tpu.pipeline_mode<synchronous>, transform_indices = @transform_12, window_bounds = array<i64: 2, 1, 32>}, {pipeline_mode = #tpu.pipeline_mode<synchronous>, transform_indices = @transform_13, window_bounds = array<i64: 2, 1, 32>}, {pipeline_mode = #tpu.pipeline_mode<synchronous>, transform_indices = @transform_14, window_bounds = array<i64: 2, 1, 32>}, {pipeline_mode = #tpu.pipeline_mode<synchronous>, transform_indices = @transform_15, window_bounds = array<i64: 1, 32>}, {pipeline_mode = #tpu.pipeline_mode<synchronous>, transform_indices = @transform_16, window_bounds = array<i64: 1, 32>}, {pipeline_mode = #tpu.pipeline_mode<synchronous>, transform_indices = @transform_17, window_bounds = array<i64: 32, 128>}, {pipeline_mode = #tpu.pipeline_mode<synchronous>, transform_indices = @transform_18, window_bounds = array<i64: 32, 128>}, {pipeline_mode = #tpu.pipeline_mode<synchronous>, transform_indices = @transform_19, window_bounds = array<i64: 1, 1>}]} {
    %c0 = arith.constant 0 : index
    %c0_0 = arith.constant 0 : index
    %0 = vector.load %arg1[%c0, %c0_0] : memref<32x1xi32, #tpu.memory_space<vmem>>, vector<32x1xi32>
    %c0_1 = arith.constant 0 : index
    %c0_2 = arith.constant 0 : index
    %1 = vector.load %arg2[%c0_1, %c0_2] : memref<32x1xi32, #tpu.memory_space<vmem>>, vector<32x1xi32>
    %c0_i32 = arith.constant 0 : i32
    %2 = vector.broadcast %c0_i32 : i32 to vector<32x1xi32>
    %3 = arith.cmpi ne, %1, %2 : vector<32x1xi32>
    %4 = tpu.iota {dimensions = array<i32: 1>} : vector<32x64xi32>
    %5 = vector.broadcast %0 : vector<32x1xi32> to vector<32x64xi32>
    %6 = arith.cmpi eq, %4, %5 : vector<32x64xi32>
    %7 = arith.extui %6 : vector<32x64xi1> to vector<32x64xi32>
    %8 = arith.sitofp %7 : vector<32x64xi32> to vector<32x64xf32>
    %c0_3 = arith.constant 0 : index
    %c0_4 = arith.constant 0 : index
    %9 = vector.load %arg3[%c0_3, %c0_4] : memref<64x32xf32, #tpu.memory_space<vmem>>, vector<64x32xf32>
    %cst = arith.constant dense<0.000000e+00> : vector<32x32xf32>
    %10 = tpu.matmul %8, %9, %cst {dimension_numbers = #tpu.dot_dimension_numbers<[1], [0], [0], [1], [0, 0, 1, 1], [], []>} : vector<32x64xf32>, vector<64x32xf32>, vector<32x32xf32> -> vector<32x32xf32>
    %c0_5 = arith.constant 0 : index
    %c0_6 = arith.constant 0 : index
    %11 = vector.load %arg5[%c0_5, %c0_6] : memref<1x32xf32, #tpu.memory_space<vmem>>, vector<1x32xf32>
    %12 = vector.shape_cast %3 : vector<32x1xi1> to vector<32x1xi1>
    %13 = vector.broadcast %12 : vector<32x1xi1> to vector<32x32xi1>
    %14 = vector.shape_cast %11 : vector<1x32xf32> to vector<1x32xf32>
    %15 = vector.broadcast %14 : vector<1x32xf32> to vector<32x32xf32>
    %16 = arith.select %13, %15, %10 : vector<32x32xi1>, vector<32x32xf32>
    %c0_7 = arith.constant 0 : index
    %c0_8 = arith.constant 0 : index
    %17 = vector.load %arg4[%c0_7, %c0_8] : memref<16x32xf32, #tpu.memory_space<vmem>>, vector<16x32xf32>
    %18 = tpu.concatenate %17, %17 in 0 : vector<16x32xf32>, vector<16x32xf32> -> vector<32x32xf32>
    %19 = arith.addf %16, %18 : vector<32x32xf32>
    %c0_9 = arith.constant 0 : index
    %c0_10 = arith.constant 0 : index
    %c0_11 = arith.constant 0 : index
    %20 = vector.load %arg12[%c0_9, %c0_10, %c0_11] : memref<2x1x32xf32, #tpu.memory_space<vmem>>, vector<1x1x32xf32>
    %21 = vector.shape_cast %20 : vector<1x1x32xf32> to vector<1x32xf32>
    %c0_12 = arith.constant 0 : index
    %c0_13 = arith.constant 0 : index
    %c0_14 = arith.constant 0 : index
    %22 = vector.load %arg13[%c0_12, %c0_13, %c0_14] : memref<2x1x32xf32, #tpu.memory_space<vmem>>, vector<1x1x32xf32>
    %23 = vector.shape_cast %22 : vector<1x1x32xf32> to vector<1x32xf32>
    %cst_15 = arith.constant dense<0.000000e+00> : vector<32xf32>
    %24 = vector.multi_reduction <add>, %19, %cst_15 [1] : vector<32x32xf32> to vector<32xf32>
    %25 = vector.shape_cast %24 : vector<32xf32> to vector<32x1xf32>
    %cst_16 = arith.constant 3.200000e+01 : f32
    %26 = vector.broadcast %cst_16 : f32 to vector<32x1xf32>
    %27 = arith.divf %25, %26 : vector<32x1xf32>
    %28 = vector.broadcast %27 : vector<32x1xf32> to vector<32x32xf32>
    %29 = arith.subf %19, %28 : vector<32x32xf32>
    %30 = arith.mulf %29, %29 : vector<32x32xf32>
    %cst_17 = arith.constant dense<0.000000e+00> : vector<32xf32>
    %31 = vector.multi_reduction <add>, %30, %cst_17 [1] : vector<32x32xf32> to vector<32xf32>
    %32 = vector.shape_cast %31 : vector<32xf32> to vector<32x1xf32>
    %cst_18 = arith.constant 3.200000e+01 : f32
    %33 = vector.broadcast %cst_18 : f32 to vector<32x1xf32>
    %34 = arith.divf %32, %33 : vector<32x1xf32>
    %35 = vector.broadcast %27 : vector<32x1xf32> to vector<32x32xf32>
    %36 = arith.subf %19, %35 : vector<32x32xf32>
    %cst_19 = arith.constant 9.99999997E-7 : f32
    %37 = vector.broadcast %cst_19 : f32 to vector<32x1xf32>
    %38 = arith.addf %34, %37 : vector<32x1xf32>
    %39 = math.rsqrt %38 : vector<32x1xf32>
    %40 = vector.broadcast %39 : vector<32x1xf32> to vector<32x32xf32>
    %41 = arith.mulf %36, %40 : vector<32x32xf32>
    %42 = vector.broadcast %21 : vector<1x32xf32> to vector<32x32xf32>
    %43 = arith.mulf %41, %42 : vector<32x32xf32>
    %44 = vector.broadcast %23 : vector<1x32xf32> to vector<32x32xf32>
    %45 = arith.addf %43, %44 : vector<32x32xf32>
    %cst_20 = arith.constant 0.000000e+00 : f32
    %46 = vector.broadcast %cst_20 : f32 to vector<32x32xf32>
    %c0_21 = arith.constant 0 : index
    %c0_22 = arith.constant 0 : index
    %c0_23 = arith.constant 0 : index
    %47 = vector.load %arg6[%c0_21, %c0_22, %c0_23] : memref<4x32x16xf32, #tpu.memory_space<vmem>>, vector<1x32x16xf32>
    %48 = vector.shape_cast %47 : vector<1x32x16xf32> to vector<32x16xf32>
    %cst_24 = arith.constant dense<0.000000e+00> : vector<32x16xf32>
    %49 = tpu.matmul %45, %48, %cst_24 {dimension_numbers = #tpu.dot_dimension_numbers<[1], [0], [0], [1], [0, 0, 1, 1], [], []>} : vector<32x32xf32>, vector<32x16xf32>, vector<32x16xf32> -> vector<32x16xf32>
    %cst_25 = arith.constant 2.500000e-01 : f32
    %50 = vector.broadcast %cst_25 : f32 to vector<32x16xf32>
    %51 = arith.mulf %49, %50 : vector<32x16xf32>
    %c0_26 = arith.constant 0 : index
    %c0_27 = arith.constant 0 : index
    %c0_28 = arith.constant 0 : index
    %52 = vector.load %arg7[%c0_26, %c0_27, %c0_28] : memref<4x32x16xf32, #tpu.memory_space<vmem>>, vector<1x32x16xf32>
    %53 = vector.shape_cast %52 : vector<1x32x16xf32> to vector<32x16xf32>
    %cst_29 = arith.constant dense<0.000000e+00> : vector<32x16xf32>
    %54 = tpu.matmul %45, %53, %cst_29 {dimension_numbers = #tpu.dot_dimension_numbers<[1], [0], [0], [1], [0, 0, 1, 1], [], []>} : vector<32x32xf32>, vector<32x16xf32>, vector<32x16xf32> -> vector<32x16xf32>
    %c0_30 = arith.constant 0 : index
    %c0_31 = arith.constant 0 : index
    %c0_32 = arith.constant 0 : index
    %55 = vector.load %arg8[%c0_30, %c0_31, %c0_32] : memref<4x32x16xf32, #tpu.memory_space<vmem>>, vector<1x32x16xf32>
    %56 = vector.shape_cast %55 : vector<1x32x16xf32> to vector<32x16xf32>
    %cst_33 = arith.constant dense<0.000000e+00> : vector<32x16xf32>
    %57 = tpu.matmul %45, %56, %cst_33 {dimension_numbers = #tpu.dot_dimension_numbers<[1], [0], [0], [1], [0, 0, 1, 1], [], []>} : vector<32x32xf32>, vector<32x16xf32>, vector<32x16xf32> -> vector<32x16xf32>
    %58 = vector.shape_cast %51 : vector<32x16xf32> to vector<2x16x16xf32>
    %59 = vector.shape_cast %54 : vector<32x16xf32> to vector<2x16x16xf32>
    %60 = vector.shape_cast %57 : vector<32x16xf32> to vector<2x16x16xf32>
    "tpu.trace_start"() <{level = 10 : i32, message = "bqd,bkd->bqk"}> : () -> ()
    %cst_34 = arith.constant dense<0.000000e+00> : vector<2x16x16xf32>
    %61 = tpu.matmul %58, %59, %cst_34 {dimension_numbers = #tpu.dot_dimension_numbers<[2], [2], [1], [1], [0, 0, 0, 1, 1, 1], [0], [0]>} : vector<2x16x16xf32>, vector<2x16x16xf32>, vector<2x16x16xf32> -> vector<2x16x16xf32>
    "tpu.trace_stop"() : () -> ()
    %cst_35 = arith.constant dense<0xFF800000> : vector<2x16xf32>
    %62 = vector.multi_reduction <maximumf>, %61, %cst_35 [2] : vector<2x16x16xf32> to vector<2x16xf32>
    %63 = vector.shape_cast %62 : vector<2x16xf32> to vector<2x16x1xf32>
    %64 = vector.broadcast %63 : vector<2x16x1xf32> to vector<2x16x16xf32>
    %65 = arith.subf %61, %64 : vector<2x16x16xf32>
    %66 = math.exp %65 : vector<2x16x16xf32>
    %cst_36 = arith.constant dense<0.000000e+00> : vector<2x16xf32>
    %67 = vector.multi_reduction <add>, %66, %cst_36 [2] : vector<2x16x16xf32> to vector<2x16xf32>
    %68 = vector.shape_cast %67 : vector<2x16xf32> to vector<2x16x1xf32>
    %69 = tpu.reciprocal %68 {approx = true} : vector<2x16x1xf32> -> vector<2x16x1xf32>
    %70 = vector.broadcast %69 : vector<2x16x1xf32> to vector<2x16x16xf32>
    %71 = arith.mulf %66, %70 : vector<2x16x16xf32>
    "tpu.trace_start"() <{level = 10 : i32, message = "bqk,bkd->bqd"}> : () -> ()
    %cst_37 = arith.constant dense<0.000000e+00> : vector<2x16x16xf32>
    %72 = tpu.matmul %71, %60, %cst_37 {dimension_numbers = #tpu.dot_dimension_numbers<[2], [1], [1], [2], [0, 0, 0, 1, 1, 2], [0], [0]>} : vector<2x16x16xf32>, vector<2x16x16xf32>, vector<2x16x16xf32> -> vector<2x16x16xf32>
    "tpu.trace_stop"() : () -> ()
    %73 = vector.shape_cast %72 : vector<2x16x16xf32> to vector<32x16xf32>
    %c0_38 = arith.constant 0 : index
    %c0_39 = arith.constant 0 : index
    %c0_40 = arith.constant 0 : index
    %74 = vector.load %arg9[%c0_38, %c0_39, %c0_40] : memref<4x16x32xf32, #tpu.memory_space<vmem>>, vector<1x16x32xf32>
    %75 = vector.shape_cast %74 : vector<1x16x32xf32> to vector<16x32xf32>
    %cst_41 = arith.constant dense<0.000000e+00> : vector<32x32xf32>
    %76 = tpu.matmul %73, %75, %cst_41 {dimension_numbers = #tpu.dot_dimension_numbers<[1], [0], [0], [1], [0, 0, 1, 1], [], []>} : vector<32x16xf32>, vector<16x32xf32>, vector<32x32xf32> -> vector<32x32xf32>
    %77 = arith.addf %46, %76 : vector<32x32xf32>
    %c1 = arith.constant 1 : index
    %c0_42 = arith.constant 0 : index
    %c0_43 = arith.constant 0 : index
    %78 = vector.load %arg6[%c1, %c0_42, %c0_43] : memref<4x32x16xf32, #tpu.memory_space<vmem>>, vector<1x32x16xf32>
    %79 = vector.shape_cast %78 : vector<1x32x16xf32> to vector<32x16xf32>
    %cst_44 = arith.constant dense<0.000000e+00> : vector<32x16xf32>
    %80 = tpu.matmul %45, %79, %cst_44 {dimension_numbers = #tpu.dot_dimension_numbers<[1], [0], [0], [1], [0, 0, 1, 1], [], []>} : vector<32x32xf32>, vector<32x16xf32>, vector<32x16xf32> -> vector<32x16xf32>
    %cst_45 = arith.constant 2.500000e-01 : f32
    %81 = vector.broadcast %cst_45 : f32 to vector<32x16xf32>
    %82 = arith.mulf %80, %81 : vector<32x16xf32>
    %c1_46 = arith.constant 1 : index
    %c0_47 = arith.constant 0 : index
    %c0_48 = arith.constant 0 : index
    %83 = vector.load %arg7[%c1_46, %c0_47, %c0_48] : memref<4x32x16xf32, #tpu.memory_space<vmem>>, vector<1x32x16xf32>
    %84 = vector.shape_cast %83 : vector<1x32x16xf32> to vector<32x16xf32>
    %cst_49 = arith.constant dense<0.000000e+00> : vector<32x16xf32>
    %85 = tpu.matmul %45, %84, %cst_49 {dimension_numbers = #tpu.dot_dimension_numbers<[1], [0], [0], [1], [0, 0, 1, 1], [], []>} : vector<32x32xf32>, vector<32x16xf32>, vector<32x16xf32> -> vector<32x16xf32>
    %c1_50 = arith.constant 1 : index
    %c0_51 = arith.constant 0 : index
    %c0_52 = arith.constant 0 : index
    %86 = vector.load %arg8[%c1_50, %c0_51, %c0_52] : memref<4x32x16xf32, #tpu.memory_space<vmem>>, vector<1x32x16xf32>
    %87 = vector.shape_cast %86 : vector<1x32x16xf32> to vector<32x16xf32>
    %cst_53 = arith.constant dense<0.000000e+00> : vector<32x16xf32>
    %88 = tpu.matmul %45, %87, %cst_53 {dimension_numbers = #tpu.dot_dimension_numbers<[1], [0], [0], [1], [0, 0, 1, 1], [], []>} : vector<32x32xf32>, vector<32x16xf32>, vector<32x16xf32> -> vector<32x16xf32>
    %89 = vector.shape_cast %82 : vector<32x16xf32> to vector<2x16x16xf32>
    %90 = vector.shape_cast %85 : vector<32x16xf32> to vector<2x16x16xf32>
    %91 = vector.shape_cast %88 : vector<32x16xf32> to vector<2x16x16xf32>
    "tpu.trace_start"() <{level = 10 : i32, message = "bqd,bkd->bqk"}> : () -> ()
    %cst_54 = arith.constant dense<0.000000e+00> : vector<2x16x16xf32>
    %92 = tpu.matmul %89, %90, %cst_54 {dimension_numbers = #tpu.dot_dimension_numbers<[2], [2], [1], [1], [0, 0, 0, 1, 1, 1], [0], [0]>} : vector<2x16x16xf32>, vector<2x16x16xf32>, vector<2x16x16xf32> -> vector<2x16x16xf32>
    "tpu.trace_stop"() : () -> ()
    %cst_55 = arith.constant dense<0xFF800000> : vector<2x16xf32>
    %93 = vector.multi_reduction <maximumf>, %92, %cst_55 [2] : vector<2x16x16xf32> to vector<2x16xf32>
    %94 = vector.shape_cast %93 : vector<2x16xf32> to vector<2x16x1xf32>
    %95 = vector.broadcast %94 : vector<2x16x1xf32> to vector<2x16x16xf32>
    %96 = arith.subf %92, %95 : vector<2x16x16xf32>
    %97 = math.exp %96 : vector<2x16x16xf32>
    %cst_56 = arith.constant dense<0.000000e+00> : vector<2x16xf32>
    %98 = vector.multi_reduction <add>, %97, %cst_56 [2] : vector<2x16x16xf32> to vector<2x16xf32>
    %99 = vector.shape_cast %98 : vector<2x16xf32> to vector<2x16x1xf32>
    %100 = tpu.reciprocal %99 {approx = true} : vector<2x16x1xf32> -> vector<2x16x1xf32>
    %101 = vector.broadcast %100 : vector<2x16x1xf32> to vector<2x16x16xf32>
    %102 = arith.mulf %97, %101 : vector<2x16x16xf32>
    "tpu.trace_start"() <{level = 10 : i32, message = "bqk,bkd->bqd"}> : () -> ()
    %cst_57 = arith.constant dense<0.000000e+00> : vector<2x16x16xf32>
    %103 = tpu.matmul %102, %91, %cst_57 {dimension_numbers = #tpu.dot_dimension_numbers<[2], [1], [1], [2], [0, 0, 0, 1, 1, 2], [0], [0]>} : vector<2x16x16xf32>, vector<2x16x16xf32>, vector<2x16x16xf32> -> vector<2x16x16xf32>
    "tpu.trace_stop"() : () -> ()
    %104 = vector.shape_cast %103 : vector<2x16x16xf32> to vector<32x16xf32>
    %c1_58 = arith.constant 1 : index
    %c0_59 = arith.constant 0 : index
    %c0_60 = arith.constant 0 : index
    %105 = vector.load %arg9[%c1_58, %c0_59, %c0_60] : memref<4x16x32xf32, #tpu.memory_space<vmem>>, vector<1x16x32xf32>
    %106 = vector.shape_cast %105 : vector<1x16x32xf32> to vector<16x32xf32>
    %cst_61 = arith.constant dense<0.000000e+00> : vector<32x32xf32>
    %107 = tpu.matmul %104, %106, %cst_61 {dimension_numbers = #tpu.dot_dimension_numbers<[1], [0], [0], [1], [0, 0, 1, 1], [], []>} : vector<32x16xf32>, vector<16x32xf32>, vector<32x32xf32> -> vector<32x32xf32>
    %108 = arith.addf %77, %107 : vector<32x32xf32>
    %109 = arith.addf %19, %108 : vector<32x32xf32>
    %c0_62 = arith.constant 0 : index
    %c0_63 = arith.constant 0 : index
    %c0_64 = arith.constant 0 : index
    %110 = vector.load %arg14[%c0_62, %c0_63, %c0_64] : memref<2x1x32xf32, #tpu.memory_space<vmem>>, vector<1x1x32xf32>
    %111 = vector.shape_cast %110 : vector<1x1x32xf32> to vector<1x32xf32>
    %c0_65 = arith.constant 0 : index
    %c0_66 = arith.constant 0 : index
    %c0_67 = arith.constant 0 : index
    %112 = vector.load %arg15[%c0_65, %c0_66, %c0_67] : memref<2x1x32xf32, #tpu.memory_space<vmem>>, vector<1x1x32xf32>
    %113 = vector.shape_cast %112 : vector<1x1x32xf32> to vector<1x32xf32>
    %cst_68 = arith.constant dense<0.000000e+00> : vector<32xf32>
    %114 = vector.multi_reduction <add>, %109, %cst_68 [1] : vector<32x32xf32> to vector<32xf32>
    %115 = vector.shape_cast %114 : vector<32xf32> to vector<32x1xf32>
    %cst_69 = arith.constant 3.200000e+01 : f32
    %116 = vector.broadcast %cst_69 : f32 to vector<32x1xf32>
    %117 = arith.divf %115, %116 : vector<32x1xf32>
    %118 = vector.broadcast %117 : vector<32x1xf32> to vector<32x32xf32>
    %119 = arith.subf %109, %118 : vector<32x32xf32>
    %120 = arith.mulf %119, %119 : vector<32x32xf32>
    %cst_70 = arith.constant dense<0.000000e+00> : vector<32xf32>
    %121 = vector.multi_reduction <add>, %120, %cst_70 [1] : vector<32x32xf32> to vector<32xf32>
    %122 = vector.shape_cast %121 : vector<32xf32> to vector<32x1xf32>
    %cst_71 = arith.constant 3.200000e+01 : f32
    %123 = vector.broadcast %cst_71 : f32 to vector<32x1xf32>
    %124 = arith.divf %122, %123 : vector<32x1xf32>
    %125 = vector.broadcast %117 : vector<32x1xf32> to vector<32x32xf32>
    %126 = arith.subf %109, %125 : vector<32x32xf32>
    %cst_72 = arith.constant 9.99999997E-7 : f32
    %127 = vector.broadcast %cst_72 : f32 to vector<32x1xf32>
    %128 = arith.addf %124, %127 : vector<32x1xf32>
    %129 = math.rsqrt %128 : vector<32x1xf32>
    %130 = vector.broadcast %129 : vector<32x1xf32> to vector<32x32xf32>
    %131 = arith.mulf %126, %130 : vector<32x32xf32>
    %132 = vector.broadcast %111 : vector<1x32xf32> to vector<32x32xf32>
    %133 = arith.mulf %131, %132 : vector<32x32xf32>
    %134 = vector.broadcast %113 : vector<1x32xf32> to vector<32x32xf32>
    %135 = arith.addf %133, %134 : vector<32x32xf32>
    %c0_73 = arith.constant 0 : index
    %c0_74 = arith.constant 0 : index
    %c0_75 = arith.constant 0 : index
    %136 = vector.load %arg10[%c0_73, %c0_74, %c0_75] : memref<2x32x128xf32, #tpu.memory_space<vmem>>, vector<1x32x128xf32>
    %137 = vector.shape_cast %136 : vector<1x32x128xf32> to vector<32x128xf32>
    %cst_76 = arith.constant dense<0.000000e+00> : vector<32x128xf32>
    %138 = tpu.matmul %135, %137, %cst_76 {dimension_numbers = #tpu.dot_dimension_numbers<[1], [0], [0], [1], [0, 0, 1, 1], [], []>} : vector<32x32xf32>, vector<32x128xf32>, vector<32x128xf32> -> vector<32x128xf32>
    %139 = arith.mulf %138, %138 : vector<32x128xf32>
    %140 = arith.mulf %138, %139 : vector<32x128xf32>
    %cst_77 = arith.constant 4.471500e-02 : f32
    %141 = vector.broadcast %cst_77 : f32 to vector<32x128xf32>
    %142 = arith.mulf %141, %140 : vector<32x128xf32>
    %143 = arith.addf %138, %142 : vector<32x128xf32>
    %cst_78 = arith.constant 0.797884583 : f32
    %144 = vector.broadcast %cst_78 : f32 to vector<32x128xf32>
    %145 = arith.mulf %144, %143 : vector<32x128xf32>
    %146 = math.tanh %145 : vector<32x128xf32>
    %cst_79 = arith.constant 1.000000e+00 : f32
    %147 = vector.broadcast %cst_79 : f32 to vector<32x128xf32>
    %148 = arith.addf %147, %146 : vector<32x128xf32>
    %cst_80 = arith.constant 5.000000e-01 : f32
    %149 = vector.broadcast %cst_80 : f32 to vector<32x128xf32>
    %150 = arith.mulf %149, %148 : vector<32x128xf32>
    %151 = arith.mulf %138, %150 : vector<32x128xf32>
    %c0_81 = arith.constant 0 : index
    %c0_82 = arith.constant 0 : index
    %c0_83 = arith.constant 0 : index
    %152 = vector.load %arg11[%c0_81, %c0_82, %c0_83] : memref<2x128x32xf32, #tpu.memory_space<vmem>>, vector<1x128x32xf32>
    %153 = vector.shape_cast %152 : vector<1x128x32xf32> to vector<128x32xf32>
    %cst_84 = arith.constant dense<0.000000e+00> : vector<32x32xf32>
    %154 = tpu.matmul %151, %153, %cst_84 {dimension_numbers = #tpu.dot_dimension_numbers<[1], [0], [0], [1], [0, 0, 1, 1], [], []>} : vector<32x128xf32>, vector<128x32xf32>, vector<32x32xf32> -> vector<32x32xf32>
    %155 = arith.addf %109, %154 : vector<32x32xf32>
    %c1_85 = arith.constant 1 : index
    %c0_86 = arith.constant 0 : index
    %c0_87 = arith.constant 0 : index
    %156 = vector.load %arg12[%c1_85, %c0_86, %c0_87] : memref<2x1x32xf32, #tpu.memory_space<vmem>>, vector<1x1x32xf32>
    %157 = vector.shape_cast %156 : vector<1x1x32xf32> to vector<1x32xf32>
    %c1_88 = arith.constant 1 : index
    %c0_89 = arith.constant 0 : index
    %c0_90 = arith.constant 0 : index
    %158 = vector.load %arg13[%c1_88, %c0_89, %c0_90] : memref<2x1x32xf32, #tpu.memory_space<vmem>>, vector<1x1x32xf32>
    %159 = vector.shape_cast %158 : vector<1x1x32xf32> to vector<1x32xf32>
    %cst_91 = arith.constant dense<0.000000e+00> : vector<32xf32>
    %160 = vector.multi_reduction <add>, %155, %cst_91 [1] : vector<32x32xf32> to vector<32xf32>
    %161 = vector.shape_cast %160 : vector<32xf32> to vector<32x1xf32>
    %cst_92 = arith.constant 3.200000e+01 : f32
    %162 = vector.broadcast %cst_92 : f32 to vector<32x1xf32>
    %163 = arith.divf %161, %162 : vector<32x1xf32>
    %164 = vector.broadcast %163 : vector<32x1xf32> to vector<32x32xf32>
    %165 = arith.subf %155, %164 : vector<32x32xf32>
    %166 = arith.mulf %165, %165 : vector<32x32xf32>
    %cst_93 = arith.constant dense<0.000000e+00> : vector<32xf32>
    %167 = vector.multi_reduction <add>, %166, %cst_93 [1] : vector<32x32xf32> to vector<32xf32>
    %168 = vector.shape_cast %167 : vector<32xf32> to vector<32x1xf32>
    %cst_94 = arith.constant 3.200000e+01 : f32
    %169 = vector.broadcast %cst_94 : f32 to vector<32x1xf32>
    %170 = arith.divf %168, %169 : vector<32x1xf32>
    %171 = vector.broadcast %163 : vector<32x1xf32> to vector<32x32xf32>
    %172 = arith.subf %155, %171 : vector<32x32xf32>
    %cst_95 = arith.constant 9.99999997E-7 : f32
    %173 = vector.broadcast %cst_95 : f32 to vector<32x1xf32>
    %174 = arith.addf %170, %173 : vector<32x1xf32>
    %175 = math.rsqrt %174 : vector<32x1xf32>
    %176 = vector.broadcast %175 : vector<32x1xf32> to vector<32x32xf32>
    %177 = arith.mulf %172, %176 : vector<32x32xf32>
    %178 = vector.broadcast %157 : vector<1x32xf32> to vector<32x32xf32>
    %179 = arith.mulf %177, %178 : vector<32x32xf32>
    %180 = vector.broadcast %159 : vector<1x32xf32> to vector<32x32xf32>
    %181 = arith.addf %179, %180 : vector<32x32xf32>
    %cst_96 = arith.constant 0.000000e+00 : f32
    %182 = vector.broadcast %cst_96 : f32 to vector<32x32xf32>
    %c2 = arith.constant 2 : index
    %c0_97 = arith.constant 0 : index
    %c0_98 = arith.constant 0 : index
    %183 = vector.load %arg6[%c2, %c0_97, %c0_98] : memref<4x32x16xf32, #tpu.memory_space<vmem>>, vector<1x32x16xf32>
    %184 = vector.shape_cast %183 : vector<1x32x16xf32> to vector<32x16xf32>
    %cst_99 = arith.constant dense<0.000000e+00> : vector<32x16xf32>
    %185 = tpu.matmul %181, %184, %cst_99 {dimension_numbers = #tpu.dot_dimension_numbers<[1], [0], [0], [1], [0, 0, 1, 1], [], []>} : vector<32x32xf32>, vector<32x16xf32>, vector<32x16xf32> -> vector<32x16xf32>
    %cst_100 = arith.constant 2.500000e-01 : f32
    %186 = vector.broadcast %cst_100 : f32 to vector<32x16xf32>
    %187 = arith.mulf %185, %186 : vector<32x16xf32>
    %c2_101 = arith.constant 2 : index
    %c0_102 = arith.constant 0 : index
    %c0_103 = arith.constant 0 : index
    %188 = vector.load %arg7[%c2_101, %c0_102, %c0_103] : memref<4x32x16xf32, #tpu.memory_space<vmem>>, vector<1x32x16xf32>
    %189 = vector.shape_cast %188 : vector<1x32x16xf32> to vector<32x16xf32>
    %cst_104 = arith.constant dense<0.000000e+00> : vector<32x16xf32>
    %190 = tpu.matmul %181, %189, %cst_104 {dimension_numbers = #tpu.dot_dimension_numbers<[1], [0], [0], [1], [0, 0, 1, 1], [], []>} : vector<32x32xf32>, vector<32x16xf32>, vector<32x16xf32> -> vector<32x16xf32>
    %c2_105 = arith.constant 2 : index
    %c0_106 = arith.constant 0 : index
    %c0_107 = arith.constant 0 : index
    %191 = vector.load %arg8[%c2_105, %c0_106, %c0_107] : memref<4x32x16xf32, #tpu.memory_space<vmem>>, vector<1x32x16xf32>
    %192 = vector.shape_cast %191 : vector<1x32x16xf32> to vector<32x16xf32>
    %cst_108 = arith.constant dense<0.000000e+00> : vector<32x16xf32>
    %193 = tpu.matmul %181, %192, %cst_108 {dimension_numbers = #tpu.dot_dimension_numbers<[1], [0], [0], [1], [0, 0, 1, 1], [], []>} : vector<32x32xf32>, vector<32x16xf32>, vector<32x16xf32> -> vector<32x16xf32>
    %194 = vector.shape_cast %187 : vector<32x16xf32> to vector<2x16x16xf32>
    %195 = vector.shape_cast %190 : vector<32x16xf32> to vector<2x16x16xf32>
    %196 = vector.shape_cast %193 : vector<32x16xf32> to vector<2x16x16xf32>
    "tpu.trace_start"() <{level = 10 : i32, message = "bqd,bkd->bqk"}> : () -> ()
    %cst_109 = arith.constant dense<0.000000e+00> : vector<2x16x16xf32>
    %197 = tpu.matmul %194, %195, %cst_109 {dimension_numbers = #tpu.dot_dimension_numbers<[2], [2], [1], [1], [0, 0, 0, 1, 1, 1], [0], [0]>} : vector<2x16x16xf32>, vector<2x16x16xf32>, vector<2x16x16xf32> -> vector<2x16x16xf32>
    "tpu.trace_stop"() : () -> ()
    %cst_110 = arith.constant dense<0xFF800000> : vector<2x16xf32>
    %198 = vector.multi_reduction <maximumf>, %197, %cst_110 [2] : vector<2x16x16xf32> to vector<2x16xf32>
    %199 = vector.shape_cast %198 : vector<2x16xf32> to vector<2x16x1xf32>
    %200 = vector.broadcast %199 : vector<2x16x1xf32> to vector<2x16x16xf32>
    %201 = arith.subf %197, %200 : vector<2x16x16xf32>
    %202 = math.exp %201 : vector<2x16x16xf32>
    %cst_111 = arith.constant dense<0.000000e+00> : vector<2x16xf32>
    %203 = vector.multi_reduction <add>, %202, %cst_111 [2] : vector<2x16x16xf32> to vector<2x16xf32>
    %204 = vector.shape_cast %203 : vector<2x16xf32> to vector<2x16x1xf32>
    %205 = tpu.reciprocal %204 {approx = true} : vector<2x16x1xf32> -> vector<2x16x1xf32>
    %206 = vector.broadcast %205 : vector<2x16x1xf32> to vector<2x16x16xf32>
    %207 = arith.mulf %202, %206 : vector<2x16x16xf32>
    "tpu.trace_start"() <{level = 10 : i32, message = "bqk,bkd->bqd"}> : () -> ()
    %cst_112 = arith.constant dense<0.000000e+00> : vector<2x16x16xf32>
    %208 = tpu.matmul %207, %196, %cst_112 {dimension_numbers = #tpu.dot_dimension_numbers<[2], [1], [1], [2], [0, 0, 0, 1, 1, 2], [0], [0]>} : vector<2x16x16xf32>, vector<2x16x16xf32>, vector<2x16x16xf32> -> vector<2x16x16xf32>
    "tpu.trace_stop"() : () -> ()
    %209 = vector.shape_cast %208 : vector<2x16x16xf32> to vector<32x16xf32>
    %c2_113 = arith.constant 2 : index
    %c0_114 = arith.constant 0 : index
    %c0_115 = arith.constant 0 : index
    %210 = vector.load %arg9[%c2_113, %c0_114, %c0_115] : memref<4x16x32xf32, #tpu.memory_space<vmem>>, vector<1x16x32xf32>
    %211 = vector.shape_cast %210 : vector<1x16x32xf32> to vector<16x32xf32>
    %cst_116 = arith.constant dense<0.000000e+00> : vector<32x32xf32>
    %212 = tpu.matmul %209, %211, %cst_116 {dimension_numbers = #tpu.dot_dimension_numbers<[1], [0], [0], [1], [0, 0, 1, 1], [], []>} : vector<32x16xf32>, vector<16x32xf32>, vector<32x32xf32> -> vector<32x32xf32>
    %213 = arith.addf %182, %212 : vector<32x32xf32>
    %c3 = arith.constant 3 : index
    %c0_117 = arith.constant 0 : index
    %c0_118 = arith.constant 0 : index
    %214 = vector.load %arg6[%c3, %c0_117, %c0_118] : memref<4x32x16xf32, #tpu.memory_space<vmem>>, vector<1x32x16xf32>
    %215 = vector.shape_cast %214 : vector<1x32x16xf32> to vector<32x16xf32>
    %cst_119 = arith.constant dense<0.000000e+00> : vector<32x16xf32>
    %216 = tpu.matmul %181, %215, %cst_119 {dimension_numbers = #tpu.dot_dimension_numbers<[1], [0], [0], [1], [0, 0, 1, 1], [], []>} : vector<32x32xf32>, vector<32x16xf32>, vector<32x16xf32> -> vector<32x16xf32>
    %cst_120 = arith.constant 2.500000e-01 : f32
    %217 = vector.broadcast %cst_120 : f32 to vector<32x16xf32>
    %218 = arith.mulf %216, %217 : vector<32x16xf32>
    %c3_121 = arith.constant 3 : index
    %c0_122 = arith.constant 0 : index
    %c0_123 = arith.constant 0 : index
    %219 = vector.load %arg7[%c3_121, %c0_122, %c0_123] : memref<4x32x16xf32, #tpu.memory_space<vmem>>, vector<1x32x16xf32>
    %220 = vector.shape_cast %219 : vector<1x32x16xf32> to vector<32x16xf32>
    %cst_124 = arith.constant dense<0.000000e+00> : vector<32x16xf32>
    %221 = tpu.matmul %181, %220, %cst_124 {dimension_numbers = #tpu.dot_dimension_numbers<[1], [0], [0], [1], [0, 0, 1, 1], [], []>} : vector<32x32xf32>, vector<32x16xf32>, vector<32x16xf32> -> vector<32x16xf32>
    %c3_125 = arith.constant 3 : index
    %c0_126 = arith.constant 0 : index
    %c0_127 = arith.constant 0 : index
    %222 = vector.load %arg8[%c3_125, %c0_126, %c0_127] : memref<4x32x16xf32, #tpu.memory_space<vmem>>, vector<1x32x16xf32>
    %223 = vector.shape_cast %222 : vector<1x32x16xf32> to vector<32x16xf32>
    %cst_128 = arith.constant dense<0.000000e+00> : vector<32x16xf32>
    %224 = tpu.matmul %181, %223, %cst_128 {dimension_numbers = #tpu.dot_dimension_numbers<[1], [0], [0], [1], [0, 0, 1, 1], [], []>} : vector<32x32xf32>, vector<32x16xf32>, vector<32x16xf32> -> vector<32x16xf32>
    %225 = vector.shape_cast %218 : vector<32x16xf32> to vector<2x16x16xf32>
    %226 = vector.shape_cast %221 : vector<32x16xf32> to vector<2x16x16xf32>
    %227 = vector.shape_cast %224 : vector<32x16xf32> to vector<2x16x16xf32>
    "tpu.trace_start"() <{level = 10 : i32, message = "bqd,bkd->bqk"}> : () -> ()
    %cst_129 = arith.constant dense<0.000000e+00> : vector<2x16x16xf32>
    %228 = tpu.matmul %225, %226, %cst_129 {dimension_numbers = #tpu.dot_dimension_numbers<[2], [2], [1], [1], [0, 0, 0, 1, 1, 1], [0], [0]>} : vector<2x16x16xf32>, vector<2x16x16xf32>, vector<2x16x16xf32> -> vector<2x16x16xf32>
    "tpu.trace_stop"() : () -> ()
    %cst_130 = arith.constant dense<0xFF800000> : vector<2x16xf32>
    %229 = vector.multi_reduction <maximumf>, %228, %cst_130 [2] : vector<2x16x16xf32> to vector<2x16xf32>
    %230 = vector.shape_cast %229 : vector<2x16xf32> to vector<2x16x1xf32>
    %231 = vector.broadcast %230 : vector<2x16x1xf32> to vector<2x16x16xf32>
    %232 = arith.subf %228, %231 : vector<2x16x16xf32>
    %233 = math.exp %232 : vector<2x16x16xf32>
    %cst_131 = arith.constant dense<0.000000e+00> : vector<2x16xf32>
    %234 = vector.multi_reduction <add>, %233, %cst_131 [2] : vector<2x16x16xf32> to vector<2x16xf32>
    %235 = vector.shape_cast %234 : vector<2x16xf32> to vector<2x16x1xf32>
    %236 = tpu.reciprocal %235 {approx = true} : vector<2x16x1xf32> -> vector<2x16x1xf32>
    %237 = vector.broadcast %236 : vector<2x16x1xf32> to vector<2x16x16xf32>
    %238 = arith.mulf %233, %237 : vector<2x16x16xf32>
    "tpu.trace_start"() <{level = 10 : i32, message = "bqk,bkd->bqd"}> : () -> ()
    %cst_132 = arith.constant dense<0.000000e+00> : vector<2x16x16xf32>
    %239 = tpu.matmul %238, %227, %cst_132 {dimension_numbers = #tpu.dot_dimension_numbers<[2], [1], [1], [2], [0, 0, 0, 1, 1, 2], [0], [0]>} : vector<2x16x16xf32>, vector<2x16x16xf32>, vector<2x16x16xf32> -> vector<2x16x16xf32>
    "tpu.trace_stop"() : () -> ()
    %240 = vector.shape_cast %239 : vector<2x16x16xf32> to vector<32x16xf32>
    %c3_133 = arith.constant 3 : index
    %c0_134 = arith.constant 0 : index
    %c0_135 = arith.constant 0 : index
    %241 = vector.load %arg9[%c3_133, %c0_134, %c0_135] : memref<4x16x32xf32, #tpu.memory_space<vmem>>, vector<1x16x32xf32>
    %242 = vector.shape_cast %241 : vector<1x16x32xf32> to vector<16x32xf32>
    %cst_136 = arith.constant dense<0.000000e+00> : vector<32x32xf32>
    %243 = tpu.matmul %240, %242, %cst_136 {dimension_numbers = #tpu.dot_dimension_numbers<[1], [0], [0], [1], [0, 0, 1, 1], [], []>} : vector<32x16xf32>, vector<16x32xf32>, vector<32x32xf32> -> vector<32x32xf32>
    %244 = arith.addf %213, %243 : vector<32x32xf32>
    %245 = arith.addf %155, %244 : vector<32x32xf32>
    %c1_137 = arith.constant 1 : index
    %c0_138 = arith.constant 0 : index
    %c0_139 = arith.constant 0 : index
    %246 = vector.load %arg14[%c1_137, %c0_138, %c0_139] : memref<2x1x32xf32, #tpu.memory_space<vmem>>, vector<1x1x32xf32>
    %247 = vector.shape_cast %246 : vector<1x1x32xf32> to vector<1x32xf32>
    %c1_140 = arith.constant 1 : index
    %c0_141 = arith.constant 0 : index
    %c0_142 = arith.constant 0 : index
    %248 = vector.load %arg15[%c1_140, %c0_141, %c0_142] : memref<2x1x32xf32, #tpu.memory_space<vmem>>, vector<1x1x32xf32>
    %249 = vector.shape_cast %248 : vector<1x1x32xf32> to vector<1x32xf32>
    %cst_143 = arith.constant dense<0.000000e+00> : vector<32xf32>
    %250 = vector.multi_reduction <add>, %245, %cst_143 [1] : vector<32x32xf32> to vector<32xf32>
    %251 = vector.shape_cast %250 : vector<32xf32> to vector<32x1xf32>
    %cst_144 = arith.constant 3.200000e+01 : f32
    %252 = vector.broadcast %cst_144 : f32 to vector<32x1xf32>
    %253 = arith.divf %251, %252 : vector<32x1xf32>
    %254 = vector.broadcast %253 : vector<32x1xf32> to vector<32x32xf32>
    %255 = arith.subf %245, %254 : vector<32x32xf32>
    %256 = arith.mulf %255, %255 : vector<32x32xf32>
    %cst_145 = arith.constant dense<0.000000e+00> : vector<32xf32>
    %257 = vector.multi_reduction <add>, %256, %cst_145 [1] : vector<32x32xf32> to vector<32xf32>
    %258 = vector.shape_cast %257 : vector<32xf32> to vector<32x1xf32>
    %cst_146 = arith.constant 3.200000e+01 : f32
    %259 = vector.broadcast %cst_146 : f32 to vector<32x1xf32>
    %260 = arith.divf %258, %259 : vector<32x1xf32>
    %261 = vector.broadcast %253 : vector<32x1xf32> to vector<32x32xf32>
    %262 = arith.subf %245, %261 : vector<32x32xf32>
    %cst_147 = arith.constant 9.99999997E-7 : f32
    %263 = vector.broadcast %cst_147 : f32 to vector<32x1xf32>
    %264 = arith.addf %260, %263 : vector<32x1xf32>
    %265 = math.rsqrt %264 : vector<32x1xf32>
    %266 = vector.broadcast %265 : vector<32x1xf32> to vector<32x32xf32>
    %267 = arith.mulf %262, %266 : vector<32x32xf32>
    %268 = vector.broadcast %247 : vector<1x32xf32> to vector<32x32xf32>
    %269 = arith.mulf %267, %268 : vector<32x32xf32>
    %270 = vector.broadcast %249 : vector<1x32xf32> to vector<32x32xf32>
    %271 = arith.addf %269, %270 : vector<32x32xf32>
    %c1_148 = arith.constant 1 : index
    %c0_149 = arith.constant 0 : index
    %c0_150 = arith.constant 0 : index
    %272 = vector.load %arg10[%c1_148, %c0_149, %c0_150] : memref<2x32x128xf32, #tpu.memory_space<vmem>>, vector<1x32x128xf32>
    %273 = vector.shape_cast %272 : vector<1x32x128xf32> to vector<32x128xf32>
    %cst_151 = arith.constant dense<0.000000e+00> : vector<32x128xf32>
    %274 = tpu.matmul %271, %273, %cst_151 {dimension_numbers = #tpu.dot_dimension_numbers<[1], [0], [0], [1], [0, 0, 1, 1], [], []>} : vector<32x32xf32>, vector<32x128xf32>, vector<32x128xf32> -> vector<32x128xf32>
    %275 = arith.mulf %274, %274 : vector<32x128xf32>
    %276 = arith.mulf %274, %275 : vector<32x128xf32>
    %cst_152 = arith.constant 4.471500e-02 : f32
    %277 = vector.broadcast %cst_152 : f32 to vector<32x128xf32>
    %278 = arith.mulf %277, %276 : vector<32x128xf32>
    %279 = arith.addf %274, %278 : vector<32x128xf32>
    %cst_153 = arith.constant 0.797884583 : f32
    %280 = vector.broadcast %cst_153 : f32 to vector<32x128xf32>
    %281 = arith.mulf %280, %279 : vector<32x128xf32>
    %282 = math.tanh %281 : vector<32x128xf32>
    %cst_154 = arith.constant 1.000000e+00 : f32
    %283 = vector.broadcast %cst_154 : f32 to vector<32x128xf32>
    %284 = arith.addf %283, %282 : vector<32x128xf32>
    %cst_155 = arith.constant 5.000000e-01 : f32
    %285 = vector.broadcast %cst_155 : f32 to vector<32x128xf32>
    %286 = arith.mulf %285, %284 : vector<32x128xf32>
    %287 = arith.mulf %274, %286 : vector<32x128xf32>
    %c1_156 = arith.constant 1 : index
    %c0_157 = arith.constant 0 : index
    %c0_158 = arith.constant 0 : index
    %288 = vector.load %arg11[%c1_156, %c0_157, %c0_158] : memref<2x128x32xf32, #tpu.memory_space<vmem>>, vector<1x128x32xf32>
    %289 = vector.shape_cast %288 : vector<1x128x32xf32> to vector<128x32xf32>
    %cst_159 = arith.constant dense<0.000000e+00> : vector<32x32xf32>
    %290 = tpu.matmul %287, %289, %cst_159 {dimension_numbers = #tpu.dot_dimension_numbers<[1], [0], [0], [1], [0, 0, 1, 1], [], []>} : vector<32x128xf32>, vector<128x32xf32>, vector<32x32xf32> -> vector<32x32xf32>
    %291 = arith.addf %245, %290 : vector<32x32xf32>
    %c0_160 = arith.constant 0 : index
    %c0_161 = arith.constant 0 : index
    %292 = vector.load %arg16[%c0_160, %c0_161] : memref<1x32xf32, #tpu.memory_space<vmem>>, vector<1x32xf32>
    %c0_162 = arith.constant 0 : index
    %c0_163 = arith.constant 0 : index
    %293 = vector.load %arg17[%c0_162, %c0_163] : memref<1x32xf32, #tpu.memory_space<vmem>>, vector<1x32xf32>
    %cst_164 = arith.constant dense<0.000000e+00> : vector<32xf32>
    %294 = vector.multi_reduction <add>, %291, %cst_164 [1] : vector<32x32xf32> to vector<32xf32>
    %295 = vector.shape_cast %294 : vector<32xf32> to vector<32x1xf32>
    %cst_165 = arith.constant 3.200000e+01 : f32
    %296 = vector.broadcast %cst_165 : f32 to vector<32x1xf32>
    %297 = arith.divf %295, %296 : vector<32x1xf32>
    %298 = vector.broadcast %297 : vector<32x1xf32> to vector<32x32xf32>
    %299 = arith.subf %291, %298 : vector<32x32xf32>
    %300 = arith.mulf %299, %299 : vector<32x32xf32>
    %cst_166 = arith.constant dense<0.000000e+00> : vector<32xf32>
    %301 = vector.multi_reduction <add>, %300, %cst_166 [1] : vector<32x32xf32> to vector<32xf32>
    %302 = vector.shape_cast %301 : vector<32xf32> to vector<32x1xf32>
    %cst_167 = arith.constant 3.200000e+01 : f32
    %303 = vector.broadcast %cst_167 : f32 to vector<32x1xf32>
    %304 = arith.divf %302, %303 : vector<32x1xf32>
    %305 = vector.broadcast %297 : vector<32x1xf32> to vector<32x32xf32>
    %306 = arith.subf %291, %305 : vector<32x32xf32>
    %cst_168 = arith.constant 9.99999997E-7 : f32
    %307 = vector.broadcast %cst_168 : f32 to vector<32x1xf32>
    %308 = arith.addf %304, %307 : vector<32x1xf32>
    %309 = math.rsqrt %308 : vector<32x1xf32>
    %310 = vector.broadcast %309 : vector<32x1xf32> to vector<32x32xf32>
    %311 = arith.mulf %306, %310 : vector<32x32xf32>
    %312 = vector.broadcast %292 : vector<1x32xf32> to vector<32x32xf32>
    %313 = arith.mulf %311, %312 : vector<32x32xf32>
    %314 = vector.broadcast %293 : vector<1x32xf32> to vector<32x32xf32>
    %315 = arith.addf %313, %314 : vector<32x32xf32>
    %c0_169 = arith.constant 0 : index
    %c0_170 = arith.constant 0 : index
    %316 = vector.load %arg18[%c0_169, %c0_170] : memref<32x128xf32, #tpu.memory_space<vmem>>, vector<32x128xf32>
    %cst_171 = arith.constant dense<0.000000e+00> : vector<32x128xf32>
    %317 = tpu.matmul %315, %316, %cst_171 {dimension_numbers = #tpu.dot_dimension_numbers<[1], [0], [0], [1], [0, 0, 1, 1], [], []>} : vector<32x32xf32>, vector<32x128xf32>, vector<32x128xf32> -> vector<32x128xf32>
    %c0_172 = arith.constant 0 : index
    %c0_173 = arith.constant 0 : index
    %318 = vector.load %arg19[%c0_172, %c0_173] : memref<32x128xf32, #tpu.memory_space<vmem>>, vector<32x128xf32>
    tpu.vector_store %arg19[%c0_172, %c0_173], %317 {strides = array<i32>} : memref<32x128xf32, #tpu.memory_space<vmem>>, vector<32x128xf32>,
    %319 = tpu.iota {dimensions = array<i32: 1>} : vector<32x128xi32>
    %c64_i32 = arith.constant 64 : i32
    %320 = vector.broadcast %c64_i32 : i32 to vector<32x128xi32>
    %321 = arith.cmpi slt, %319, %320 : vector<32x128xi32>
    %cst_174 = arith.constant -1.000000e+30 : f32
    %322 = vector.broadcast %cst_174 : f32 to vector<32x128xf32>
    %323 = arith.select %321, %317, %322 : vector<32x128xi1>, vector<32x128xf32>
    %c-100_i32 = arith.constant -100 : i32
    %324 = vector.broadcast %c-100_i32 : i32 to vector<32x1xi32>
    %325 = arith.select %3, %0, %324 : vector<32x1xi1>, vector<32x1xi32>
    %cst_175 = arith.constant dense<0xFF800000> : vector<32xf32>
    %326 = vector.multi_reduction <maximumf>, %323, %cst_175 [1] : vector<32x128xf32> to vector<32xf32>
    %327 = vector.shape_cast %326 : vector<32xf32> to vector<32x1xf32>
    %328 = vector.broadcast %327 : vector<32x1xf32> to vector<32x128xf32>
    %329 = arith.subf %323, %328 : vector<32x128xf32>
    %330 = math.exp %329 : vector<32x128xf32>
    %cst_176 = arith.constant dense<0.000000e+00> : vector<32xf32>
    %331 = vector.multi_reduction <add>, %330, %cst_176 [1] : vector<32x128xf32> to vector<32xf32>
    %332 = vector.shape_cast %331 : vector<32xf32> to vector<32x1xf32>
    %333 = math.log %332 : vector<32x1xf32>
    %334 = arith.addf %333, %327 : vector<32x1xf32>
    %335 = vector.broadcast %325 : vector<32x1xi32> to vector<32x128xi32>
    %336 = arith.cmpi eq, %319, %335 : vector<32x128xi32>
    %cst_177 = arith.constant 0.000000e+00 : f32
    %337 = vector.broadcast %cst_177 : f32 to vector<32x128xf32>
    %338 = arith.select %336, %317, %337 : vector<32x128xi1>, vector<32x128xf32>
    %cst_178 = arith.constant dense<0.000000e+00> : vector<32xf32>
    %339 = vector.multi_reduction <add>, %338, %cst_178 [1] : vector<32x128xf32> to vector<32xf32>
    %340 = vector.shape_cast %339 : vector<32xf32> to vector<32x1xf32>
    %c-100_i32_179 = arith.constant -100 : i32
    %341 = vector.broadcast %c-100_i32_179 : i32 to vector<32x1xi32>
    %342 = arith.cmpi ne, %325, %341 : vector<32x1xi32>
    %343 = arith.subf %334, %340 : vector<32x1xf32>
    %cst_180 = arith.constant 0.000000e+00 : f32
    %344 = vector.broadcast %cst_180 : f32 to vector<32x1xf32>
    %345 = arith.select %342, %343, %344 : vector<32x1xi1>, vector<32x1xf32>
    %346 = vector.shape_cast %345 : vector<32x1xf32> to vector<1x32x1xf32>
    %cst_181 = arith.constant dense<0.000000e+00> : vector<1xf32>
    %347 = vector.multi_reduction <add>, %346, %cst_181 [1, 2] : vector<1x32x1xf32> to vector<1xf32>
    %348 = vector.shape_cast %347 : vector<1xf32> to vector<1x1x1xf32>
    %349 = vector.extract %348[0, 0, 0] : f32 from vector<1x1x1xf32>
    %350 = vector.broadcast %349 : f32 to vector<1x1xf32>
    %351 = arith.extui %342 : vector<32x1xi1> to vector<32x1xi32>
    %352 = arith.sitofp %351 : vector<32x1xi32> to vector<32x1xf32>
    %353 = vector.shape_cast %352 : vector<32x1xf32> to vector<1x32x1xf32>
    %cst_182 = arith.constant dense<0.000000e+00> : vector<1xf32>
    %354 = vector.multi_reduction <add>, %353, %cst_182 [1, 2] : vector<1x32x1xf32> to vector<1xf32>
    %355 = vector.shape_cast %354 : vector<1xf32> to vector<1x1x1xf32>
    %356 = vector.extract %355[0, 0, 0] : f32 from vector<1x1x1xf32>
    %357 = vector.broadcast %356 : f32 to vector<1x1xf32>
    %cst_183 = arith.constant 1.000000e+00 : f32
    %358 = vector.broadcast %cst_183 : f32 to vector<1x1xf32>
    %359 = arith.maximumf %357, %358 : vector<1x1xf32>
    %360 = arith.divf %350, %359 : vector<1x1xf32>
    %c0_184 = arith.constant 0 : index
    %c0_185 = arith.constant 0 : index
    %361 = vector.load %arg20[%c0_184, %c0_185] : memref<1x1xf32, #tpu.memory_space<vmem>>, vector<1x1xf32>
    tpu.vector_store %arg20[%c0_184, %c0_185], %360 {strides = array<i32>} : memref<1x1xf32, #tpu.memory_space<vmem>>, vector<1x1xf32>,
    return
  }
  func.func @transform_0(%arg0: i32) -> (i32, i32) {
    %c0_i32 = arith.constant 0 : i32
    %c0_i32_0 = arith.constant 0 : i32
    %c0_i32_1 = arith.constant 0 : i32
    return %c0_i32, %c0_i32_0 : i32, i32
  }
  func.func @transform_1(%arg0: i32) -> (i32, i32) {
    %c0_i32 = arith.constant 0 : i32
    %c0_i32_0 = arith.constant 0 : i32
    %c0_i32_1 = arith.constant 0 : i32
    return %c0_i32, %c0_i32_0 : i32, i32
  }
  func.func @transform_2(%arg0: i32) -> (i32, i32) {
    %c0_i32 = arith.constant 0 : i32
    %c0_i32_0 = arith.constant 0 : i32
    %c0_i32_1 = arith.constant 0 : i32
    return %c0_i32, %c0_i32_0 : i32, i32
  }
  func.func @transform_3(%arg0: i32) -> (i32, i32) {
    %c0_i32 = arith.constant 0 : i32
    %c0_i32_0 = arith.constant 0 : i32
    %c0_i32_1 = arith.constant 0 : i32
    return %c0_i32, %c0_i32_0 : i32, i32
  }
  func.func @transform_4(%arg0: i32) -> (i32, i32) {
    %c0_i32 = arith.constant 0 : i32
    %c0_i32_0 = arith.constant 0 : i32
    %c0_i32_1 = arith.constant 0 : i32
    return %c0_i32, %c0_i32_0 : i32, i32
  }
  func.func @transform_5(%arg0: i32) -> (i32, i32, i32) {
    %c0_i32 = arith.constant 0 : i32
    %c0_i32_0 = arith.constant 0 : i32
    %c0_i32_1 = arith.constant 0 : i32
    %c0_i32_2 = arith.constant 0 : i32
    return %c0_i32, %c0_i32_0, %c0_i32_1 : i32, i32, i32
  }
  func.func @transform_6(%arg0: i32) -> (i32, i32, i32) {
    %c0_i32 = arith.constant 0 : i32
    %c0_i32_0 = arith.constant 0 : i32
    %c0_i32_1 = arith.constant 0 : i32
    %c0_i32_2 = arith.constant 0 : i32
    return %c0_i32, %c0_i32_0, %c0_i32_1 : i32, i32, i32
  }
  func.func @transform_7(%arg0: i32) -> (i32, i32, i32) {
    %c0_i32 = arith.constant 0 : i32
    %c0_i32_0 = arith.constant 0 : i32
    %c0_i32_1 = arith.constant 0 : i32
    %c0_i32_2 = arith.constant 0 : i32
    return %c0_i32, %c0_i32_0, %c0_i32_1 : i32, i32, i32
  }
  func.func @transform_8(%arg0: i32) -> (i32, i32, i32) {
    %c0_i32 = arith.constant 0 : i32
    %c0_i32_0 = arith.constant 0 : i32
    %c0_i32_1 = arith.constant 0 : i32
    %c0_i32_2 = arith.constant 0 : i32
    return %c0_i32, %c0_i32_0, %c0_i32_1 : i32, i32, i32
  }
  func.func @transform_9(%arg0: i32) -> (i32, i32, i32) {
    %c0_i32 = arith.constant 0 : i32
    %c0_i32_0 = arith.constant 0 : i32
    %c0_i32_1 = arith.constant 0 : i32
    %c0_i32_2 = arith.constant 0 : i32
    return %c0_i32, %c0_i32_0, %c0_i32_1 : i32, i32, i32
  }
  func.func @transform_10(%arg0: i32) -> (i32, i32, i32) {
    %c0_i32 = arith.constant 0 : i32
    %c0_i32_0 = arith.constant 0 : i32
    %c0_i32_1 = arith.constant 0 : i32
    %c0_i32_2 = arith.constant 0 : i32
    return %c0_i32, %c0_i32_0, %c0_i32_1 : i32, i32, i32
  }
  func.func @transform_11(%arg0: i32) -> (i32, i32, i32) {
    %c0_i32 = arith.constant 0 : i32
    %c0_i32_0 = arith.constant 0 : i32
    %c0_i32_1 = arith.constant 0 : i32
    %c0_i32_2 = arith.constant 0 : i32
    return %c0_i32, %c0_i32_0, %c0_i32_1 : i32, i32, i32
  }
  func.func @transform_12(%arg0: i32) -> (i32, i32, i32) {
    %c0_i32 = arith.constant 0 : i32
    %c0_i32_0 = arith.constant 0 : i32
    %c0_i32_1 = arith.constant 0 : i32
    %c0_i32_2 = arith.constant 0 : i32
    return %c0_i32, %c0_i32_0, %c0_i32_1 : i32, i32, i32
  }
  func.func @transform_13(%arg0: i32) -> (i32, i32, i32) {
    %c0_i32 = arith.constant 0 : i32
    %c0_i32_0 = arith.constant 0 : i32
    %c0_i32_1 = arith.constant 0 : i32
    %c0_i32_2 = arith.constant 0 : i32
    return %c0_i32, %c0_i32_0, %c0_i32_1 : i32, i32, i32
  }
  func.func @transform_14(%arg0: i32) -> (i32, i32, i32) {
    %c0_i32 = arith.constant 0 : i32
    %c0_i32_0 = arith.constant 0 : i32
    %c0_i32_1 = arith.constant 0 : i32
    %c0_i32_2 = arith.constant 0 : i32
    return %c0_i32, %c0_i32_0, %c0_i32_1 : i32, i32, i32
  }
  func.func @transform_15(%arg0: i32) -> (i32, i32) {
    %c0_i32 = arith.constant 0 : i32
    %c0_i32_0 = arith.constant 0 : i32
    %c0_i32_1 = arith.constant 0 : i32
    return %c0_i32, %c0_i32_0 : i32, i32
  }
  func.func @transform_16(%arg0: i32) -> (i32, i32) {
    %c0_i32 = arith.constant 0 : i32
    %c0_i32_0 = arith.constant 0 : i32
    %c0_i32_1 = arith.constant 0 : i32
    return %c0_i32, %c0_i32_0 : i32, i32
  }
  func.func @transform_17(%arg0: i32) -> (i32, i32) {
    %c0_i32 = arith.constant 0 : i32
    %c0_i32_0 = arith.constant 0 : i32
    %c0_i32_1 = arith.constant 0 : i32
    return %c0_i32, %c0_i32_0 : i32, i32
  }
  func.func @transform_18(%arg0: i32) -> (i32, i32) {
    %c0_i32 = arith.constant 0 : i32
    %c0_i32_0 = arith.constant 0 : i32
    %c0_i32_1 = arith.constant 0 : i32
    return %c0_i32, %c0_i32_0 : i32, i32
  }
  func.func @transform_19(%arg0: i32) -> (i32, i32) {
    %c0_i32 = arith.constant 0 : i32
    %c0_i32_0 = arith.constant 0 : i32
    %c0_i32_1 = arith.constant 0 : i32
    return %c0_i32, %c0_i32_0 : i32, i32
  }
}

</mosaic_0001>

<llo_original>
// kernel: maskgit_forward.1
$region0: #{maskgit_forward.1}
  #allocation0 [shape = 'u32[]', space=smem, size = 0x4, offset = 0x4, fixed_abs, tag = 'smem constant byte address 0x4 - core index']
  #allocation1 [shape = 'u32[144,128]{1,0:T(1,128)}', space=vmem, size = 0x12000, scoped, tag = 'internal scratch']
  %s0 = inlined_call_operand.vmem [shape: s32[32,1], index: 0, kind: input, shape index: {}]
  %s1 = inlined_call_operand.vmem [shape: s32[32,1], index: 1, kind: input, shape index: {}]
  %s2 = inlined_call_operand.vmem [shape: f32[64,32], index: 2, kind: input, shape index: {}]
  %s3 = inlined_call_operand.vmem [shape: f32[16,32], index: 3, kind: input, shape index: {}]
  %s4 = inlined_call_operand.vmem [shape: f32[1,32], index: 4, kind: input, shape index: {}]
  %s5 = inlined_call_operand.vmem [shape: f32[4,32,16], index: 5, kind: input, shape index: {}]
  %s6 = inlined_call_operand.vmem [shape: f32[4,32,16], index: 6, kind: input, shape index: {}]
  %s7 = inlined_call_operand.vmem [shape: f32[4,32,16], index: 7, kind: input, shape index: {}]
  %s8 = inlined_call_operand.vmem [shape: f32[4,16,32], index: 8, kind: input, shape index: {}]
  %s9 = inlined_call_operand.vmem [shape: f32[2,32,128], index: 9, kind: input, shape index: {}]
  %s10 = inlined_call_operand.vmem [shape: f32[2,128,32], index: 10, kind: input, shape index: {}]
  %s11 = inlined_call_operand.vmem [shape: f32[2,1,32], index: 11, kind: input, shape index: {}]
  %s12 = inlined_call_operand.vmem [shape: f32[2,1,32], index: 12, kind: input, shape index: {}]
  %s13 = inlined_call_operand.vmem [shape: f32[2,1,32], index: 13, kind: input, shape index: {}]
  %s14 = inlined_call_operand.vmem [shape: f32[2,1,32], index: 14, kind: input, shape index: {}]
  %s15 = inlined_call_operand.vmem [shape: f32[1,32], index: 15, kind: input, shape index: {}]
  %s16 = inlined_call_operand.vmem [shape: f32[1,32], index: 16, kind: input, shape index: {}]
  %s17 = inlined_call_operand.vmem [shape: f32[32,128], index: 17, kind: input, shape index: {}]
  %s18 = inlined_call_operand.hbm [shape: f32[32,128], index: 18, kind: output, shape index: {0}]
  %s19 = inlined_call_operand.hbm [shape: f32[1,1], index: 19, kind: output, shape index: {1}]
  %20 = xla_tuple %s18, %s19
  %s21 = sld [smem:[#allocation0]]
  $region90: #{maskgit_forward.1} parent=0
    _
  %s23 = ssub.s32 1, %s21
  %s24 = scalar_select 0, %s23, %s21
  $region1: #{maskgit_forward.1} parent=0
    #allocation2 [shape = 'u8[16384]{0}', space=vmem, size = 0x4000, scoped, tag = 'output window, operand 0, single buffered']
    #allocation3 [shape = 's32[1]{0}', space=sflag, size = 0x4, scoped, tag = 'scoped memory for maskgit_forward.1']
    #allocation4 [shape = 'u8[512]{0}', space=vmem, size = 0x400, scoped, tag = 'output window, operand 1, single buffered']
    #allocation5 [shape = 's32[1]{0}', space=sflag, size = 0x4, scoped, tag = 'scoped memory for maskgit_forward.1']
    %25 = vsyncpa [#allocation3], 0
    %26 = vsyncpa [#allocation5], 0
    // Predicated region
    $region2: #{maskgit_forward.1} parent=1 // pred_check
      _
    $region3: #{maskgit_forward.1} parent=1 // pred_check_branch
      %28 = sbr.rel (0) target = $region5
    $region4: #{maskgit_forward.1} parent=1 // pred_region
      _
    $region5: #{maskgit_forward.1} parent=1 // pred_fallthru
      _
    // Predicated region
    $region6: #{maskgit_forward.1} parent=1 // pred_check
      _
    $region7: #{maskgit_forward.1} parent=1 // pred_check_branch
      %30 = sbr.rel (0) target = $region9
    $region8: #{maskgit_forward.1} parent=1 // pred_region
      _
    $region9: #{maskgit_forward.1} parent=1 // pred_fallthru
      _
    // Predicated region
    $region10: #{maskgit_forward.1} parent=1 // pred_check
      _
    $region11: #{maskgit_forward.1} parent=1 // pred_check_branch
      %32 = sbr.rel (0) target = $region13
    $region12: #{maskgit_forward.1} parent=1 // pred_region
      _
    $region13: #{maskgit_forward.1} parent=1 // pred_fallthru
      _
    // Predicated region
    $region14: #{maskgit_forward.1} parent=1 // pred_check
      _
    $region15: #{maskgit_forward.1} parent=1 // pred_check_branch
      %34 = sbr.rel (0) target = $region17
    $region16: #{maskgit_forward.1} parent=1 // pred_region
      _
    $region17: #{maskgit_forward.1} parent=1 // pred_fallthru
      _
    // Predicated region
    $region18: #{maskgit_forward.1} parent=1 // pred_check
      _
    $region19: #{maskgit_forward.1} parent=1 // pred_check_branch
      %36 = sbr.rel (0) target = $region21
    $region20: #{maskgit_forward.1} parent=1 // pred_region
      _
    $region21: #{maskgit_forward.1} parent=1 // pred_fallthru
      _
    // Predicated region
    $region22: #{maskgit_forward.1} parent=1 // pred_check
      _
    $region23: #{maskgit_forward.1} parent=1 // pred_check_branch
      %38 = sbr.rel (0) target = $region25
    $region24: #{maskgit_forward.1} parent=1 // pred_region
      _
    $region25: #{maskgit_forward.1} parent=1 // pred_fallthru
      _
    // Predicated region
    $region26: #{maskgit_forward.1} parent=1 // pred_check
      _
    $region27: #{maskgit_forward.1} parent=1 // pred_check_branch
      %40 = sbr.rel (0) target = $region29
    $region28: #{maskgit_forward.1} parent=1 // pred_region
      _
    $region29: #{maskgit_forward.1} parent=1 // pred_fallthru
      _
    // Predicated region
    $region30: #{maskgit_forward.1} parent=1 // pred_check
      _
    $region31: #{maskgit_forward.1} parent=1 // pred_check_branch
      %42 = sbr.rel (0) target = $region33
    $region32: #{maskgit_forward.1} parent=1 // pred_region
      _
    $region33: #{maskgit_forward.1} parent=1 // pred_fallthru
      _
    // Predicated region
    $region34: #{maskgit_forward.1} parent=1 // pred_check
      _
    $region35: #{maskgit_forward.1} parent=1 // pred_check_branch
      %44 = sbr.rel (0) target = $region37
    $region36: #{maskgit_forward.1} parent=1 // pred_region
      _
    $region37: #{maskgit_forward.1} parent=1 // pred_fallthru
      _
    // Predicated region
    $region38: #{maskgit_forward.1} parent=1 // pred_check
      _
    $region39: #{maskgit_forward.1} parent=1 // pred_check_branch
      %46 = sbr.rel (0) target = $region41
    $region40: #{maskgit_forward.1} parent=1 // pred_region
      _
    $region41: #{maskgit_forward.1} parent=1 // pred_fallthru
      _
    // Predicated region
    $region42: #{maskgit_forward.1} parent=1 // pred_check
      _
    $region43: #{maskgit_forward.1} parent=1 // pred_check_branch
      %48 = sbr.rel (0) target = $region45
    $region44: #{maskgit_forward.1} parent=1 // pred_region
      _
    $region45: #{maskgit_forward.1} parent=1 // pred_fallthru
      _
    // Predicated region
    $region46: #{maskgit_forward.1} parent=1 // pred_check
      _
    $region47: #{maskgit_forward.1} parent=1 // pred_check_branch
      %50 = sbr.rel (0) target = $region49
    $region48: #{maskgit_forward.1} parent=1 // pred_region
      _
    $region49: #{maskgit_forward.1} parent=1 // pred_fallthru
      _
    // Predicated region
    $region50: #{maskgit_forward.1} parent=1 // pred_check
      _
    $region51: #{maskgit_forward.1} parent=1 // pred_check_branch
      %52 = sbr.rel (0) target = $region53
    $region52: #{maskgit_forward.1} parent=1 // pred_region
      _
    $region53: #{maskgit_forward.1} parent=1 // pred_fallthru
      _
    // Predicated region
    $region54: #{maskgit_forward.1} parent=1 // pred_check
      _
    $region55: #{maskgit_forward.1} parent=1 // pred_check_branch
      %54 = sbr.rel (0) target = $region57
    $region56: #{maskgit_forward.1} parent=1 // pred_region
      _
    $region57: #{maskgit_forward.1} parent=1 // pred_fallthru
      _
    // Predicated region
    $region58: #{maskgit_forward.1} parent=1 // pred_check
      _
    $region59: #{maskgit_forward.1} parent=1 // pred_check_branch
      %56 = sbr.rel (0) target = $region61
    $region60: #{maskgit_forward.1} parent=1 // pred_region
      _
    $region61: #{maskgit_forward.1} parent=1 // pred_fallthru
      _
    // Predicated region
    $region62: #{maskgit_forward.1} parent=1 // pred_check
      _
    $region63: #{maskgit_forward.1} parent=1 // pred_check_branch
      %58 = sbr.rel (0) target = $region65
    $region64: #{maskgit_forward.1} parent=1 // pred_region
      _
    $region65: #{maskgit_forward.1} parent=1 // pred_fallthru
      _
    // Predicated region
    $region66: #{maskgit_forward.1} parent=1 // pred_check
      _
    $region67: #{maskgit_forward.1} parent=1 // pred_check_branch
      %60 = sbr.rel (0) target = $region69
    $region68: #{maskgit_forward.1} parent=1 // pred_region
      _
    $region69: #{maskgit_forward.1} parent=1 // pred_fallthru
      _
    // Predicated region
    $region70: #{maskgit_forward.1} parent=1 // pred_check
      _
    $region71: #{maskgit_forward.1} parent=1 // pred_check_branch
      %62 = sbr.rel (0) target = $region73
    $region72: #{maskgit_forward.1} parent=1 // pred_region
      _
    $region73: #{maskgit_forward.1} parent=1 // pred_fallthru
      _
    %v63 = vld [vmem:[%s0] sm:$0xff]
    %v64 = vld [vmem:[%s0 + $0x8] sm:$0xff]
    %v65 = vld [vmem:[%s0 + $0x10] sm:$0xff]
    %v66 = vld [vmem:[%s0 + $0x18] sm:$0xff]
    %v67 = vld [vmem:[%s1] sm:$0xff]
    %v68 = vld [vmem:[%s1 + $0x8] sm:$0xff]
    %v69 = vld [vmem:[%s1 + $0x10] sm:$0xff]
    %v70 = vld [vmem:[%s1 + $0x18] sm:$0xff]
    %vm71 = vcmp.ne.s32.totalorder %v67, 0
    %vm72 = vcmp.ne.s32.totalorder %v68, 0
    %vm73 = vcmp.ne.s32.totalorder %v69, 0
    %vm74 = vcmp.ne.s32.totalorder %v70, 0
    %v75 = vlaneseq
    %v76 = vand.u32 %v75, 127
    %77 = vset.pattern.permute.xlu0 0
    %78 = vperm.xlu0 %77, %v63
    %v79 = vpop.permute.xlu0 %78
    %80 = vset.pattern.permute.xlu0 0
    %81 = vperm.xlu0 %80, %v64
    %v82 = vpop.permute.xlu0 %81
    %83 = vset.pattern.permute.xlu0 0
    %84 = vperm.xlu0 %83, %v65
    %v85 = vpop.permute.xlu0 %84
    %86 = vset.pattern.permute.xlu0 0
    %87 = vperm.xlu0 %86, %v66
    %v88 = vpop.permute.xlu0 %87
    %vm89 = vcmp.eq.s32.totalorder %v76, %v79
    %vm90 = vcmp.eq.s32.totalorder %v76, %v82
    %vm91 = vcmp.eq.s32.totalorder %v76, %v85
    %vm92 = vcmp.eq.s32.totalorder %v76, %v88
    %v93 = vsel %vm89, 1, 0
    %v94 = vsel %vm90, 1, 0
    %v95 = vsel %vm91, 1, 0
    %v96 = vsel %vm92, 1, 0
    %v97 = vcvt.s32.f32 %v93
    %v98 = vcvt.s32.f32 %v94
    %v99 = vcvt.s32.f32 %v95
    %v100 = vcvt.s32.f32 %v96
    %v101 = vld [vmem:[%s2] sm:$0xff]
    %v102 = vld [vmem:[%s2 + $0x8] sm:$0xff]
    %v103 = vld [vmem:[%s2 + $0x10] sm:$0xff]
    %v104 = vld [vmem:[%s2 + $0x18] sm:$0xff]
    %v105 = vld [vmem:[%s2 + $0x20] sm:$0xff]
    %v106 = vld [vmem:[%s2 + $0x28] sm:$0xff]
    %v107 = vld [vmem:[%s2 + $0x30] sm:$0xff]
    %v108 = vld [vmem:[%s2 + $0x38] sm:$0xff]
    %vm109 = vcmask 523264
    %v111 = vsel %vm109, %v97, 0
    %v114 = vsel %vm109, %v98, 0
    %v117 = vsel %vm109, %v99, 0
    %v120 = vsel %vm109, %v100, 0
    %122 = vmatprep.subr.mxu0 0.0
    %123 = vmatpush1.msra.mxu0 0.0
    %124 = vmatprep.subr.mxu0 0.0
    %125 = vmatpush1.msra.mxu0 0.0
    %126 = vmatprep.subr.mxu0 0.0
    %127 = vmatpush1.msra.mxu0 0.0
    %128 = vmatprep.subr.mxu0 0.0
    %129 = vmatpush1.msra.mxu0 0.0
    %130 = vmatprep.subr.mxu0 0.0
    %131 = vmatpush1.msra.mxu0 0.0
    %132 = vmatprep.subr.mxu0 0.0
    %133 = vmatpush1.msra.mxu0 0.0
    %134 = vmatprep.subr.mxu0 0.0
    %135 = vmatpush1.msra.mxu0 0.0
    %136 = vmatprep.subr.mxu0 0.0
    %137 = vmatpush1.msra.mxu0 0.0
    %138 = vmatprep.subr.mxu0 0.0
    %139 = vmatpush1.msra.mxu0 %v108
    %140 = vmatprep.subr.mxu0 0.0
    %141 = vmatpush1.msra.mxu0 %v107
    %142 = vmatprep.subr.mxu0 0.0
    %143 = vmatpush1.msra.mxu0 %v106
    %144 = vmatprep.subr.mxu0 0.0
    %145 = vmatpush1.msra.mxu0 %v105
    %146 = vmatprep.subr.mxu0 0.0
    %147 = vmatpush1.msra.mxu0 %v104
    %148 = vmatprep.subr.mxu0 0.0
    %149 = vmatpush1.msra.mxu0 %v103
    %150 = vmatprep.subr.mxu0 0.0
    %151 = vmatpush1.msra.mxu0 %v102
    %152 = vmatprep.subr.mxu0 0.0
    %153 = vmatpush1.msra.mxu0 %v101
    %154 = vmatprep.subr.mxu0 0.0
    %155 = vmatpush2.msra.mxu0 0.0
    %156 = vmatprep.subr.mxu0 0.0
    %157 = vmatpush2.msra.mxu0 0.0
    %158 = vmatprep.subr.mxu0 0.0
    %159 = vmatpush2.msra.mxu0 0.0
    %160 = vmatprep.subr.mxu0 0.0
    %161 = vmatpush2.msra.mxu0 0.0
    %162 = vmatprep.subr.mxu0 0.0
    %163 = vmatpush2.msra.mxu0 0.0
    %164 = vmatprep.subr.mxu0 0.0
    %165 = vmatpush2.msra.mxu0 0.0
    %166 = vmatprep.subr.mxu0 0.0
    %167 = vmatpush2.msra.mxu0 0.0
    %168 = vmatprep.subr.mxu0 0.0
    %169 = vmatpush2.msra.mxu0 0.0
    %170 = vmatprep.subr.mxu0 0.0
    %171 = vmatpush2.msra.mxu0 0.0
    %172 = vmatprep.subr.mxu0 0.0
    %173 = vmatpush2.msra.mxu0 0.0
    %174 = vmatprep.subr.mxu0 0.0
    %175 = vmatpush2.msra.mxu0 0.0
    %176 = vmatprep.subr.mxu0 0.0
    %177 = vmatpush2.msra.mxu0 0.0
    %178 = vmatprep.subr.mxu0 0.0
    %179 = vmatpush2.msra.mxu0 0.0
    %180 = vmatprep.subr.mxu0 0.0
    %181 = vmatpush2.msra.mxu0 0.0
    %182 = vmatprep.subr.mxu0 0.0
    %183 = vmatpush2.msra.mxu0 0.0
    %184 = vmatprep.subr.mxu0 0.0
    %185 = vmatpush2.msra.mxu0 0.0
    %186 = vmatprep.mubr.f32.mxu0 0.0
    %187 = vmatmul.mubr.f32.gmra.mxu0 %v111
    %v188 = vpop.f32.mrf.mxu0
    %v189 = vadd.f32 0.0, %v188
    %v190 = vpop.f32.mrf.mxu0
    %191 = vmatprep.mubr.f32.mxu0 0.0
    %192 = vmatmul.mubr.f32.gmra.mxu0 %v114
    %v193 = vpop.f32.mrf.mxu0
    %v194 = vadd.f32 0.0, %v193
    %v195 = vpop.f32.mrf.mxu0
    %196 = vmatprep.mubr.f32.mxu0 0.0
    %197 = vmatmul.mubr.f32.gmra.mxu0 %v117
    %v198 = vpop.f32.mrf.mxu0
    %v199 = vadd.f32 0.0, %v198
    %v200 = vpop.f32.mrf.mxu0
    %201 = vmatprep.mubr.f32.mxu0 0.0
    %202 = vmatmul.mubr.f32.gmra.mxu0 %v120
    %v203 = vpop.f32.mrf.mxu0
    %v204 = vadd.f32 0.0, %v203
    %v205 = vpop.f32.mrf.mxu0
    %206 = vdwg.mxu0
    %v207 = vld [vmem:[%s4] sm:$0x1]
    %v208 = vsel %vm71, 1, 0
    %v209 = vsel %vm72, 1, 0
    %v210 = vsel %vm73, 1, 0
    %v211 = vsel %vm74, 1, 0
    %212 = vset.pattern.permute.xlu0 0
    %213 = vperm.xlu0 %212, %v208
    %v214 = vpop.permute.xlu0 %213
    %215 = vset.pattern.permute.xlu0 0
    %216 = vperm.xlu0 %215, %v209
    %v217 = vpop.permute.xlu0 %216
    %218 = vset.pattern.permute.xlu0 0
    %219 = vperm.xlu0 %218, %v210
    %v220 = vpop.permute.xlu0 %219
    %221 = vset.pattern.permute.xlu0 0
    %222 = vperm.xlu0 %221, %v211
    %v223 = vpop.permute.xlu0 %222
    %vm224 = vcmp.eq.s32.totalorder %v214, 1
    %vm225 = vcmp.eq.s32.totalorder %v217, 1
    %vm226 = vcmp.eq.s32.totalorder %v220, 1
    %vm227 = vcmp.eq.s32.totalorder %v223, 1
    %v229 = vlaneseq
    %v230 = vshrl.u32 %v229, 7
    %v231 = vsub.s32 0, %v230
    %v232 = vrot.slane %v207, %v231
    %v234 = vsel %vm224, %v232, %v189
    %v235 = vsel %vm225, %v232, %v194
    %v236 = vsel %vm226, %v232, %v199
    %v237 = vsel %vm227, %v232, %v204
    %v238 = vld [vmem:[%s3] sm:$0xff]
    %v239 = vld [vmem:[%s3 + $0x8] sm:$0xff]
    %v240 = vadd.f32 %v234, %v238
    %v241 = vadd.f32 %v235, %v239
    %v242 = vadd.f32 %v236, %v238
    %v243 = vadd.f32 %v237, %v239
    %v244 = vld [vmem:[%s11] sm:$0x1]
    %v245 = vld [vmem:[%s12] sm:$0x1]
    %vm246 = vcmask 261120
    %v247 = vsel %vm246, %v240, 0.0
    %248 = vadd.xlane.f32.xlu0 %v247
    %v249 = vpop.xlane.xlu0 %248
    %v250 = vsel %vm246, %v241, 0.0
    %251 = vadd.xlane.f32.xlu0 %v250
    %v252 = vpop.xlane.xlu0 %251
    %v253 = vsel %vm246, %v242, 0.0
    %254 = vadd.xlane.f32.xlu0 %v253
    %v255 = vpop.xlane.xlu0 %254
    %v256 = vsel %vm246, %v243, 0.0
    %257 = vadd.xlane.f32.xlu0 %v256
    %v258 = vpop.xlane.xlu0 %257
    %v259 = vrcp.pop 32.0
    %v260 = vmul.f32 %v249, %v259
    %v261 = vmul.f32 %v252, %v259
    %v262 = vmul.f32 %v255, %v259
    %v263 = vmul.f32 %v258, %v259
    %v264 = vsub.f32 %v240, %v260
    %v265 = vsub.f32 %v241, %v261
    %v266 = vsub.f32 %v242, %v262
    %v267 = vsub.f32 %v243, %v263
    %v268 = vmul.f32 %v264, %v264
    %v269 = vmul.f32 %v265, %v265
    %v270 = vmul.f32 %v266, %v266
    %v271 = vmul.f32 %v267, %v267
    %v272 = vsel %vm246, %v268, 0.0
    %273 = vadd.xlane.f32.xlu0 %v272
    %v274 = vpop.xlane.xlu0 %273
    %v275 = vsel %vm246, %v269, 0.0
    %276 = vadd.xlane.f32.xlu0 %v275
    %v277 = vpop.xlane.xlu0 %276
    %v278 = vsel %vm246, %v270, 0.0
    %279 = vadd.xlane.f32.xlu0 %v278
    %v280 = vpop.xlane.xlu0 %279
    %v281 = vsel %vm246, %v271, 0.0
    %282 = vadd.xlane.f32.xlu0 %v281
    %v283 = vpop.xlane.xlu0 %282
    %v284 = vmul.f32 %v274, %v259
    %v285 = vmul.f32 %v277, %v259
    %v286 = vmul.f32 %v280, %v259
    %v287 = vmul.f32 %v283, %v259
    %v288 = vadd.f32 %v284, 1e-06
    %v289 = vadd.f32 %v285, 1e-06
    %v290 = vadd.f32 %v286, 1e-06
    %v291 = vadd.f32 %v287, 1e-06
    %v292 = vrsqrt.pop %v288
    %v293 = vrsqrt.pop %v289
    %v294 = vrsqrt.pop %v290
    %v295 = vrsqrt.pop %v291
    %v296 = vmul.f32 %v264, %v292
    %v297 = vmul.f32 %v265, %v293
    %v298 = vmul.f32 %v266, %v294
    %v299 = vmul.f32 %v267, %v295
    %v301 = vlaneseq
    %v302 = vshrl.u32 %v301, 7
    %v303 = vsub.s32 0, %v302
    %v304 = vrot.slane %v244, %v303
    %v306 = vmul.f32 %v296, %v304
    %v307 = vmul.f32 %v297, %v304
    %v308 = vmul.f32 %v298, %v304
    %v309 = vmul.f32 %v299, %v304
    %v311 = vlaneseq
    %v312 = vshrl.u32 %v311, 7
    %v313 = vsub.s32 0, %v312
    %v314 = vrot.slane %v245, %v313
    %v316 = vadd.f32 %v306, %v314
    %v317 = vadd.f32 %v307, %v314
    %v318 = vadd.f32 %v308, %v314
    %v319 = vadd.f32 %v309, %v314
    %v320 = vld [vmem:[%s5] sm:$0xff]
    %v321 = vld [vmem:[%s5 + $0x8] sm:$0xff]
    %v322 = vld [vmem:[%s5 + $0x10] sm:$0xff]
    %v323 = vld [vmem:[%s5 + $0x18] sm:$0xff]
    %v325 = vsel %vm246, %v316, 0
    %v328 = vsel %vm246, %v317, 0
    %v331 = vsel %vm246, %v318, 0
    %v334 = vsel %vm246, %v319, 0
    %336 = vmatprep.subr.mxu0 0.0
    %337 = vmatpush1.msra.mxu0 0.0
    %338 = vmatprep.subr.mxu0 0.0
    %339 = vmatpush1.msra.mxu0 0.0
    %340 = vmatprep.subr.mxu0 0.0
    %341 = vmatpush1.msra.mxu0 0.0
    %342 = vmatprep.subr.mxu0 0.0
    %343 = vmatpush1.msra.mxu0 0.0
    %344 = vmatprep.subr.mxu0 0.0
    %345 = vmatpush1.msra.mxu0 0.0
    %346 = vmatprep.subr.mxu0 0.0
    %347 = vmatpush1.msra.mxu0 0.0
    %348 = vmatprep.subr.mxu0 0.0
    %349 = vmatpush1.msra.mxu0 0.0
    %350 = vmatprep.subr.mxu0 0.0
    %351 = vmatpush1.msra.mxu0 0.0
    %352 = vmatprep.subr.mxu0 0.0
    %353 = vmatpush1.msra.mxu0 0.0
    %354 = vmatprep.subr.mxu0 0.0
    %355 = vmatpush1.msra.mxu0 0.0
    %356 = vmatprep.subr.mxu0 0.0
    %357 = vmatpush1.msra.mxu0 0.0
    %358 = vmatprep.subr.mxu0 0.0
    %359 = vmatpush1.msra.mxu0 0.0
    %360 = vmatprep.subr.mxu0 0.0
    %361 = vmatpush1.msra.mxu0 %v323
    %362 = vmatprep.subr.mxu0 0.0
    %363 = vmatpush1.msra.mxu0 %v322
    %364 = vmatprep.subr.mxu0 0.0
    %365 = vmatpush1.msra.mxu0 %v321
    %366 = vmatprep.subr.mxu0 0.0
    %367 = vmatpush1.msra.mxu0 %v320
    %368 = vmatprep.subr.mxu0 0.0
    %369 = vmatpush2.msra.mxu0 0.0
    %370 = vmatprep.subr.mxu0 0.0
    %371 = vmatpush2.msra.mxu0 0.0
    %372 = vmatprep.subr.mxu0 0.0
    %373 = vmatpush2.msra.mxu0 0.0
    %374 = vmatprep.subr.mxu0 0.0
    %375 = vmatpush2.msra.mxu0 0.0
    %376 = vmatprep.subr.mxu0 0.0
    %377 = vmatpush2.msra.mxu0 0.0
    %378 = vmatprep.subr.mxu0 0.0
    %379 = vmatpush2.msra.mxu0 0.0
    %380 = vmatprep.subr.mxu0 0.0
    %381 = vmatpush2.msra.mxu0 0.0
    %382 = vmatprep.subr.mxu0 0.0
    %383 = vmatpush2.msra.mxu0 0.0
    %384 = vmatprep.subr.mxu0 0.0
    %385 = vmatpush2.msra.mxu0 0.0
    %386 = vmatprep.subr.mxu0 0.0
    %387 = vmatpush2.msra.mxu0 0.0
    %388 = vmatprep.subr.mxu0 0.0
    %389 = vmatpush2.msra.mxu0 0.0
    %390 = vmatprep.subr.mxu0 0.0
    %391 = vmatpush2.msra.mxu0 0.0
    %392 = vmatprep.subr.mxu0 0.0
    %393 = vmatpush2.msra.mxu0 0.0
    %394 = vmatprep.subr.mxu0 0.0
    %395 = vmatpush2.msra.mxu0 0.0
    %396 = vmatprep.subr.mxu0 0.0
    %397 = vmatpush2.msra.mxu0 0.0
    %398 = vmatprep.subr.mxu0 0.0
    %399 = vmatpush2.msra.mxu0 0.0
    %400 = vmatprep.mubr.f32.mxu0 0.0
    %401 = vmatmul.mubr.f32.gmra.mxu0 %v325
    %v402 = vpop.f32.mrf.mxu0
    %v403 = vadd.f32 0.0, %v402
    %v404 = vpop.f32.mrf.mxu0
    %405 = vmatprep.mubr.f32.mxu0 0.0
    %406 = vmatmul.mubr.f32.gmra.mxu0 %v328
    %v407 = vpop.f32.mrf.mxu0
    %v408 = vadd.f32 0.0, %v407
    %v409 = vpop.f32.mrf.mxu0
    %410 = vmatprep.mubr.f32.mxu0 0.0
    %411 = vmatmul.mubr.f32.gmra.mxu0 %v331
    %v412 = vpop.f32.mrf.mxu0
    %v413 = vadd.f32 0.0, %v412
    %v414 = vpop.f32.mrf.mxu0
    %415 = vmatprep.mubr.f32.mxu0 0.0
    %416 = vmatmul.mubr.f32.gmra.mxu0 %v334
    %v417 = vpop.f32.mrf.mxu0
    %v418 = vadd.f32 0.0, %v417
    %v419 = vpop.f32.mrf.mxu0
    %420 = vdwg.mxu0
    %v421 = vmul.f32 %v403, 0.25
    %v422 = vmul.f32 %v408, 0.25
    %v423 = vmul.f32 %v413, 0.25
    %v424 = vmul.f32 %v418, 0.25
    %v425 = vld [vmem:[%s6] sm:$0xff]
    %v426 = vld [vmem:[%s6 + $0x8] sm:$0xff]
    %v427 = vld [vmem:[%s6 + $0x10] sm:$0xff]
    %v428 = vld [vmem:[%s6 + $0x18] sm:$0xff]
    %429 = vmatprep.subr.mxu0 0.0
    %430 = vmatpush1.msra.mxu0 0.0
    %431 = vmatprep.subr.mxu0 0.0
    %432 = vmatpush1.msra.mxu0 0.0
    %433 = vmatprep.subr.mxu0 0.0
    %434 = vmatpush1.msra.mxu0 0.0
    %435 = vmatprep.subr.mxu0 0.0
    %436 = vmatpush1.msra.mxu0 0.0
    %437 = vmatprep.subr.mxu0 0.0
    %438 = vmatpush1.msra.mxu0 0.0
    %439 = vmatprep.subr.mxu0 0.0
    %440 = vmatpush1.msra.mxu0 0.0
    %441 = vmatprep.subr.mxu0 0.0
    %442 = vmatpush1.msra.mxu0 0.0
    %443 = vmatprep.subr.mxu0 0.0
    %444 = vmatpush1.msra.mxu0 0.0
    %445 = vmatprep.subr.mxu0 0.0
    %446 = vmatpush1.msra.mxu0 0.0
    %447 = vmatprep.subr.mxu0 0.0
    %448 = vmatpush1.msra.mxu0 0.0
    %449 = vmatprep.subr.mxu0 0.0
    %450 = vmatpush1.msra.mxu0 0.0
    %451 = vmatprep.subr.mxu0 0.0
    %452 = vmatpush1.msra.mxu0 0.0
    %453 = vmatprep.subr.mxu0 0.0
    %454 = vmatpush1.msra.mxu0 %v428
    %455 = vmatprep.subr.mxu0 0.0
    %456 = vmatpush1.msra.mxu0 %v427
    %457 = vmatprep.subr.mxu0 0.0
    %458 = vmatpush1.msra.mxu0 %v426
    %459 = vmatprep.subr.mxu0 0.0
    %460 = vmatpush1.msra.mxu0 %v425
    %461 = vmatprep.subr.mxu0 0.0
    %462 = vmatpush2.msra.mxu0 0.0
    %463 = vmatprep.subr.mxu0 0.0
    %464 = vmatpush2.msra.mxu0 0.0
    %465 = vmatprep.subr.mxu0 0.0
    %466 = vmatpush2.msra.mxu0 0.0
    %467 = vmatprep.subr.mxu0 0.0
    %468 = vmatpush2.msra.mxu0 0.0
    %469 = vmatprep.subr.mxu0 0.0
    %470 = vmatpush2.msra.mxu0 0.0
    %471 = vmatprep.subr.mxu0 0.0
    %472 = vmatpush2.msra.mxu0 0.0
    %473 = vmatprep.subr.mxu0 0.0
    %474 = vmatpush2.msra.mxu0 0.0
    %475 = vmatprep.subr.mxu0 0.0
    %476 = vmatpush2.msra.mxu0 0.0
    %477 = vmatprep.subr.mxu0 0.0
    %478 = vmatpush2.msra.mxu0 0.0
    %479 = vmatprep.subr.mxu0 0.0
    %480 = vmatpush2.msra.mxu0 0.0
    %481 = vmatprep.subr.mxu0 0.0
    %482 = vmatpush2.msra.mxu0 0.0
    %483 = vmatprep.subr.mxu0 0.0
    %484 = vmatpush2.msra.mxu0 0.0
    %485 = vmatprep.subr.mxu0 0.0
    %486 = vmatpush2.msra.mxu0 0.0
    %487 = vmatprep.subr.mxu0 0.0
    %488 = vmatpush2.msra.mxu0 0.0
    %489 = vmatprep.subr.mxu0 0.0
    %490 = vmatpush2.msra.mxu0 0.0
    %491 = vmatprep.subr.mxu0 0.0
    %492 = vmatpush2.msra.mxu0 0.0
    %493 = vmatprep.mubr.f32.mxu0 0.0
    %494 = vmatmul.mubr.f32.gmra.mxu0 %v325
    %v495 = vpop.f32.mrf.mxu0
    %v496 = vadd.f32 0.0, %v495
    %v497 = vpop.f32.mrf.mxu0
    %498 = vmatprep.mubr.f32.mxu0 0.0
    %499 = vmatmul.mubr.f32.gmra.mxu0 %v328
    %v500 = vpop.f32.mrf.mxu0
    %v501 = vadd.f32 0.0, %v500
    %v502 = vpop.f32.mrf.mxu0
    %503 = vmatprep.mubr.f32.mxu0 0.0
    %504 = vmatmul.mubr.f32.gmra.mxu0 %v331
    %v505 = vpop.f32.mrf.mxu0
    %v506 = vadd.f32 0.0, %v505
    %v507 = vpop.f32.mrf.mxu0
    %508 = vmatprep.mubr.f32.mxu0 0.0
    %509 = vmatmul.mubr.f32.gmra.mxu0 %v334
    %v510 = vpop.f32.mrf.mxu0
    %v511 = vadd.f32 0.0, %v510
    %v512 = vpop.f32.mrf.mxu0
    %513 = vdwg.mxu0
    %v514 = vld [vmem:[%s7] sm:$0xff]
    %v515 = vld [vmem:[%s7 + $0x8] sm:$0xff]
    %v516 = vld [vmem:[%s7 + $0x10] sm:$0xff]
    %v517 = vld [vmem:[%s7 + $0x18] sm:$0xff]
    %518 = vmatprep.subr.mxu0 0.0
    %519 = vmatpush1.msra.mxu0 0.0
    %520 = vmatprep.subr.mxu0 0.0
    %521 = vmatpush1.msra.mxu0 0.0
    %522 = vmatprep.subr.mxu0 0.0
    %523 = vmatpush1.msra.mxu0 0.0
    %524 = vmatprep.subr.mxu0 0.0
    %525 = vmatpush1.msra.mxu0 0.0
    %526 = vmatprep.subr.mxu0 0.0
    %527 = vmatpush1.msra.mxu0 0.0
    %528 = vmatprep.subr.mxu0 0.0
    %529 = vmatpush1.msra.mxu0 0.0
    %530 = vmatprep.subr.mxu0 0.0
    %531 = vmatpush1.msra.mxu0 0.0
    %532 = vmatprep.subr.mxu0 0.0
    %533 = vmatpush1.msra.mxu0 0.0
    %534 = vmatprep.subr.mxu0 0.0
    %535 = vmatpush1.msra.mxu0 0.0
    %536 = vmatprep.subr.mxu0 0.0
    %537 = vmatpush1.msra.mxu0 0.0
    %538 = vmatprep.subr.mxu0 0.0
    %539 = vmatpush1.msra.mxu0 0.0
    %540 = vmatprep.subr.mxu0 0.0
    %541 = vmatpush1.msra.mxu0 0.0
    %542 = vmatprep.subr.mxu0 0.0
    %543 = vmatpush1.msra.mxu0 %v517
    %544 = vmatprep.subr.mxu0 0.0
    %545 = vmatpush1.msra.mxu0 %v516
    %546 = vmatprep.subr.mxu0 0.0
    %547 = vmatpush1.msra.mxu0 %v515
    %548 = vmatprep.subr.mxu0 0.0
    %549 = vmatpush1.msra.mxu0 %v514
    %550 = vmatprep.subr.mxu0 0.0
    %551 = vmatpush2.msra.mxu0 0.0
    %552 = vmatprep.subr.mxu0 0.0
    %553 = vmatpush2.msra.mxu0 0.0
    %554 = vmatprep.subr.mxu0 0.0
    %555 = vmatpush2.msra.mxu0 0.0
    %556 = vmatprep.subr.mxu0 0.0
    %557 = vmatpush2.msra.mxu0 0.0
    %558 = vmatprep.subr.mxu0 0.0
    %559 = vmatpush2.msra.mxu0 0.0
    %560 = vmatprep.subr.mxu0 0.0
    %561 = vmatpush2.msra.mxu0 0.0
    %562 = vmatprep.subr.mxu0 0.0
    %563 = vmatpush2.msra.mxu0 0.0
    %564 = vmatprep.subr.mxu0 0.0
    %565 = vmatpush2.msra.mxu0 0.0
    %566 = vmatprep.subr.mxu0 0.0
    %567 = vmatpush2.msra.mxu0 0.0
    %568 = vmatprep.subr.mxu0 0.0
    %569 = vmatpush2.msra.mxu0 0.0
    %570 = vmatprep.subr.mxu0 0.0
    %571 = vmatpush2.msra.mxu0 0.0
    %572 = vmatprep.subr.mxu0 0.0
    %573 = vmatpush2.msra.mxu0 0.0
    %574 = vmatprep.subr.mxu0 0.0
    %575 = vmatpush2.msra.mxu0 0.0
    %576 = vmatprep.subr.mxu0 0.0
    %577 = vmatpush2.msra.mxu0 0.0
    %578 = vmatprep.subr.mxu0 0.0
    %579 = vmatpush2.msra.mxu0 0.0
    %580 = vmatprep.subr.mxu0 0.0
    %581 = vmatpush2.msra.mxu0 0.0
    %582 = vmatprep.mubr.f32.mxu0 0.0
    %583 = vmatmul.mubr.f32.gmra.mxu0 %v325
    %v584 = vpop.f32.mrf.mxu0
    %v585 = vadd.f32 0.0, %v584
    %v586 = vpop.f32.mrf.mxu0
    %587 = vmatprep.mubr.f32.mxu0 0.0
    %588 = vmatmul.mubr.f32.gmra.mxu0 %v328
    %v589 = vpop.f32.mrf.mxu0
    %v590 = vadd.f32 0.0, %v589
    %v591 = vpop.f32.mrf.mxu0
    %592 = vmatprep.mubr.f32.mxu0 0.0
    %593 = vmatmul.mubr.f32.gmra.mxu0 %v331
    %v594 = vpop.f32.mrf.mxu0
    %v595 = vadd.f32 0.0, %v594
    %v596 = vpop.f32.mrf.mxu0
    %597 = vmatprep.mubr.f32.mxu0 0.0
    %598 = vmatmul.mubr.f32.gmra.mxu0 %v334
    %v599 = vpop.f32.mrf.mxu0
    %v600 = vadd.f32 0.0, %v599
    %v601 = vpop.f32.mrf.mxu0
    %602 = vdwg.mxu0
    %vm603 = vcmask 130048
    %v605 = vsel %vm603, %v421, 0
    %v608 = vsel %vm603, %v422, 0
    %v611 = vsel %vm603, %v496, 0
    %v614 = vsel %vm603, %v501, 0
    %616 = vmatprep.subr.mxu0 0.0
    %617 = vmatpush1.xpose.msra.mxu0 0.0
    %618 = vmatprep.subr.mxu0 0.0
    %619 = vmatpush1.xpose.msra.mxu0 0.0
    %620 = vmatprep.subr.mxu0 0.0
    %621 = vmatpush1.xpose.msra.mxu0 0.0
    %622 = vmatprep.subr.mxu0 0.0
    %623 = vmatpush1.xpose.msra.mxu0 0.0
    %624 = vmatprep.subr.mxu0 0.0
    %625 = vmatpush1.xpose.msra.mxu0 0.0
    %626 = vmatprep.subr.mxu0 0.0
    %627 = vmatpush1.xpose.msra.mxu0 0.0
    %628 = vmatprep.subr.mxu0 0.0
    %629 = vmatpush1.xpose.msra.mxu0 0.0
    %630 = vmatprep.subr.mxu0 0.0
    %631 = vmatpush1.xpose.msra.mxu0 0.0
    %632 = vmatprep.subr.mxu0 0.0
    %633 = vmatpush1.xpose.msra.mxu0 0.0
    %634 = vmatprep.subr.mxu0 0.0
    %635 = vmatpush1.xpose.msra.mxu0 0.0
    %636 = vmatprep.subr.mxu0 0.0
    %637 = vmatpush1.xpose.msra.mxu0 0.0
    %638 = vmatprep.subr.mxu0 0.0
    %639 = vmatpush1.xpose.msra.mxu0 0.0
    %640 = vmatprep.subr.mxu0 0.0
    %641 = vmatpush1.xpose.msra.mxu0 0.0
    %642 = vmatprep.subr.mxu0 0.0
    %643 = vmatpush1.xpose.msra.mxu0 0.0
    %644 = vmatprep.subr.mxu0 0.0
    %645 = vmatpush1.xpose.msra.mxu0 %v614
    %646 = vmatprep.subr.mxu0 0.0
    %647 = vmatpush1.xpose.msra.mxu0 %v611
    %648 = vmatprep.subr.mxu0 0.0
    %649 = vmatpush2.xpose.msra.mxu0 0.0
    %650 = vmatprep.subr.mxu0 0.0
    %651 = vmatpush2.xpose.msra.mxu0 0.0
    %652 = vmatprep.subr.mxu0 0.0
    %653 = vmatpush2.xpose.msra.mxu0 0.0
    %654 = vmatprep.subr.mxu0 0.0
    %655 = vmatpush2.xpose.msra.mxu0 0.0
    %656 = vmatprep.subr.mxu0 0.0
    %657 = vmatpush2.xpose.msra.mxu0 0.0
    %658 = vmatprep.subr.mxu0 0.0
    %659 = vmatpush2.xpose.msra.mxu0 0.0
    %660 = vmatprep.subr.mxu0 0.0
    %661 = vmatpush2.xpose.msra.mxu0 0.0
    %662 = vmatprep.subr.mxu0 0.0
    %663 = vmatpush2.xpose.msra.mxu0 0.0
    %664 = vmatprep.subr.mxu0 0.0
    %665 = vmatpush2.xpose.msra.mxu0 0.0
    %666 = vmatprep.subr.mxu0 0.0
    %667 = vmatpush2.xpose.msra.mxu0 0.0
    %668 = vmatprep.subr.mxu0 0.0
    %669 = vmatpush2.xpose.msra.mxu0 0.0
    %670 = vmatprep.subr.mxu0 0.0
    %671 = vmatpush2.xpose.msra.mxu0 0.0
    %672 = vmatprep.subr.mxu0 0.0
    %673 = vmatpush2.xpose.msra.mxu0 0.0
    %674 = vmatprep.subr.mxu0 0.0
    %675 = vmatpush2.xpose.msra.mxu0 0.0
    %676 = vmatprep.subr.mxu0 0.0
    %677 = vmatpush2.xpose.msra.mxu0 0.0
    %678 = vmatprep.subr.mxu0 0.0
    %679 = vmatpush2.xpose.msra.mxu0 0.0
    %680 = vmatprep.mubr.f32.mxu0 0.0
    %681 = vmatmul.mubr.f32.gmra.mxu0 %v605
    %v682 = vpop.f32.mrf.mxu0
    %v683 = vadd.f32 0.0, %v682
    %v684 = vpop.f32.mrf.mxu0
    %685 = vmatprep.mubr.f32.mxu0 0.0
    %686 = vmatmul.mubr.f32.gmra.mxu0 %v608
    %v687 = vpop.f32.mrf.mxu0
    %v688 = vadd.f32 0.0, %v687
    %v689 = vpop.f32.mrf.mxu0
    %690 = vdwg.mxu0
    %v692 = vsel %vm603, %v423, 0
    %v695 = vsel %vm603, %v424, 0
    %v698 = vsel %vm603, %v506, 0
    %v701 = vsel %vm603, %v511, 0
    %703 = vmatprep.subr.mxu0 0.0
    %704 = vmatpush1.xpose.msra.mxu0 0.0
    %705 = vmatprep.subr.mxu0 0.0
    %706 = vmatpush1.xpose.msra.mxu0 0.0
    %707 = vmatprep.subr.mxu0 0.0
    %708 = vmatpush1.xpose.msra.mxu0 0.0
    %709 = vmatprep.subr.mxu0 0.0
    %710 = vmatpush1.xpose.msra.mxu0 0.0
    %711 = vmatprep.subr.mxu0 0.0
    %712 = vmatpush1.xpose.msra.mxu0 0.0
    %713 = vmatprep.subr.mxu0 0.0
    %714 = vmatpush1.xpose.msra.mxu0 0.0
    %715 = vmatprep.subr.mxu0 0.0
    %716 = vmatpush1.xpose.msra.mxu0 0.0
    %717 = vmatprep.subr.mxu0 0.0
    %718 = vmatpush1.xpose.msra.mxu0 0.0
    %719 = vmatprep.subr.mxu0 0.0
    %720 = vmatpush1.xpose.msra.mxu0 0.0
    %721 = vmatprep.subr.mxu0 0.0
    %722 = vmatpush1.xpose.msra.mxu0 0.0
    %723 = vmatprep.subr.mxu0 0.0
    %724 = vmatpush1.xpose.msra.mxu0 0.0
    %725 = vmatprep.subr.mxu0 0.0
    %726 = vmatpush1.xpose.msra.mxu0 0.0
    %727 = vmatprep.subr.mxu0 0.0
    %728 = vmatpush1.xpose.msra.mxu0 0.0
    %729 = vmatprep.subr.mxu0 0.0
    %730 = vmatpush1.xpose.msra.mxu0 0.0
    %731 = vmatprep.subr.mxu0 0.0
    %732 = vmatpush1.xpose.msra.mxu0 %v701
    %733 = vmatprep.subr.mxu0 0.0
    %734 = vmatpush1.xpose.msra.mxu0 %v698
    %735 = vmatprep.subr.mxu0 0.0
    %736 = vmatpush2.xpose.msra.mxu0 0.0
    %737 = vmatprep.subr.mxu0 0.0
    %738 = vmatpush2.xpose.msra.mxu0 0.0
    %739 = vmatprep.subr.mxu0 0.0
    %740 = vmatpush2.xpose.msra.mxu0 0.0
    %741 = vmatprep.subr.mxu0 0.0
    %742 = vmatpush2.xpose.msra.mxu0 0.0
    %743 = vmatprep.subr.mxu0 0.0
    %744 = vmatpush2.xpose.msra.mxu0 0.0
    %745 = vmatprep.subr.mxu0 0.0
    %746 = vmatpush2.xpose.msra.mxu0 0.0
    %747 = vmatprep.subr.mxu0 0.0
    %748 = vmatpush2.xpose.msra.mxu0 0.0
    %749 = vmatprep.subr.mxu0 0.0
    %750 = vmatpush2.xpose.msra.mxu0 0.0
    %751 = vmatprep.subr.mxu0 0.0
    %752 = vmatpush2.xpose.msra.mxu0 0.0
    %753 = vmatprep.subr.mxu0 0.0
    %754 = vmatpush2.xpose.msra.mxu0 0.0
    %755 = vmatprep.subr.mxu0 0.0
    %756 = vmatpush2.xpose.msra.mxu0 0.0
    %757 = vmatprep.subr.mxu0 0.0
    %758 = vmatpush2.xpose.msra.mxu0 0.0
    %759 = vmatprep.subr.mxu0 0.0
    %760 = vmatpush2.xpose.msra.mxu0 0.0
    %761 = vmatprep.subr.mxu0 0.0
    %762 = vmatpush2.xpose.msra.mxu0 0.0
    %763 = vmatprep.subr.mxu0 0.0
    %764 = vmatpush2.xpose.msra.mxu0 0.0
    %765 = vmatprep.subr.mxu0 0.0
    %766 = vmatpush2.xpose.msra.mxu0 0.0
    %767 = vmatprep.mubr.f32.mxu0 0.0
    %768 = vmatmul.mubr.f32.gmra.mxu0 %v692
    %v769 = vpop.f32.mrf.mxu0
    %v770 = vadd.f32 0.0, %v769
    %v771 = vpop.f32.mrf.mxu0
    %772 = vmatprep.mubr.f32.mxu0 0.0
    %773 = vmatmul.mubr.f32.gmra.mxu0 %v695
    %v774 = vpop.f32.mrf.mxu0
    %v775 = vadd.f32 0.0, %v774
    %v776 = vpop.f32.mrf.mxu0
    %777 = vdwg.mxu0
    %v778 = vsel %vm603, %v683, -inf
    %779 = vmax.xlane.f32.xlu0 %v778
    %v780 = vpop.xlane.xlu0 %779
    %v781 = vsel %vm603, %v688, -inf
    %782 = vmax.xlane.f32.xlu0 %v781
    %v783 = vpop.xlane.xlu0 %782
    %v784 = vsel %vm603, %v770, -inf
    %785 = vmax.xlane.f32.xlu0 %v784
    %v786 = vpop.xlane.xlu0 %785
    %v787 = vsel %vm603, %v775, -inf
    %788 = vmax.xlane.f32.xlu0 %v787
    %v789 = vpop.xlane.xlu0 %788
    %v790 = vsub.f32 %v683, %v780
    %v791 = vsub.f32 %v688, %v783
    %v792 = vsub.f32 %v770, %v786
    %v793 = vsub.f32 %v775, %v789
    %v794 = vmul.f32 %v790, 1.442695
    %v795 = vpow.pop %v794
    %v796 = vmul.f32 %v791, 1.442695
    %v797 = vpow.pop %v796
    %v798 = vmul.f32 %v792, 1.442695
    %v799 = vpow.pop %v798
    %v800 = vmul.f32 %v793, 1.442695
    %v801 = vpow.pop %v800
    %v802 = vsel %vm603, %v795, 0.0
    %803 = vadd.xlane.f32.xlu0 %v802
    %v804 = vpop.xlane.xlu0 %803
    %v805 = vsel %vm603, %v797, 0.0
    %806 = vadd.xlane.f32.xlu0 %v805
    %v807 = vpop.xlane.xlu0 %806
    %v808 = vsel %vm603, %v799, 0.0
    %809 = vadd.xlane.f32.xlu0 %v808
    %v810 = vpop.xlane.xlu0 %809
    %v811 = vsel %vm603, %v801, 0.0
    %812 = vadd.xlane.f32.xlu0 %v811
    %v813 = vpop.xlane.xlu0 %812
    %v814 = vrcp.pop %v804
    %v815 = vrcp.pop %v807
    %v816 = vrcp.pop %v810
    %v817 = vrcp.pop %v813
    %v818 = vmul.f32 %v795, %v814
    %v819 = vmul.f32 %v797, %v815
    %v820 = vmul.f32 %v799, %v816
    %v821 = vmul.f32 %v801, %v817
    %v823 = vsel %vm603, %v818, 0
    %v826 = vsel %vm603, %v819, 0
    %828 = vmatprep.subr.mxu0 0.0
    %829 = vmatpush1.msra.mxu0 0.0
    %830 = vmatprep.subr.mxu0 0.0
    %831 = vmatpush1.msra.mxu0 0.0
    %832 = vmatprep.subr.mxu0 0.0
    %833 = vmatpush1.msra.mxu0 0.0
    %834 = vmatprep.subr.mxu0 0.0
    %835 = vmatpush1.msra.mxu0 0.0
    %836 = vmatprep.subr.mxu0 0.0
    %837 = vmatpush1.msra.mxu0 0.0
    %838 = vmatprep.subr.mxu0 0.0
    %839 = vmatpush1.msra.mxu0 0.0
    %840 = vmatprep.subr.mxu0 0.0
    %841 = vmatpush1.msra.mxu0 0.0
    %842 = vmatprep.subr.mxu0 0.0
    %843 = vmatpush1.msra.mxu0 0.0
    %844 = vmatprep.subr.mxu0 0.0
    %845 = vmatpush1.msra.mxu0 0.0
    %846 = vmatprep.subr.mxu0 0.0
    %847 = vmatpush1.msra.mxu0 0.0
    %848 = vmatprep.subr.mxu0 0.0
    %849 = vmatpush1.msra.mxu0 0.0
    %850 = vmatprep.subr.mxu0 0.0
    %851 = vmatpush1.msra.mxu0 0.0
    %852 = vmatprep.subr.mxu0 0.0
    %853 = vmatpush1.msra.mxu0 0.0
    %854 = vmatprep.subr.mxu0 0.0
    %855 = vmatpush1.msra.mxu0 0.0
    %856 = vmatprep.subr.mxu0 0.0
    %857 = vmatpush1.msra.mxu0 %v590
    %858 = vmatprep.subr.mxu0 0.0
    %859 = vmatpush1.msra.mxu0 %v585
    %860 = vmatprep.subr.mxu0 0.0
    %861 = vmatpush2.msra.mxu0 0.0
    %862 = vmatprep.subr.mxu0 0.0
    %863 = vmatpush2.msra.mxu0 0.0
    %864 = vmatprep.subr.mxu0 0.0
    %865 = vmatpush2.msra.mxu0 0.0
    %866 = vmatprep.subr.mxu0 0.0
    %867 = vmatpush2.msra.mxu0 0.0
    %868 = vmatprep.subr.mxu0 0.0
    %869 = vmatpush2.msra.mxu0 0.0
    %870 = vmatprep.subr.mxu0 0.0
    %871 = vmatpush2.msra.mxu0 0.0
    %872 = vmatprep.subr.mxu0 0.0
    %873 = vmatpush2.msra.mxu0 0.0
    %874 = vmatprep.subr.mxu0 0.0
    %875 = vmatpush2.msra.mxu0 0.0
    %876 = vmatprep.subr.mxu0 0.0
    %877 = vmatpush2.msra.mxu0 0.0
    %878 = vmatprep.subr.mxu0 0.0
    %879 = vmatpush2.msra.mxu0 0.0
    %880 = vmatprep.subr.mxu0 0.0
    %881 = vmatpush2.msra.mxu0 0.0
    %882 = vmatprep.subr.mxu0 0.0
    %883 = vmatpush2.msra.mxu0 0.0
    %884 = vmatprep.subr.mxu0 0.0
    %885 = vmatpush2.msra.mxu0 0.0
    %886 = vmatprep.subr.mxu0 0.0
    %887 = vmatpush2.msra.mxu0 0.0
    %888 = vmatprep.subr.mxu0 0.0
    %889 = vmatpush2.msra.mxu0 0.0
    %890 = vmatprep.subr.mxu0 0.0
    %891 = vmatpush2.msra.mxu0 0.0
    %892 = vmatprep.mubr.f32.mxu0 0.0
    %893 = vmatmul.mubr.f32.gmra.mxu0 %v823
    %v894 = vpop.f32.mrf.mxu0
    %v895 = vadd.f32 0.0, %v894
    %v896 = vpop.f32.mrf.mxu0
    %897 = vmatprep.mubr.f32.mxu0 0.0
    %898 = vmatmul.mubr.f32.gmra.mxu0 %v826
    %v899 = vpop.f32.mrf.mxu0
    %v900 = vadd.f32 0.0, %v899
    %v901 = vpop.f32.mrf.mxu0
    %902 = vdwg.mxu0
    %v904 = vsel %vm603, %v820, 0
    %v907 = vsel %vm603, %v821, 0
    %909 = vmatprep.subr.mxu0 0.0
    %910 = vmatpush1.msra.mxu0 0.0
    %911 = vmatprep.subr.mxu0 0.0
    %912 = vmatpush1.msra.mxu0 0.0
    %913 = vmatprep.subr.mxu0 0.0
    %914 = vmatpush1.msra.mxu0 0.0
    %915 = vmatprep.subr.mxu0 0.0
    %916 = vmatpush1.msra.mxu0 0.0
    %917 = vmatprep.subr.mxu0 0.0
    %918 = vmatpush1.msra.mxu0 0.0
    %919 = vmatprep.subr.mxu0 0.0
    %920 = vmatpush1.msra.mxu0 0.0
    %921 = vmatprep.subr.mxu0 0.0
    %922 = vmatpush1.msra.mxu0 0.0
    %923 = vmatprep.subr.mxu0 0.0
    %924 = vmatpush1.msra.mxu0 0.0
    %925 = vmatprep.subr.mxu0 0.0
    %926 = vmatpush1.msra.mxu0 0.0
    %927 = vmatprep.subr.mxu0 0.0
    %928 = vmatpush1.msra.mxu0 0.0
    %929 = vmatprep.subr.mxu0 0.0
    %930 = vmatpush1.msra.mxu0 0.0
    %931 = vmatprep.subr.mxu0 0.0
    %932 = vmatpush1.msra.mxu0 0.0
    %933 = vmatprep.subr.mxu0 0.0
    %934 = vmatpush1.msra.mxu0 0.0
    %935 = vmatprep.subr.mxu0 0.0
    %936 = vmatpush1.msra.mxu0 0.0
    %937 = vmatprep.subr.mxu0 0.0
    %938 = vmatpush1.msra.mxu0 %v600
    %939 = vmatprep.subr.mxu0 0.0
    %940 = vmatpush1.msra.mxu0 %v595
    %941 = vmatprep.subr.mxu0 0.0
    %942 = vmatpush2.msra.mxu0 0.0
    %943 = vmatprep.subr.mxu0 0.0
    %944 = vmatpush2.msra.mxu0 0.0
    %945 = vmatprep.subr.mxu0 0.0
    %946 = vmatpush2.msra.mxu0 0.0
    %947 = vmatprep.subr.mxu0 0.0
    %948 = vmatpush2.msra.mxu0 0.0
    %949 = vmatprep.subr.mxu0 0.0
    %950 = vmatpush2.msra.mxu0 0.0
    %951 = vmatprep.subr.mxu0 0.0
    %952 = vmatpush2.msra.mxu0 0.0
    %953 = vmatprep.subr.mxu0 0.0
    %954 = vmatpush2.msra.mxu0 0.0
    %955 = vmatprep.subr.mxu0 0.0
    %956 = vmatpush2.msra.mxu0 0.0
    %957 = vmatprep.subr.mxu0 0.0
    %958 = vmatpush2.msra.mxu0 0.0
    %959 = vmatprep.subr.mxu0 0.0
    %960 = vmatpush2.msra.mxu0 0.0
    %961 = vmatprep.subr.mxu0 0.0
    %962 = vmatpush2.msra.mxu0 0.0
    %963 = vmatprep.subr.mxu0 0.0
    %964 = vmatpush2.msra.mxu0 0.0
    %965 = vmatprep.subr.mxu0 0.0
    %966 = vmatpush2.msra.mxu0 0.0
    %967 = vmatprep.subr.mxu0 0.0
    %968 = vmatpush2.msra.mxu0 0.0
    %969 = vmatprep.subr.mxu0 0.0
    %970 = vmatpush2.msra.mxu0 0.0
    %971 = vmatprep.subr.mxu0 0.0
    %972 = vmatpush2.msra.mxu0 0.0
    %973 = vmatprep.mubr.f32.mxu0 0.0
    %974 = vmatmul.mubr.f32.gmra.mxu0 %v904
    %v975 = vpop.f32.mrf.mxu0
    %v976 = vadd.f32 0.0, %v975
    %v977 = vpop.f32.mrf.mxu0
    %978 = vmatprep.mubr.f32.mxu0 0.0
    %979 = vmatmul.mubr.f32.gmra.mxu0 %v907
    %v980 = vpop.f32.mrf.mxu0
    %v981 = vadd.f32 0.0, %v980
    %v982 = vpop.f32.mrf.mxu0
    %983 = vdwg.mxu0
    %v984 = vld [vmem:[%s8] sm:$0xff]
    %v985 = vld [vmem:[%s8 + $0x8] sm:$0xff]
    %s986 = scalar_lea.vmem %s5, 32
    %v987 = vld [vmem:[%s986] sm:$0xff]
    %v988 = vld [vmem:[%s986 + $0x8] sm:$0xff]
    %v989 = vld [vmem:[%s986 + $0x10] sm:$0xff]
    %v990 = vld [vmem:[%s986 + $0x18] sm:$0xff]
    %991 = vmatprep.subr.mxu0 0.0
    %992 = vmatpush1.msra.mxu0 0.0
    %993 = vmatprep.subr.mxu0 0.0
    %994 = vmatpush1.msra.mxu0 0.0
    %995 = vmatprep.subr.mxu0 0.0
    %996 = vmatpush1.msra.mxu0 0.0
    %997 = vmatprep.subr.mxu0 0.0
    %998 = vmatpush1.msra.mxu0 0.0
    %999 = vmatprep.subr.mxu0 0.0
    %1000 = vmatpush1.msra.mxu0 0.0
    %1001 = vmatprep.subr.mxu0 0.0
    %1002 = vmatpush1.msra.mxu0 0.0
    %1003 = vmatprep.subr.mxu0 0.0
    %1004 = vmatpush1.msra.mxu0 0.0
    %1005 = vmatprep.subr.mxu0 0.0
    %1006 = vmatpush1.msra.mxu0 0.0
    %1007 = vmatprep.subr.mxu0 0.0
    %1008 = vmatpush1.msra.mxu0 0.0
    %1009 = vmatprep.subr.mxu0 0.0
    %1010 = vmatpush1.msra.mxu0 0.0
    %1011 = vmatprep.subr.mxu0 0.0
    %1012 = vmatpush1.msra.mxu0 0.0
    %1013 = vmatprep.subr.mxu0 0.0
    %1014 = vmatpush1.msra.mxu0 0.0
    %1015 = vmatprep.subr.mxu0 0.0
    %1016 = vmatpush1.msra.mxu0 %v990
    %1017 = vmatprep.subr.mxu0 0.0
    %1018 = vmatpush1.msra.mxu0 %v989
    %1019 = vmatprep.subr.mxu0 0.0
    %1020 = vmatpush1.msra.mxu0 %v988
    %1021 = vmatprep.subr.mxu0 0.0
    %1022 = vmatpush1.msra.mxu0 %v987
    %1023 = vmatprep.subr.mxu0 0.0
    %1024 = vmatpush2.msra.mxu0 0.0
    %1025 = vmatprep.subr.mxu0 0.0
    %1026 = vmatpush2.msra.mxu0 0.0
    %1027 = vmatprep.subr.mxu0 0.0
    %1028 = vmatpush2.msra.mxu0 0.0
    %1029 = vmatprep.subr.mxu0 0.0
    %1030 = vmatpush2.msra.mxu0 0.0
    %1031 = vmatprep.subr.mxu0 0.0
    %1032 = vmatpush2.msra.mxu0 0.0
    %1033 = vmatprep.subr.mxu0 0.0
    %1034 = vmatpush2.msra.mxu0 0.0
    %1035 = vmatprep.subr.mxu0 0.0
    %1036 = vmatpush2.msra.mxu0 0.0
    %1037 = vmatprep.subr.mxu0 0.0
    %1038 = vmatpush2.msra.mxu0 0.0
    %1039 = vmatprep.subr.mxu0 0.0
    %1040 = vmatpush2.msra.mxu0 0.0
    %1041 = vmatprep.subr.mxu0 0.0
    %1042 = vmatpush2.msra.mxu0 0.0
    %1043 = vmatprep.subr.mxu0 0.0
    %1044 = vmatpush2.msra.mxu0 0.0
    %1045 = vmatprep.subr.mxu0 0.0
    %1046 = vmatpush2.msra.mxu0 0.0
    %1047 = vmatprep.subr.mxu0 0.0
    %1048 = vmatpush2.msra.mxu0 0.0
    %1049 = vmatprep.subr.mxu0 0.0
    %1050 = vmatpush2.msra.mxu0 0.0
    %1051 = vmatprep.subr.mxu0 0.0
    %1052 = vmatpush2.msra.mxu0 0.0
    %1053 = vmatprep.subr.mxu0 0.0
    %1054 = vmatpush2.msra.mxu0 0.0
    %1055 = vmatprep.mubr.f32.mxu0 0.0
    %1056 = vmatmul.mubr.f32.gmra.mxu0 %v325
    %v1057 = vpop.f32.mrf.mxu0
    %v1058 = vadd.f32 0.0, %v1057
    %v1059 = vpop.f32.mrf.mxu0
    %1060 = vmatprep.mubr.f32.mxu0 0.0
    %1061 = vmatmul.mubr.f32.gmra.mxu0 %v328
    %v1062 = vpop.f32.mrf.mxu0
    %v1063 = vadd.f32 0.0, %v1062
    %v1064 = vpop.f32.mrf.mxu0
    %1065 = vmatprep.mubr.f32.mxu0 0.0
    %1066 = vmatmul.mubr.f32.gmra.mxu0 %v331
    %v1067 = vpop.f32.mrf.mxu0
    %v1068 = vadd.f32 0.0, %v1067
    %v1069 = vpop.f32.mrf.mxu0
    %1070 = vmatprep.mubr.f32.mxu0 0.0
    %1071 = vmatmul.mubr.f32.gmra.mxu0 %v334
    %v1072 = vpop.f32.mrf.mxu0
    %v1073 = vadd.f32 0.0, %v1072
    %v1074 = vpop.f32.mrf.mxu0
    %1075 = vdwg.mxu0
    %v1076 = vmul.f32 %v1058, 0.25
    %v1077 = vmul.f32 %v1063, 0.25
    %v1078 = vmul.f32 %v1068, 0.25
    %v1079 = vmul.f32 %v1073, 0.25
    %s1080 = scalar_lea.vmem %s6, 32
    %v1081 = vld [vmem:[%s1080] sm:$0xff]
    %v1082 = vld [vmem:[%s1080 + $0x8] sm:$0xff]
    %v1083 = vld [vmem:[%s1080 + $0x10] sm:$0xff]
    %v1084 = vld [vmem:[%s1080 + $0x18] sm:$0xff]
    %1085 = vmatprep.subr.mxu0 0.0
    %1086 = vmatpush1.msra.mxu0 0.0
    %1087 = vmatprep.subr.mxu0 0.0
    %1088 = vmatpush1.msra.mxu0 0.0
    %1089 = vmatprep.subr.mxu0 0.0
    %1090 = vmatpush1.msra.mxu0 0.0
    %1091 = vmatprep.subr.mxu0 0.0
    %1092 = vmatpush1.msra.mxu0 0.0
    %1093 = vmatprep.subr.mxu0 0.0
    %1094 = vmatpush1.msra.mxu0 0.0
    %1095 = vmatprep.subr.mxu0 0.0
    %1096 = vmatpush1.msra.mxu0 0.0
    %1097 = vmatprep.subr.mxu0 0.0
    %1098 = vmatpush1.msra.mxu0 0.0
    %1099 = vmatprep.subr.mxu0 0.0
    %1100 = vmatpush1.msra.mxu0 0.0
    %1101 = vmatprep.subr.mxu0 0.0
    %1102 = vmatpush1.msra.mxu0 0.0
    %1103 = vmatprep.subr.mxu0 0.0
    %1104 = vmatpush1.msra.mxu0 0.0
    %1105 = vmatprep.subr.mxu0 0.0
    %1106 = vmatpush1.msra.mxu0 0.0
    %1107 = vmatprep.subr.mxu0 0.0
    %1108 = vmatpush1.msra.mxu0 0.0
    %1109 = vmatprep.subr.mxu0 0.0
    %1110 = vmatpush1.msra.mxu0 %v1084
    %1111 = vmatprep.subr.mxu0 0.0
    %1112 = vmatpush1.msra.mxu0 %v1083
    %1113 = vmatprep.subr.mxu0 0.0
    %1114 = vmatpush1.msra.mxu0 %v1082
    %1115 = vmatprep.subr.mxu0 0.0
    %1116 = vmatpush1.msra.mxu0 %v1081
    %1117 = vmatprep.subr.mxu0 0.0
    %1118 = vmatpush2.msra.mxu0 0.0
    %1119 = vmatprep.subr.mxu0 0.0
    %1120 = vmatpush2.msra.mxu0 0.0
    %1121 = vmatprep.subr.mxu0 0.0
    %1122 = vmatpush2.msra.mxu0 0.0
    %1123 = vmatprep.subr.mxu0 0.0
    %1124 = vmatpush2.msra.mxu0 0.0
    %1125 = vmatprep.subr.mxu0 0.0
    %1126 = vmatpush2.msra.mxu0 0.0
    %1127 = vmatprep.subr.mxu0 0.0
    %1128 = vmatpush2.msra.mxu0 0.0
    %1129 = vmatprep.subr.mxu0 0.0
    %1130 = vmatpush2.msra.mxu0 0.0
    %1131 = vmatprep.subr.mxu0 0.0
    %1132 = vmatpush2.msra.mxu0 0.0
    %1133 = vmatprep.subr.mxu0 0.0
    %1134 = vmatpush2.msra.mxu0 0.0
    %1135 = vmatprep.subr.mxu0 0.0
    %1136 = vmatpush2.msra.mxu0 0.0
    %1137 = vmatprep.subr.mxu0 0.0
    %1138 = vmatpush2.msra.mxu0 0.0
    %1139 = vmatprep.subr.mxu0 0.0
    %1140 = vmatpush2.msra.mxu0 0.0
    %1141 = vmatprep.subr.mxu0 0.0
    %1142 = vmatpush2.msra.mxu0 0.0
    %1143 = vmatprep.subr.mxu0 0.0
    %1144 = vmatpush2.msra.mxu0 0.0
    %1145 = vmatprep.subr.mxu0 0.0
    %1146 = vmatpush2.msra.mxu0 0.0
    %1147 = vmatprep.subr.mxu0 0.0
    %1148 = vmatpush2.msra.mxu0 0.0
    %1149 = vmatprep.mubr.f32.mxu0 0.0
    %1150 = vmatmul.mubr.f32.gmra.mxu0 %v325
    %v1151 = vpop.f32.mrf.mxu0
    %v1152 = vadd.f32 0.0, %v1151
    %v1153 = vpop.f32.mrf.mxu0
    %1154 = vmatprep.mubr.f32.mxu0 0.0
    %1155 = vmatmul.mubr.f32.gmra.mxu0 %v328
    %v1156 = vpop.f32.mrf.mxu0
    %v1157 = vadd.f32 0.0, %v1156
    %v1158 = vpop.f32.mrf.mxu0
    %1159 = vmatprep.mubr.f32.mxu0 0.0
    %1160 = vmatmul.mubr.f32.gmra.mxu0 %v331
    %v1161 = vpop.f32.mrf.mxu0
    %v1162 = vadd.f32 0.0, %v1161
    %v1163 = vpop.f32.mrf.mxu0
    %1164 = vmatprep.mubr.f32.mxu0 0.0
    %1165 = vmatmul.mubr.f32.gmra.mxu0 %v334
    %v1166 = vpop.f32.mrf.mxu0
    %v1167 = vadd.f32 0.0, %v1166
    %v1168 = vpop.f32.mrf.mxu0
    %1169 = vdwg.mxu0
    %s1170 = scalar_lea.vmem %s7, 32
    %v1171 = vld [vmem:[%s1170] sm:$0xff]
    %v1172 = vld [vmem:[%s1170 + $0x8] sm:$0xff]
    %v1173 = vld [vmem:[%s1170 + $0x10] sm:$0xff]
    %v1174 = vld [vmem:[%s1170 + $0x18] sm:$0xff]
    %1175 = vmatprep.subr.mxu0 0.0
    %1176 = vmatpush1.msra.mxu0 0.0
    %1177 = vmatprep.subr.mxu0 0.0
    %1178 = vmatpush1.msra.mxu0 0.0
    %1179 = vmatprep.subr.mxu0 0.0
    %1180 = vmatpush1.msra.mxu0 0.0
    %1181 = vmatprep.subr.mxu0 0.0
    %1182 = vmatpush1.msra.mxu0 0.0
    %1183 = vmatprep.subr.mxu0 0.0
    %1184 = vmatpush1.msra.mxu0 0.0
    %1185 = vmatprep.subr.mxu0 0.0
    %1186 = vmatpush1.msra.mxu0 0.0
    %1187 = vmatprep.subr.mxu0 0.0
    %1188 = vmatpush1.msra.mxu0 0.0
    %1189 = vmatprep.subr.mxu0 0.0
    %1190 = vmatpush1.msra.mxu0 0.0
    %1191 = vmatprep.subr.mxu0 0.0
    %1192 = vmatpush1.msra.mxu0 0.0
    %1193 = vmatprep.subr.mxu0 0.0
    %1194 = vmatpush1.msra.mxu0 0.0
    %1195 = vmatprep.subr.mxu0 0.0
    %1196 = vmatpush1.msra.mxu0 0.0
    %1197 = vmatprep.subr.mxu0 0.0
    %1198 = vmatpush1.msra.mxu0 0.0
    %1199 = vmatprep.subr.mxu0 0.0
    %1200 = vmatpush1.msra.mxu0 %v1174
    %1201 = vmatprep.subr.mxu0 0.0
    %1202 = vmatpush1.msra.mxu0 %v1173
    %1203 = vmatprep.subr.mxu0 0.0
    %1204 = vmatpush1.msra.mxu0 %v1172
    %1205 = vmatprep.subr.mxu0 0.0
    %1206 = vmatpush1.msra.mxu0 %v1171
    %1207 = vmatprep.subr.mxu0 0.0
    %1208 = vmatpush2.msra.mxu0 0.0
    %1209 = vmatprep.subr.mxu0 0.0
    %1210 = vmatpush2.msra.mxu0 0.0
    %1211 = vmatprep.subr.mxu0 0.0
    %1212 = vmatpush2.msra.mxu0 0.0
    %1213 = vmatprep.subr.mxu0 0.0
    %1214 = vmatpush2.msra.mxu0 0.0
    %1215 = vmatprep.subr.mxu0 0.0
    %1216 = vmatpush2.msra.mxu0 0.0
    %1217 = vmatprep.subr.mxu0 0.0
    %1218 = vmatpush2.msra.mxu0 0.0
    %1219 = vmatprep.subr.mxu0 0.0
    %1220 = vmatpush2.msra.mxu0 0.0
    %1221 = vmatprep.subr.mxu0 0.0
    %1222 = vmatpush2.msra.mxu0 0.0
    %1223 = vmatprep.subr.mxu0 0.0
    %1224 = vmatpush2.msra.mxu0 0.0
    %1225 = vmatprep.subr.mxu0 0.0
    %1226 = vmatpush2.msra.mxu0 0.0
    %1227 = vmatprep.subr.mxu0 0.0
    %1228 = vmatpush2.msra.mxu0 0.0
    %1229 = vmatprep.subr.mxu0 0.0
    %1230 = vmatpush2.msra.mxu0 0.0
    %1231 = vmatprep.subr.mxu0 0.0
    %1232 = vmatpush2.msra.mxu0 0.0
    %1233 = vmatprep.subr.mxu0 0.0
    %1234 = vmatpush2.msra.mxu0 0.0
    %1235 = vmatprep.subr.mxu0 0.0
    %1236 = vmatpush2.msra.mxu0 0.0
    %1237 = vmatprep.subr.mxu0 0.0
    %1238 = vmatpush2.msra.mxu0 0.0
    %1239 = vmatprep.mubr.f32.mxu0 0.0
    %1240 = vmatmul.mubr.f32.gmra.mxu0 %v325
    %v1241 = vpop.f32.mrf.mxu0
    %v1242 = vadd.f32 0.0, %v1241
    %v1243 = vpop.f32.mrf.mxu0
    %1244 = vmatprep.mubr.f32.mxu0 0.0
    %1245 = vmatmul.mubr.f32.gmra.mxu0 %v328
    %v1246 = vpop.f32.mrf.mxu0
    %v1247 = vadd.f32 0.0, %v1246
    %v1248 = vpop.f32.mrf.mxu0
    %1249 = vmatprep.mubr.f32.mxu0 0.0
    %1250 = vmatmul.mubr.f32.gmra.mxu0 %v331
    %v1251 = vpop.f32.mrf.mxu0
    %v1252 = vadd.f32 0.0, %v1251
    %v1253 = vpop.f32.mrf.mxu0
    %1254 = vmatprep.mubr.f32.mxu0 0.0
    %1255 = vmatmul.mubr.f32.gmra.mxu0 %v334
    %v1256 = vpop.f32.mrf.mxu0
    %v1257 = vadd.f32 0.0, %v1256
    %v1258 = vpop.f32.mrf.mxu0
    %1259 = vdwg.mxu0
    %v1261 = vsel %vm603, %v1076, 0
    %v1264 = vsel %vm603, %v1077, 0
    %v1267 = vsel %vm603, %v1152, 0
    %v1270 = vsel %vm603, %v1157, 0
    %1272 = vmatprep.subr.mxu0 0.0
    %1273 = vmatpush1.xpose.msra.mxu0 0.0
    %1274 = vmatprep.subr.mxu0 0.0
    %1275 = vmatpush1.xpose.msra.mxu0 0.0
    %1276 = vmatprep.subr.mxu0 0.0
    %1277 = vmatpush1.xpose.msra.mxu0 0.0
    %1278 = vmatprep.subr.mxu0 0.0
    %1279 = vmatpush1.xpose.msra.mxu0 0.0
    %1280 = vmatprep.subr.mxu0 0.0
    %1281 = vmatpush1.xpose.msra.mxu0 0.0
    %1282 = vmatprep.subr.mxu0 0.0
    %1283 = vmatpush1.xpose.msra.mxu0 0.0
    %1284 = vmatprep.subr.mxu0 0.0
    %1285 = vmatpush1.xpose.msra.mxu0 0.0
    %1286 = vmatprep.subr.mxu0 0.0
    %1287 = vmatpush1.xpose.msra.mxu0 0.0
    %1288 = vmatprep.subr.mxu0 0.0
    %1289 = vmatpush1.xpose.msra.mxu0 0.0
    %1290 = vmatprep.subr.mxu0 0.0
    %1291 = vmatpush1.xpose.msra.mxu0 0.0
    %1292 = vmatprep.subr.mxu0 0.0
    %1293 = vmatpush1.xpose.msra.mxu0 0.0
    %1294 = vmatprep.subr.mxu0 0.0
    %1295 = vmatpush1.xpose.msra.mxu0 0.0
    %1296 = vmatprep.subr.mxu0 0.0
    %1297 = vmatpush1.xpose.msra.mxu0 0.0
    %1298 = vmatprep.subr.mxu0 0.0
    %1299 = vmatpush1.xpose.msra.mxu0 0.0
    %1300 = vmatprep.subr.mxu0 0.0
    %1301 = vmatpush1.xpose.msra.mxu0 %v1270
    %1302 = vmatprep.subr.mxu0 0.0
    %1303 = vmatpush1.xpose.msra.mxu0 %v1267
    %1304 = vmatprep.subr.mxu0 0.0
    %1305 = vmatpush2.xpose.msra.mxu0 0.0
    %1306 = vmatprep.subr.mxu0 0.0
    %1307 = vmatpush2.xpose.msra.mxu0 0.0
    %1308 = vmatprep.subr.mxu0 0.0
    %1309 = vmatpush2.xpose.msra.mxu0 0.0
    %1310 = vmatprep.subr.mxu0 0.0
    %1311 = vmatpush2.xpose.msra.mxu0 0.0
    %1312 = vmatprep.subr.mxu0 0.0
    %1313 = vmatpush2.xpose.msra.mxu0 0.0
    %1314 = vmatprep.subr.mxu0 0.0
    %1315 = vmatpush2.xpose.msra.mxu0 0.0
    %1316 = vmatprep.subr.mxu0 0.0
    %1317 = vmatpush2.xpose.msra.mxu0 0.0
    %1318 = vmatprep.subr.mxu0 0.0
    %1319 = vmatpush2.xpose.msra.mxu0 0.0
    %1320 = vmatprep.subr.mxu0 0.0
    %1321 = vmatpush2.xpose.msra.mxu0 0.0
    %1322 = vmatprep.subr.mxu0 0.0
    %1323 = vmatpush2.xpose.msra.mxu0 0.0
    %1324 = vmatprep.subr.mxu0 0.0
    %1325 = vmatpush2.xpose.msra.mxu0 0.0
    %1326 = vmatprep.subr.mxu0 0.0
    %1327 = vmatpush2.xpose.msra.mxu0 0.0
    %1328 = vmatprep.subr.mxu0 0.0
    %1329 = vmatpush2.xpose.msra.mxu0 0.0
    %1330 = vmatprep.subr.mxu0 0.0
    %1331 = vmatpush2.xpose.msra.mxu0 0.0
    %1332 = vmatprep.subr.mxu0 0.0
    %1333 = vmatpush2.xpose.msra.mxu0 0.0
    %1334 = vmatprep.subr.mxu0 0.0
    %1335 = vmatpush2.xpose.msra.mxu0 0.0
    %1336 = vmatprep.mubr.f32.mxu0 0.0
    %1337 = vmatmul.mubr.f32.gmra.mxu0 %v1261
    %v1338 = vpop.f32.mrf.mxu0
    %v1339 = vadd.f32 0.0, %v1338
    %v1340 = vpop.f32.mrf.mxu0
    %1341 = vmatprep.mubr.f32.mxu0 0.0
    %1342 = vmatmul.mubr.f32.gmra.mxu0 %v1264
    %v1343 = vpop.f32.mrf.mxu0
    %v1344 = vadd.f32 0.0, %v1343
    %v1345 = vpop.f32.mrf.mxu0
    %1346 = vdwg.mxu0
    %v1348 = vsel %vm603, %v1078, 0
    %v1351 = vsel %vm603, %v1079, 0
    %v1354 = vsel %vm603, %v1162, 0
    %v1357 = vsel %vm603, %v1167, 0
    %1359 = vmatprep.subr.mxu0 0.0
    %1360 = vmatpush1.xpose.msra.mxu0 0.0
    %1361 = vmatprep.subr.mxu0 0.0
    %1362 = vmatpush1.xpose.msra.mxu0 0.0
    %1363 = vmatprep.subr.mxu0 0.0
    %1364 = vmatpush1.xpose.msra.mxu0 0.0
    %1365 = vmatprep.subr.mxu0 0.0
    %1366 = vmatpush1.xpose.msra.mxu0 0.0
    %1367 = vmatprep.subr.mxu0 0.0
    %1368 = vmatpush1.xpose.msra.mxu0 0.0
    %1369 = vmatprep.subr.mxu0 0.0
    %1370 = vmatpush1.xpose.msra.mxu0 0.0
    %1371 = vmatprep.subr.mxu0 0.0
    %1372 = vmatpush1.xpose.msra.mxu0 0.0
    %1373 = vmatprep.subr.mxu0 0.0
    %1374 = vmatpush1.xpose.msra.mxu0 0.0
    %1375 = vmatprep.subr.mxu0 0.0
    %1376 = vmatpush1.xpose.msra.mxu0 0.0
    %1377 = vmatprep.subr.mxu0 0.0
    %1378 = vmatpush1.xpose.msra.mxu0 0.0
    %1379 = vmatprep.subr.mxu0 0.0
    %1380 = vmatpush1.xpose.msra.mxu0 0.0
    %1381 = vmatprep.subr.mxu0 0.0
    %1382 = vmatpush1.xpose.msra.mxu0 0.0
    %1383 = vmatprep.subr.mxu0 0.0
    %1384 = vmatpush1.xpose.msra.mxu0 0.0
    %1385 = vmatprep.subr.mxu0 0.0
    %1386 = vmatpush1.xpose.msra.mxu0 0.0
    %1387 = vmatprep.subr.mxu0 0.0
    %1388 = vmatpush1.xpose.msra.mxu0 %v1357
    %1389 = vmatprep.subr.mxu0 0.0
    %1390 = vmatpush1.xpose.msra.mxu0 %v1354
    %1391 = vmatprep.subr.mxu0 0.0
    %1392 = vmatpush2.xpose.msra.mxu0 0.0
    %1393 = vmatprep.subr.mxu0 0.0
    %1394 = vmatpush2.xpose.msra.mxu0 0.0
    %1395 = vmatprep.subr.mxu0 0.0
    %1396 = vmatpush2.xpose.msra.mxu0 0.0
    %1397 = vmatprep.subr.mxu0 0.0
    %1398 = vmatpush2.xpose.msra.mxu0 0.0
    %1399 = vmatprep.subr.mxu0 0.0
    %1400 = vmatpush2.xpose.msra.mxu0 0.0
    %1401 = vmatprep.subr.mxu0 0.0
    %1402 = vmatpush2.xpose.msra.mxu0 0.0
    %1403 = vmatprep.subr.mxu0 0.0
    %1404 = vmatpush2.xpose.msra.mxu0 0.0
    %1405 = vmatprep.subr.mxu0 0.0
    %1406 = vmatpush2.xpose.msra.mxu0 0.0
    %1407 = vmatprep.subr.mxu0 0.0
    %1408 = vmatpush2.xpose.msra.mxu0 0.0
    %1409 = vmatprep.subr.mxu0 0.0
    %1410 = vmatpush2.xpose.msra.mxu0 0.0
    %1411 = vmatprep.subr.mxu0 0.0
    %1412 = vmatpush2.xpose.msra.mxu0 0.0
    %1413 = vmatprep.subr.mxu0 0.0
    %1414 = vmatpush2.xpose.msra.mxu0 0.0
    %1415 = vmatprep.subr.mxu0 0.0
    %1416 = vmatpush2.xpose.msra.mxu0 0.0
    %1417 = vmatprep.subr.mxu0 0.0
    %1418 = vmatpush2.xpose.msra.mxu0 0.0
    %1419 = vmatprep.subr.mxu0 0.0
    %1420 = vmatpush2.xpose.msra.mxu0 0.0
    %1421 = vmatprep.subr.mxu0 0.0
    %1422 = vmatpush2.xpose.msra.mxu0 0.0
    %1423 = vmatprep.mubr.f32.mxu0 0.0
    %1424 = vmatmul.mubr.f32.gmra.mxu0 %v1348
    %v1425 = vpop.f32.mrf.mxu0
    %v1426 = vadd.f32 0.0, %v1425
    %v1427 = vpop.f32.mrf.mxu0
    %1428 = vmatprep.mubr.f32.mxu0 0.0
    %1429 = vmatmul.mubr.f32.gmra.mxu0 %v1351
    %v1430 = vpop.f32.mrf.mxu0
    %v1431 = vadd.f32 0.0, %v1430
    %v1432 = vpop.f32.mrf.mxu0
    %1433 = vdwg.mxu0
    %v1434 = vsel %vm603, %v1339, -inf
    %1435 = vmax.xlane.f32.xlu0 %v1434
    %v1436 = vpop.xlane.xlu0 %1435
    %v1437 = vsel %vm603, %v1344, -inf
    %1438 = vmax.xlane.f32.xlu0 %v1437
    %v1439 = vpop.xlane.xlu0 %1438
    %v1440 = vsel %vm603, %v1426, -inf
    %1441 = vmax.xlane.f32.xlu0 %v1440
    %v1442 = vpop.xlane.xlu0 %1441
    %v1443 = vsel %vm603, %v1431, -inf
    %1444 = vmax.xlane.f32.xlu0 %v1443
    %v1445 = vpop.xlane.xlu0 %1444
    %v1446 = vsub.f32 %v1339, %v1436
    %v1447 = vsub.f32 %v1344, %v1439
    %v1448 = vsub.f32 %v1426, %v1442
    %v1449 = vsub.f32 %v1431, %v1445
    %v1450 = vmul.f32 %v1446, 1.442695
    %v1451 = vpow.pop %v1450
    %v1452 = vmul.f32 %v1447, 1.442695
    %v1453 = vpow.pop %v1452
    %v1454 = vmul.f32 %v1448, 1.442695
    %v1455 = vpow.pop %v1454
    %v1456 = vmul.f32 %v1449, 1.442695
    %v1457 = vpow.pop %v1456
    %v1458 = vsel %vm603, %v1451, 0.0
    %1459 = vadd.xlane.f32.xlu0 %v1458
    %v1460 = vpop.xlane.xlu0 %1459
    %v1461 = vsel %vm603, %v1453, 0.0
    %1462 = vadd.xlane.f32.xlu0 %v1461
    %v1463 = vpop.xlane.xlu0 %1462
    %v1464 = vsel %vm603, %v1455, 0.0
    %1465 = vadd.xlane.f32.xlu0 %v1464
    %v1466 = vpop.xlane.xlu0 %1465
    %v1467 = vsel %vm603, %v1457, 0.0
    %1468 = vadd.xlane.f32.xlu0 %v1467
    %v1469 = vpop.xlane.xlu0 %1468
    %v1470 = vrcp.pop %v1460
    %v1471 = vrcp.pop %v1463
    %v1472 = vrcp.pop %v1466
    %v1473 = vrcp.pop %v1469
    %v1474 = vmul.f32 %v1451, %v1470
    %v1475 = vmul.f32 %v1453, %v1471
    %v1476 = vmul.f32 %v1455, %v1472
    %v1477 = vmul.f32 %v1457, %v1473
    %v1479 = vsel %vm603, %v1474, 0
    %v1482 = vsel %vm603, %v1475, 0
    %1484 = vmatprep.subr.mxu0 0.0
    %1485 = vmatpush1.msra.mxu0 0.0
    %1486 = vmatprep.subr.mxu0 0.0
    %1487 = vmatpush1.msra.mxu0 0.0
    %1488 = vmatprep.subr.mxu0 0.0
    %1489 = vmatpush1.msra.mxu0 0.0
    %1490 = vmatprep.subr.mxu0 0.0
    %1491 = vmatpush1.msra.mxu0 0.0
    %1492 = vmatprep.subr.mxu0 0.0
    %1493 = vmatpush1.msra.mxu0 0.0
    %1494 = vmatprep.subr.mxu0 0.0
    %1495 = vmatpush1.msra.mxu0 0.0
    %1496 = vmatprep.subr.mxu0 0.0
    %1497 = vmatpush1.msra.mxu0 0.0
    %1498 = vmatprep.subr.mxu0 0.0
    %1499 = vmatpush1.msra.mxu0 0.0
    %1500 = vmatprep.subr.mxu0 0.0
    %1501 = vmatpush1.msra.mxu0 0.0
    %1502 = vmatprep.subr.mxu0 0.0
    %1503 = vmatpush1.msra.mxu0 0.0
    %1504 = vmatprep.subr.mxu0 0.0
    %1505 = vmatpush1.msra.mxu0 0.0
    %1506 = vmatprep.subr.mxu0 0.0
    %1507 = vmatpush1.msra.mxu0 0.0
    %1508 = vmatprep.subr.mxu0 0.0
    %1509 = vmatpush1.msra.mxu0 0.0
    %1510 = vmatprep.subr.mxu0 0.0
    %1511 = vmatpush1.msra.mxu0 0.0
    %1512 = vmatprep.subr.mxu0 0.0
    %1513 = vmatpush1.msra.mxu0 %v1247
    %1514 = vmatprep.subr.mxu0 0.0
    %1515 = vmatpush1.msra.mxu0 %v1242
    %1516 = vmatprep.subr.mxu0 0.0
    %1517 = vmatpush2.msra.mxu0 0.0
    %1518 = vmatprep.subr.mxu0 0.0
    %1519 = vmatpush2.msra.mxu0 0.0
    %1520 = vmatprep.subr.mxu0 0.0
    %1521 = vmatpush2.msra.mxu0 0.0
    %1522 = vmatprep.subr.mxu0 0.0
    %1523 = vmatpush2.msra.mxu0 0.0
    %1524 = vmatprep.subr.mxu0 0.0
    %1525 = vmatpush2.msra.mxu0 0.0
    %1526 = vmatprep.subr.mxu0 0.0
    %1527 = vmatpush2.msra.mxu0 0.0
    %1528 = vmatprep.subr.mxu0 0.0
    %1529 = vmatpush2.msra.mxu0 0.0
    %1530 = vmatprep.subr.mxu0 0.0
    %1531 = vmatpush2.msra.mxu0 0.0
    %1532 = vmatprep.subr.mxu0 0.0
    %1533 = vmatpush2.msra.mxu0 0.0
    %1534 = vmatprep.subr.mxu0 0.0
    %1535 = vmatpush2.msra.mxu0 0.0
    %1536 = vmatprep.subr.mxu0 0.0
    %1537 = vmatpush2.msra.mxu0 0.0
    %1538 = vmatprep.subr.mxu0 0.0
    %1539 = vmatpush2.msra.mxu0 0.0
    %1540 = vmatprep.subr.mxu0 0.0
    %1541 = vmatpush2.msra.mxu0 0.0
    %1542 = vmatprep.subr.mxu0 0.0
    %1543 = vmatpush2.msra.mxu0 0.0
    %1544 = vmatprep.subr.mxu0 0.0
    %1545 = vmatpush2.msra.mxu0 0.0
    %1546 = vmatprep.subr.mxu0 0.0
    %1547 = vmatpush2.msra.mxu0 0.0
    %1548 = vmatprep.mubr.f32.mxu0 0.0
    %1549 = vmatmul.mubr.f32.gmra.mxu0 %v1479
    %v1550 = vpop.f32.mrf.mxu0
    %v1551 = vadd.f32 0.0, %v1550
    %v1552 = vpop.f32.mrf.mxu0
    %1553 = vmatprep.mubr.f32.mxu0 0.0
    %1554 = vmatmul.mubr.f32.gmra.mxu0 %v1482
    %v1555 = vpop.f32.mrf.mxu0
    %v1556 = vadd.f32 0.0, %v1555
    %v1557 = vpop.f32.mrf.mxu0
    %1558 = vdwg.mxu0
    %v1560 = vsel %vm603, %v1476, 0
    %v1563 = vsel %vm603, %v1477, 0
    %1565 = vmatprep.subr.mxu0 0.0
    %1566 = vmatpush1.msra.mxu0 0.0
    %1567 = vmatprep.subr.mxu0 0.0
    %1568 = vmatpush1.msra.mxu0 0.0
    %1569 = vmatprep.subr.mxu0 0.0
    %1570 = vmatpush1.msra.mxu0 0.0
    %1571 = vmatprep.subr.mxu0 0.0
    %1572 = vmatpush1.msra.mxu0 0.0
    %1573 = vmatprep.subr.mxu0 0.0
    %1574 = vmatpush1.msra.mxu0 0.0
    %1575 = vmatprep.subr.mxu0 0.0
    %1576 = vmatpush1.msra.mxu0 0.0
    %1577 = vmatprep.subr.mxu0 0.0
    %1578 = vmatpush1.msra.mxu0 0.0
    %1579 = vmatprep.subr.mxu0 0.0
    %1580 = vmatpush1.msra.mxu0 0.0
    %1581 = vmatprep.subr.mxu0 0.0
    %1582 = vmatpush1.msra.mxu0 0.0
    %1583 = vmatprep.subr.mxu0 0.0
    %1584 = vmatpush1.msra.mxu0 0.0
    %1585 = vmatprep.subr.mxu0 0.0
    %1586 = vmatpush1.msra.mxu0 0.0
    %1587 = vmatprep.subr.mxu0 0.0
    %1588 = vmatpush1.msra.mxu0 0.0
    %1589 = vmatprep.subr.mxu0 0.0
    %1590 = vmatpush1.msra.mxu0 0.0
    %1591 = vmatprep.subr.mxu0 0.0
    %1592 = vmatpush1.msra.mxu0 0.0
    %1593 = vmatprep.subr.mxu0 0.0
    %1594 = vmatpush1.msra.mxu0 %v1257
    %1595 = vmatprep.subr.mxu0 0.0
    %1596 = vmatpush1.msra.mxu0 %v1252
    %1597 = vmatprep.subr.mxu0 0.0
    %1598 = vmatpush2.msra.mxu0 0.0
    %1599 = vmatprep.subr.mxu0 0.0
    %1600 = vmatpush2.msra.mxu0 0.0
    %1601 = vmatprep.subr.mxu0 0.0
    %1602 = vmatpush2.msra.mxu0 0.0
    %1603 = vmatprep.subr.mxu0 0.0
    %1604 = vmatpush2.msra.mxu0 0.0
    %1605 = vmatprep.subr.mxu0 0.0
    %1606 = vmatpush2.msra.mxu0 0.0
    %1607 = vmatprep.subr.mxu0 0.0
    %1608 = vmatpush2.msra.mxu0 0.0
    %1609 = vmatprep.subr.mxu0 0.0
    %1610 = vmatpush2.msra.mxu0 0.0
    %1611 = vmatprep.subr.mxu0 0.0
    %1612 = vmatpush2.msra.mxu0 0.0
    %1613 = vmatprep.subr.mxu0 0.0
    %1614 = vmatpush2.msra.mxu0 0.0
    %1615 = vmatprep.subr.mxu0 0.0
    %1616 = vmatpush2.msra.mxu0 0.0
    %1617 = vmatprep.subr.mxu0 0.0
    %1618 = vmatpush2.msra.mxu0 0.0
    %1619 = vmatprep.subr.mxu0 0.0
    %1620 = vmatpush2.msra.mxu0 0.0
    %1621 = vmatprep.subr.mxu0 0.0
    %1622 = vmatpush2.msra.mxu0 0.0
    %1623 = vmatprep.subr.mxu0 0.0
    %1624 = vmatpush2.msra.mxu0 0.0
    %1625 = vmatprep.subr.mxu0 0.0
    %1626 = vmatpush2.msra.mxu0 0.0
    %1627 = vmatprep.subr.mxu0 0.0
    %1628 = vmatpush2.msra.mxu0 0.0
    %1629 = vmatprep.mubr.f32.mxu0 0.0
    %1630 = vmatmul.mubr.f32.gmra.mxu0 %v1560
    %v1631 = vpop.f32.mrf.mxu0
    %v1632 = vadd.f32 0.0, %v1631
    %v1633 = vpop.f32.mrf.mxu0
    %1634 = vmatprep.mubr.f32.mxu0 0.0
    %1635 = vmatmul.mubr.f32.gmra.mxu0 %v1563
    %v1636 = vpop.f32.mrf.mxu0
    %v1637 = vadd.f32 0.0, %v1636
    %v1638 = vpop.f32.mrf.mxu0
    %1639 = vdwg.mxu0
    %s1640 = scalar_lea.vmem %s8, 16
    %v1641 = vld [vmem:[%s1640] sm:$0xff]
    %v1642 = vld [vmem:[%s1640 + $0x8] sm:$0xff]
    %v1644 = vsel %vm603, %v1551, 0
    %v1647 = vsel %vm603, %v1556, 0
    %v1650 = vsel %vm603, %v1632, 0
    %v1653 = vsel %vm603, %v1637, 0
    %1655 = vmatprep.subr.mxu0 0.0
    %1656 = vmatpush1.msra.mxu0 0.0
    %1657 = vmatprep.subr.mxu0 0.0
    %1658 = vmatpush1.msra.mxu0 0.0
    %1659 = vmatprep.subr.mxu0 0.0
    %1660 = vmatpush1.msra.mxu0 0.0
    %1661 = vmatprep.subr.mxu0 0.0
    %1662 = vmatpush1.msra.mxu0 0.0
    %1663 = vmatprep.subr.mxu0 0.0
    %1664 = vmatpush1.msra.mxu0 0.0
    %1665 = vmatprep.subr.mxu0 0.0
    %1666 = vmatpush1.msra.mxu0 0.0
    %1667 = vmatprep.subr.mxu0 0.0
    %1668 = vmatpush1.msra.mxu0 0.0
    %1669 = vmatprep.subr.mxu0 0.0
    %1670 = vmatpush1.msra.mxu0 0.0
    %1671 = vmatprep.subr.mxu0 0.0
    %1672 = vmatpush1.msra.mxu0 0.0
    %1673 = vmatprep.subr.mxu0 0.0
    %1674 = vmatpush1.msra.mxu0 0.0
    %1675 = vmatprep.subr.mxu0 0.0
    %1676 = vmatpush1.msra.mxu0 0.0
    %1677 = vmatprep.subr.mxu0 0.0
    %1678 = vmatpush1.msra.mxu0 0.0
    %1679 = vmatprep.subr.mxu0 0.0
    %1680 = vmatpush1.msra.mxu0 0.0
    %1681 = vmatprep.subr.mxu0 0.0
    %1682 = vmatpush1.msra.mxu0 0.0
    %1683 = vmatprep.subr.mxu0 0.0
    %1684 = vmatpush1.msra.mxu0 %v1642
    %1685 = vmatprep.subr.mxu0 0.0
    %1686 = vmatpush1.msra.mxu0 %v1641
    %1687 = vmatprep.subr.mxu0 0.0
    %1688 = vmatpush2.msra.mxu0 0.0
    %1689 = vmatprep.subr.mxu0 0.0
    %1690 = vmatpush2.msra.mxu0 0.0
    %1691 = vmatprep.subr.mxu0 0.0
    %1692 = vmatpush2.msra.mxu0 0.0
    %1693 = vmatprep.subr.mxu0 0.0
    %1694 = vmatpush2.msra.mxu0 0.0
    %1695 = vmatprep.subr.mxu0 0.0
    %1696 = vmatpush2.msra.mxu0 0.0
    %1697 = vmatprep.subr.mxu0 0.0
    %1698 = vmatpush2.msra.mxu0 0.0
    %1699 = vmatprep.subr.mxu0 0.0
    %1700 = vmatpush2.msra.mxu0 0.0
    %1701 = vmatprep.subr.mxu0 0.0
    %1702 = vmatpush2.msra.mxu0 0.0
    %1703 = vmatprep.subr.mxu0 0.0
    %1704 = vmatpush2.msra.mxu0 0.0
    %1705 = vmatprep.subr.mxu0 0.0
    %1706 = vmatpush2.msra.mxu0 0.0
    %1707 = vmatprep.subr.mxu0 0.0
    %1708 = vmatpush2.msra.mxu0 0.0
    %1709 = vmatprep.subr.mxu0 0.0
    %1710 = vmatpush2.msra.mxu0 0.0
    %1711 = vmatprep.subr.mxu0 0.0
    %1712 = vmatpush2.msra.mxu0 0.0
    %1713 = vmatprep.subr.mxu0 0.0
    %1714 = vmatpush2.msra.mxu0 0.0
    %1715 = vmatprep.subr.mxu0 0.0
    %1716 = vmatpush2.msra.mxu0 0.0
    %1717 = vmatprep.subr.mxu0 0.0
    %1718 = vmatpush2.msra.mxu0 0.0
    %1719 = vmatprep.mubr.f32.mxu0 0.0
    %1720 = vmatmul.mubr.f32.gmra.mxu0 %v1644
    %v1721 = vpop.f32.mrf.mxu0
    %v1722 = vadd.f32 0.0, %v1721
    %v1723 = vpop.f32.mrf.mxu0
    %1724 = vmatprep.mubr.f32.mxu0 0.0
    %1725 = vmatmul.mubr.f32.gmra.mxu0 %v1647
    %v1726 = vpop.f32.mrf.mxu0
    %v1727 = vadd.f32 0.0, %v1726
    %v1728 = vpop.f32.mrf.mxu0
    %1729 = vmatprep.mubr.f32.mxu0 0.0
    %1730 = vmatmul.mubr.f32.gmra.mxu0 %v1650
    %v1731 = vpop.f32.mrf.mxu0
    %v1732 = vadd.f32 0.0, %v1731
    %v1733 = vpop.f32.mrf.mxu0
    %1734 = vmatprep.mubr.f32.mxu0 0.0
    %1735 = vmatmul.mubr.f32.gmra.mxu0 %v1653
    %v1736 = vpop.f32.mrf.mxu0
    %v1737 = vadd.f32 0.0, %v1736
    %v1738 = vpop.f32.mrf.mxu0
    %1739 = vdwg.mxu0
    %v1741 = vsel %vm603, %v895, 0
    %v1744 = vsel %vm603, %v900, 0
    %v1747 = vsel %vm603, %v976, 0
    %v1750 = vsel %vm603, %v981, 0
    %1752 = vmatprep.subr.mxu0 0.0
    %1753 = vmatpush1.msra.mxu0 0.0
    %1754 = vmatprep.subr.mxu0 0.0
    %1755 = vmatpush1.msra.mxu0 0.0
    %1756 = vmatprep.subr.mxu0 0.0
    %1757 = vmatpush1.msra.mxu0 0.0
    %1758 = vmatprep.subr.mxu0 0.0
    %1759 = vmatpush1.msra.mxu0 0.0
    %1760 = vmatprep.subr.mxu0 0.0
    %1761 = vmatpush1.msra.mxu0 0.0
    %1762 = vmatprep.subr.mxu0 0.0
    %1763 = vmatpush1.msra.mxu0 0.0
    %1764 = vmatprep.subr.mxu0 0.0
    %1765 = vmatpush1.msra.mxu0 0.0
    %1766 = vmatprep.subr.mxu0 0.0
    %1767 = vmatpush1.msra.mxu0 0.0
    %1768 = vmatprep.subr.mxu0 0.0
    %1769 = vmatpush1.msra.mxu0 0.0
    %1770 = vmatprep.subr.mxu0 0.0
    %1771 = vmatpush1.msra.mxu0 0.0
    %1772 = vmatprep.subr.mxu0 0.0
    %1773 = vmatpush1.msra.mxu0 0.0
    %1774 = vmatprep.subr.mxu0 0.0
    %1775 = vmatpush1.msra.mxu0 0.0
    %1776 = vmatprep.subr.mxu0 0.0
    %1777 = vmatpush1.msra.mxu0 0.0
    %1778 = vmatprep.subr.mxu0 0.0
    %1779 = vmatpush1.msra.mxu0 0.0
    %1780 = vmatprep.subr.mxu0 0.0
    %1781 = vmatpush1.msra.mxu0 %v985
    %1782 = vmatprep.subr.mxu0 0.0
    %1783 = vmatpush1.msra.mxu0 %v984
    %1784 = vmatprep.subr.mxu0 0.0
    %1785 = vmatpush2.msra.mxu0 0.0
    %1786 = vmatprep.subr.mxu0 0.0
    %1787 = vmatpush2.msra.mxu0 0.0
    %1788 = vmatprep.subr.mxu0 0.0
    %1789 = vmatpush2.msra.mxu0 0.0
    %1790 = vmatprep.subr.mxu0 0.0
    %1791 = vmatpush2.msra.mxu0 0.0
    %1792 = vmatprep.subr.mxu0 0.0
    %1793 = vmatpush2.msra.mxu0 0.0
    %1794 = vmatprep.subr.mxu0 0.0
    %1795 = vmatpush2.msra.mxu0 0.0
    %1796 = vmatprep.subr.mxu0 0.0
    %1797 = vmatpush2.msra.mxu0 0.0
    %1798 = vmatprep.subr.mxu0 0.0
    %1799 = vmatpush2.msra.mxu0 0.0
    %1800 = vmatprep.subr.mxu0 0.0
    %1801 = vmatpush2.msra.mxu0 0.0
    %1802 = vmatprep.subr.mxu0 0.0
    %1803 = vmatpush2.msra.mxu0 0.0
    %1804 = vmatprep.subr.mxu0 0.0
    %1805 = vmatpush2.msra.mxu0 0.0
    %1806 = vmatprep.subr.mxu0 0.0
    %1807 = vmatpush2.msra.mxu0 0.0
    %1808 = vmatprep.subr.mxu0 0.0
    %1809 = vmatpush2.msra.mxu0 0.0
    %1810 = vmatprep.subr.mxu0 0.0
    %1811 = vmatpush2.msra.mxu0 0.0
    %1812 = vmatprep.subr.mxu0 0.0
    %1813 = vmatpush2.msra.mxu0 0.0
    %1814 = vmatprep.subr.mxu0 0.0
    %1815 = vmatpush2.msra.mxu0 0.0
    %1816 = vmatprep.mubr.f32.mxu0 0.0
    %1817 = vmatmul.mubr.f32.gmra.mxu0 %v1741
    %v1818 = vpop.f32.mrf.mxu0
    %v1819 = vadd.f32 %v1722, %v1818
    %v1820 = vpop.f32.mrf.mxu0
    %1821 = vmatprep.mubr.f32.mxu0 0.0
    %1822 = vmatmul.mubr.f32.gmra.mxu0 %v1744
    %v1823 = vpop.f32.mrf.mxu0
    %v1824 = vadd.f32 %v1727, %v1823
    %v1825 = vpop.f32.mrf.mxu0
    %1826 = vmatprep.mubr.f32.mxu0 0.0
    %1827 = vmatmul.mubr.f32.gmra.mxu0 %v1747
    %v1828 = vpop.f32.mrf.mxu0
    %v1829 = vadd.f32 %v1732, %v1828
    %v1830 = vpop.f32.mrf.mxu0
    %1831 = vmatprep.mubr.f32.mxu0 0.0
    %1832 = vmatmul.mubr.f32.gmra.mxu0 %v1750
    %v1833 = vpop.f32.mrf.mxu0
    %v1834 = vadd.f32 %v1737, %v1833
    %v1835 = vpop.f32.mrf.mxu0
    %1836 = vdwg.mxu0
    %v1837 = vadd.f32 %v240, %v1819
    %v1838 = vadd.f32 %v241, %v1824
    %v1839 = vadd.f32 %v242, %v1829
    %v1840 = vadd.f32 %v243, %v1834
    %v1841 = vld [vmem:[%s13] sm:$0x1]
    %v1842 = vld [vmem:[%s14] sm:$0x1]
    %v1843 = vsel %vm246, %v1837, 0.0
    %1844 = vadd.xlane.f32.xlu0 %v1843
    %v1845 = vpop.xlane.xlu0 %1844
    %v1846 = vsel %vm246, %v1838, 0.0
    %1847 = vadd.xlane.f32.xlu0 %v1846
    %v1848 = vpop.xlane.xlu0 %1847
    %v1849 = vsel %vm246, %v1839, 0.0
    %1850 = vadd.xlane.f32.xlu0 %v1849
    %v1851 = vpop.xlane.xlu0 %1850
    %v1852 = vsel %vm246, %v1840, 0.0
    %1853 = vadd.xlane.f32.xlu0 %v1852
    %v1854 = vpop.xlane.xlu0 %1853
    %v1855 = vmul.f32 %v1845, %v259
    %v1856 = vmul.f32 %v1848, %v259
    %v1857 = vmul.f32 %v1851, %v259
    %v1858 = vmul.f32 %v1854, %v259
    %v1859 = vsub.f32 %v1837, %v1855
    %v1860 = vsub.f32 %v1838, %v1856
    %v1861 = vsub.f32 %v1839, %v1857
    %v1862 = vsub.f32 %v1840, %v1858
    %v1863 = vmul.f32 %v1859, %v1859
    %v1864 = vmul.f32 %v1860, %v1860
    %v1865 = vmul.f32 %v1861, %v1861
    %v1866 = vmul.f32 %v1862, %v1862
    %v1867 = vsel %vm246, %v1863, 0.0
    %1868 = vadd.xlane.f32.xlu0 %v1867
    %v1869 = vpop.xlane.xlu0 %1868
    %v1870 = vsel %vm246, %v1864, 0.0
    %1871 = vadd.xlane.f32.xlu0 %v1870
    %v1872 = vpop.xlane.xlu0 %1871
    %v1873 = vsel %vm246, %v1865, 0.0
    %1874 = vadd.xlane.f32.xlu0 %v1873
    %v1875 = vpop.xlane.xlu0 %1874
    %v1876 = vsel %vm246, %v1866, 0.0
    %1877 = vadd.xlane.f32.xlu0 %v1876
    %v1878 = vpop.xlane.xlu0 %1877
    %v1879 = vmul.f32 %v1869, %v259
    %v1880 = vmul.f32 %v1872, %v259
    %v1881 = vmul.f32 %v1875, %v259
    %v1882 = vmul.f32 %v1878, %v259
    %v1883 = vadd.f32 %v1879, 1e-06
    %v1884 = vadd.f32 %v1880, 1e-06
    %v1885 = vadd.f32 %v1881, 1e-06
    %v1886 = vadd.f32 %v1882, 1e-06
    %v1887 = vrsqrt.pop %v1883
    %v1888 = vrsqrt.pop %v1884
    %v1889 = vrsqrt.pop %v1885
    %v1890 = vrsqrt.pop %v1886
    %v1891 = vmul.f32 %v1859, %v1887
    %v1892 = vmul.f32 %v1860, %v1888
    %v1893 = vmul.f32 %v1861, %v1889
    %v1894 = vmul.f32 %v1862, %v1890
    %v1896 = vlaneseq
    %v1897 = vshrl.u32 %v1896, 7
    %v1898 = vsub.s32 0, %v1897
    %v1899 = vrot.slane %v1841, %v1898
    %v1901 = vmul.f32 %v1891, %v1899
    %v1902 = vmul.f32 %v1892, %v1899
    %v1903 = vmul.f32 %v1893, %v1899
    %v1904 = vmul.f32 %v1894, %v1899
    %v1906 = vlaneseq
    %v1907 = vshrl.u32 %v1906, 7
    %v1908 = vsub.s32 0, %v1907
    %v1909 = vrot.slane %v1842, %v1908
    %v1911 = vadd.f32 %v1901, %v1909
    %v1912 = vadd.f32 %v1902, %v1909
    %v1913 = vadd.f32 %v1903, %v1909
    %v1914 = vadd.f32 %v1904, %v1909
    %v1915 = vld [vmem:[%s9] sm:$0xff]
    %v1916 = vld [vmem:[%s9 + $0x8] sm:$0xff]
    %v1917 = vld [vmem:[%s9 + $0x10] sm:$0xff]
    %v1918 = vld [vmem:[%s9 + $0x18] sm:$0xff]
    %v1920 = vsel %vm246, %v1911, 0
    %v1923 = vsel %vm246, %v1912, 0
    %v1926 = vsel %vm246, %v1913, 0
    %v1929 = vsel %vm246, %v1914, 0
    %1931 = vmatprep.subr.mxu0 0.0
    %1932 = vmatpush1.msra.mxu0 0.0
    %1933 = vmatprep.subr.mxu0 0.0
    %1934 = vmatpush1.msra.mxu0 0.0
    %1935 = vmatprep.subr.mxu0 0.0
    %1936 = vmatpush1.msra.mxu0 0.0
    %1937 = vmatprep.subr.mxu0 0.0
    %1938 = vmatpush1.msra.mxu0 0.0
    %1939 = vmatprep.subr.mxu0 0.0
    %1940 = vmatpush1.msra.mxu0 0.0
    %1941 = vmatprep.subr.mxu0 0.0
    %1942 = vmatpush1.msra.mxu0 0.0
    %1943 = vmatprep.subr.mxu0 0.0
    %1944 = vmatpush1.msra.mxu0 0.0
    %1945 = vmatprep.subr.mxu0 0.0
    %1946 = vmatpush1.msra.mxu0 0.0
    %1947 = vmatprep.subr.mxu0 0.0
    %1948 = vmatpush1.msra.mxu0 0.0
    %1949 = vmatprep.subr.mxu0 0.0
    %1950 = vmatpush1.msra.mxu0 0.0
    %1951 = vmatprep.subr.mxu0 0.0
    %1952 = vmatpush1.msra.mxu0 0.0
    %1953 = vmatprep.subr.mxu0 0.0
    %1954 = vmatpush1.msra.mxu0 0.0
    %1955 = vmatprep.subr.mxu0 0.0
    %1956 = vmatpush1.msra.mxu0 %v1918
    %1957 = vmatprep.subr.mxu0 0.0
    %1958 = vmatpush1.msra.mxu0 %v1917
    %1959 = vmatprep.subr.mxu0 0.0
    %1960 = vmatpush1.msra.mxu0 %v1916
    %1961 = vmatprep.subr.mxu0 0.0
    %1962 = vmatpush1.msra.mxu0 %v1915
    %1963 = vmatprep.subr.mxu0 0.0
    %1964 = vmatpush2.msra.mxu0 0.0
    %1965 = vmatprep.subr.mxu0 0.0
    %1966 = vmatpush2.msra.mxu0 0.0
    %1967 = vmatprep.subr.mxu0 0.0
    %1968 = vmatpush2.msra.mxu0 0.0
    %1969 = vmatprep.subr.mxu0 0.0
    %1970 = vmatpush2.msra.mxu0 0.0
    %1971 = vmatprep.subr.mxu0 0.0
    %1972 = vmatpush2.msra.mxu0 0.0
    %1973 = vmatprep.subr.mxu0 0.0
    %1974 = vmatpush2.msra.mxu0 0.0
    %1975 = vmatprep.subr.mxu0 0.0
    %1976 = vmatpush2.msra.mxu0 0.0
    %1977 = vmatprep.subr.mxu0 0.0
    %1978 = vmatpush2.msra.mxu0 0.0
    %1979 = vmatprep.subr.mxu0 0.0
    %1980 = vmatpush2.msra.mxu0 0.0
    %1981 = vmatprep.subr.mxu0 0.0
    %1982 = vmatpush2.msra.mxu0 0.0
    %1983 = vmatprep.subr.mxu0 0.0
    %1984 = vmatpush2.msra.mxu0 0.0
    %1985 = vmatprep.subr.mxu0 0.0
    %1986 = vmatpush2.msra.mxu0 0.0
    %1987 = vmatprep.subr.mxu0 0.0
    %1988 = vmatpush2.msra.mxu0 0.0
    %1989 = vmatprep.subr.mxu0 0.0
    %1990 = vmatpush2.msra.mxu0 0.0
    %1991 = vmatprep.subr.mxu0 0.0
    %1992 = vmatpush2.msra.mxu0 0.0
    %1993 = vmatprep.subr.mxu0 0.0
    %1994 = vmatpush2.msra.mxu0 0.0
    %1995 = vmatprep.mubr.f32.mxu0 0.0
    %1996 = vmatmul.mubr.f32.gmra.mxu0 %v1920
    %v1997 = vpop.f32.mrf.mxu0
    %v1998 = vadd.f32 0.0, %v1997
    %v1999 = vpop.f32.mrf.mxu0
    %2000 = vmatprep.mubr.f32.mxu0 0.0
    %2001 = vmatmul.mubr.f32.gmra.mxu0 %v1923
    %v2002 = vpop.f32.mrf.mxu0
    %v2003 = vadd.f32 0.0, %v2002
    %v2004 = vpop.f32.mrf.mxu0
    %2005 = vmatprep.mubr.f32.mxu0 0.0
    %2006 = vmatmul.mubr.f32.gmra.mxu0 %v1926
    %v2007 = vpop.f32.mrf.mxu0
    %v2008 = vadd.f32 0.0, %v2007
    %v2009 = vpop.f32.mrf.mxu0
    %2010 = vmatprep.mubr.f32.mxu0 0.0
    %2011 = vmatmul.mubr.f32.gmra.mxu0 %v1929
    %v2012 = vpop.f32.mrf.mxu0
    %v2013 = vadd.f32 0.0, %v2012
    %v2014 = vpop.f32.mrf.mxu0
    %2015 = vdwg.mxu0
    %v2016 = vmul.f32 %v1998, %v1998
    %v2017 = vmul.f32 %v2003, %v2003
    %v2018 = vmul.f32 %v2008, %v2008
    %v2019 = vmul.f32 %v2013, %v2013
    %v2020 = vmul.f32 %v1998, %v2016
    %v2021 = vmul.f32 %v2003, %v2017
    %v2022 = vmul.f32 %v2008, %v2018
    %v2023 = vmul.f32 %v2013, %v2019
    %v2024 = vmul.f32 %v2020, 0.044715
    %v2025 = vmul.f32 %v2021, 0.044715
    %v2026 = vmul.f32 %v2022, 0.044715
    %v2027 = vmul.f32 %v2023, 0.044715
    %v2028 = vadd.f32 %v1998, %v2024
    %v2029 = vadd.f32 %v2003, %v2025
    %v2030 = vadd.f32 %v2008, %v2026
    %v2031 = vadd.f32 %v2013, %v2027
    %v2032 = vmul.f32 %v2028, 0.7978846
    %v2033 = vmul.f32 %v2029, 0.7978846
    %v2034 = vmul.f32 %v2030, 0.7978846
    %v2035 = vmul.f32 %v2031, 0.7978846
    %v2036 = vtanh.pop %v2032
    %v2037 = vtanh.pop %v2033
    %v2038 = vtanh.pop %v2034
    %v2039 = vtanh.pop %v2035
    %v2040 = vadd.f32 %v2036, 1.0
    %v2041 = vadd.f32 %v2037, 1.0
    %v2042 = vadd.f32 %v2038, 1.0
    %v2043 = vadd.f32 %v2039, 1.0
    %v2044 = vmul.f32 %v2040, 0.5
    %v2045 = vmul.f32 %v2041, 0.5
    %v2046 = vmul.f32 %v2042, 0.5
    %v2047 = vmul.f32 %v2043, 0.5
    %v2048 = vmul.f32 %v1998, %v2044
    %v2049 = vmul.f32 %v2003, %v2045
    %v2050 = vmul.f32 %v2008, %v2046
    %v2051 = vmul.f32 %v2013, %v2047
    %v2052 = vld [vmem:[%s10] sm:$0xff]
    %v2053 = vld [vmem:[%s10 + $0x8] sm:$0xff]
    %v2054 = vld [vmem:[%s10 + $0x10] sm:$0xff]
    %v2055 = vld [vmem:[%s10 + $0x18] sm:$0xff]
    %v2056 = vld [vmem:[%s10 + $0x20] sm:$0xff]
    %v2057 = vld [vmem:[%s10 + $0x28] sm:$0xff]
    %v2058 = vld [vmem:[%s10 + $0x30] sm:$0xff]
    %v2059 = vld [vmem:[%s10 + $0x38] sm:$0xff]
    %v2060 = vld [vmem:[%s10 + $0x40] sm:$0xff]
    %v2061 = vld [vmem:[%s10 + $0x48] sm:$0xff]
    %v2062 = vld [vmem:[%s10 + $0x50] sm:$0xff]
    %v2063 = vld [vmem:[%s10 + $0x58] sm:$0xff]
    %v2064 = vld [vmem:[%s10 + $0x60] sm:$0xff]
    %v2065 = vld [vmem:[%s10 + $0x68] sm:$0xff]
    %v2066 = vld [vmem:[%s10 + $0x70] sm:$0xff]
    %v2067 = vld [vmem:[%s10 + $0x78] sm:$0xff]
    %2068 = vmatprep.subr.mxu0 0.0
    %2069 = vmatpush1.msra.mxu0 %v2067
    %2070 = vmatprep.subr.mxu0 0.0
    %2071 = vmatpush1.msra.mxu0 %v2066
    %2072 = vmatprep.subr.mxu0 0.0
    %2073 = vmatpush1.msra.mxu0 %v2065
    %2074 = vmatprep.subr.mxu0 0.0
    %2075 = vmatpush1.msra.mxu0 %v2064
    %2076 = vmatprep.subr.mxu0 0.0
    %2077 = vmatpush1.msra.mxu0 %v2063
    %2078 = vmatprep.subr.mxu0 0.0
    %2079 = vmatpush1.msra.mxu0 %v2062
    %2080 = vmatprep.subr.mxu0 0.0
    %2081 = vmatpush1.msra.mxu0 %v2061
    %2082 = vmatprep.subr.mxu0 0.0
    %2083 = vmatpush1.msra.mxu0 %v2060
    %2084 = vmatprep.subr.mxu0 0.0
    %2085 = vmatpush1.msra.mxu0 %v2059
    %2086 = vmatprep.subr.mxu0 0.0
    %2087 = vmatpush1.msra.mxu0 %v2058
    %2088 = vmatprep.subr.mxu0 0.0
    %2089 = vmatpush1.msra.mxu0 %v2057
    %2090 = vmatprep.subr.mxu0 0.0
    %2091 = vmatpush1.msra.mxu0 %v2056
    %2092 = vmatprep.subr.mxu0 0.0
    %2093 = vmatpush1.msra.mxu0 %v2055
    %2094 = vmatprep.subr.mxu0 0.0
    %2095 = vmatpush1.msra.mxu0 %v2054
    %2096 = vmatprep.subr.mxu0 0.0
    %2097 = vmatpush1.msra.mxu0 %v2053
    %2098 = vmatprep.subr.mxu0 0.0
    %2099 = vmatpush1.msra.mxu0 %v2052
    %2100 = vmatprep.subr.mxu0 0.0
    %2101 = vmatpush2.msra.mxu0 0.0
    %2102 = vmatprep.subr.mxu0 0.0
    %2103 = vmatpush2.msra.mxu0 0.0
    %2104 = vmatprep.subr.mxu0 0.0
    %2105 = vmatpush2.msra.mxu0 0.0
    %2106 = vmatprep.subr.mxu0 0.0
    %2107 = vmatpush2.msra.mxu0 0.0
    %2108 = vmatprep.subr.mxu0 0.0
    %2109 = vmatpush2.msra.mxu0 0.0
    %2110 = vmatprep.subr.mxu0 0.0
    %2111 = vmatpush2.msra.mxu0 0.0
    %2112 = vmatprep.subr.mxu0 0.0
    %2113 = vmatpush2.msra.mxu0 0.0
    %2114 = vmatprep.subr.mxu0 0.0
    %2115 = vmatpush2.msra.mxu0 0.0
    %2116 = vmatprep.subr.mxu0 0.0
    %2117 = vmatpush2.msra.mxu0 0.0
    %2118 = vmatprep.subr.mxu0 0.0
    %2119 = vmatpush2.msra.mxu0 0.0
    %2120 = vmatprep.subr.mxu0 0.0
    %2121 = vmatpush2.msra.mxu0 0.0
    %2122 = vmatprep.subr.mxu0 0.0
    %2123 = vmatpush2.msra.mxu0 0.0
    %2124 = vmatprep.subr.mxu0 0.0
    %2125 = vmatpush2.msra.mxu0 0.0
    %2126 = vmatprep.subr.mxu0 0.0
    %2127 = vmatpush2.msra.mxu0 0.0
    %2128 = vmatprep.subr.mxu0 0.0
    %2129 = vmatpush2.msra.mxu0 0.0
    %2130 = vmatprep.subr.mxu0 0.0
    %2131 = vmatpush2.msra.mxu0 0.0
    %2132 = vmatprep.mubr.f32.mxu0 0.0
    %2133 = vmatmul.mubr.f32.gmra.mxu0 %v2048
    %v2134 = vpop.f32.mrf.mxu0
    %v2135 = vadd.f32 0.0, %v2134
    %v2136 = vpop.f32.mrf.mxu0
    %2137 = vmatprep.mubr.f32.mxu0 0.0
    %2138 = vmatmul.mubr.f32.gmra.mxu0 %v2049
    %v2139 = vpop.f32.mrf.mxu0
    %v2140 = vadd.f32 0.0, %v2139
    %v2141 = vpop.f32.mrf.mxu0
    %2142 = vmatprep.mubr.f32.mxu0 0.0
    %2143 = vmatmul.mubr.f32.gmra.mxu0 %v2050
    %v2144 = vpop.f32.mrf.mxu0
    %v2145 = vadd.f32 0.0, %v2144
    %v2146 = vpop.f32.mrf.mxu0
    %2147 = vmatprep.mubr.f32.mxu0 0.0
    %2148 = vmatmul.mubr.f32.gmra.mxu0 %v2051
    %v2149 = vpop.f32.mrf.mxu0
    %v2150 = vadd.f32 0.0, %v2149
    %v2151 = vpop.f32.mrf.mxu0
    %2152 = vdwg.mxu0
    %v2153 = vadd.f32 %v1837, %v2135
    %v2154 = vadd.f32 %v1838, %v2140
    %v2155 = vadd.f32 %v1839, %v2145
    %v2156 = vadd.f32 %v1840, %v2150
    %s2157 = scalar_lea.vmem %s11, 1
    %v2158 = vld [vmem:[%s2157] sm:$0x1]
    %s2159 = scalar_lea.vmem %s12, 1
    %v2160 = vld [vmem:[%s2159] sm:$0x1]
    %v2161 = vsel %vm246, %v2153, 0.0
    %2162 = vadd.xlane.f32.xlu0 %v2161
    %v2163 = vpop.xlane.xlu0 %2162
    %v2164 = vsel %vm246, %v2154, 0.0
    %2165 = vadd.xlane.f32.xlu0 %v2164
    %v2166 = vpop.xlane.xlu0 %2165
    %v2167 = vsel %vm246, %v2155, 0.0
    %2168 = vadd.xlane.f32.xlu0 %v2167
    %v2169 = vpop.xlane.xlu0 %2168
    %v2170 = vsel %vm246, %v2156, 0.0
    %2171 = vadd.xlane.f32.xlu0 %v2170
    %v2172 = vpop.xlane.xlu0 %2171
    %v2173 = vmul.f32 %v2163, %v259
    %v2174 = vmul.f32 %v2166, %v259
    %v2175 = vmul.f32 %v2169, %v259
    %v2176 = vmul.f32 %v2172, %v259
    %v2177 = vsub.f32 %v2153, %v2173
    %v2178 = vsub.f32 %v2154, %v2174
    %v2179 = vsub.f32 %v2155, %v2175
    %v2180 = vsub.f32 %v2156, %v2176
    %v2181 = vmul.f32 %v2177, %v2177
    %v2182 = vmul.f32 %v2178, %v2178
    %v2183 = vmul.f32 %v2179, %v2179
    %v2184 = vmul.f32 %v2180, %v2180
    %v2185 = vsel %vm246, %v2181, 0.0
    %2186 = vadd.xlane.f32.xlu0 %v2185
    %v2187 = vpop.xlane.xlu0 %2186
    %v2188 = vsel %vm246, %v2182, 0.0
    %2189 = vadd.xlane.f32.xlu0 %v2188
    %v2190 = vpop.xlane.xlu0 %2189
    %v2191 = vsel %vm246, %v2183, 0.0
    %2192 = vadd.xlane.f32.xlu0 %v2191
    %v2193 = vpop.xlane.xlu0 %2192
    %v2194 = vsel %vm246, %v2184, 0.0
    %2195 = vadd.xlane.f32.xlu0 %v2194
    %v2196 = vpop.xlane.xlu0 %2195
    %v2197 = vmul.f32 %v2187, %v259
    %v2198 = vmul.f32 %v2190, %v259
    %v2199 = vmul.f32 %v2193, %v259
    %v2200 = vmul.f32 %v2196, %v259
    %v2201 = vadd.f32 %v2197, 1e-06
    %v2202 = vadd.f32 %v2198, 1e-06
    %v2203 = vadd.f32 %v2199, 1e-06
    %v2204 = vadd.f32 %v2200, 1e-06
    %v2205 = vrsqrt.pop %v2201
    %v2206 = vrsqrt.pop %v2202
    %v2207 = vrsqrt.pop %v2203
    %v2208 = vrsqrt.pop %v2204
    %v2209 = vmul.f32 %v2177, %v2205
    %v2210 = vmul.f32 %v2178, %v2206
    %v2211 = vmul.f32 %v2179, %v2207
    %v2212 = vmul.f32 %v2180, %v2208
    %v2214 = vlaneseq
    %v2215 = vshrl.u32 %v2214, 7
    %v2216 = vsub.s32 0, %v2215
    %v2217 = vrot.slane %v2158, %v2216
    %v2219 = vmul.f32 %v2209, %v2217
    %v2220 = vmul.f32 %v2210, %v2217
    %v2221 = vmul.f32 %v2211, %v2217
    %v2222 = vmul.f32 %v2212, %v2217
    %v2224 = vlaneseq
    %v2225 = vshrl.u32 %v2224, 7
    %v2226 = vsub.s32 0, %v2225
    %v2227 = vrot.slane %v2160, %v2226
    %v2229 = vadd.f32 %v2219, %v2227
    %v2230 = vadd.f32 %v2220, %v2227
    %v2231 = vadd.f32 %v2221, %v2227
    %v2232 = vadd.f32 %v2222, %v2227
    %s2233 = scalar_lea.vmem %s5, 64
    %v2234 = vld [vmem:[%s2233] sm:$0xff]
    %v2235 = vld [vmem:[%s2233 + $0x8] sm:$0xff]
    %v2236 = vld [vmem:[%s2233 + $0x10] sm:$0xff]
    %v2237 = vld [vmem:[%s2233 + $0x18] sm:$0xff]
    %v2239 = vsel %vm246, %v2229, 0
    %v2242 = vsel %vm246, %v2230, 0
    %v2245 = vsel %vm246, %v2231, 0
    %v2248 = vsel %vm246, %v2232, 0
    %2250 = vmatprep.subr.mxu0 0.0
    %2251 = vmatpush1.msra.mxu0 0.0
    %2252 = vmatprep.subr.mxu0 0.0
    %2253 = vmatpush1.msra.mxu0 0.0
    %2254 = vmatprep.subr.mxu0 0.0
    %2255 = vmatpush1.msra.mxu0 0.0
    %2256 = vmatprep.subr.mxu0 0.0
    %2257 = vmatpush1.msra.mxu0 0.0
    %2258 = vmatprep.subr.mxu0 0.0
    %2259 = vmatpush1.msra.mxu0 0.0
    %2260 = vmatprep.subr.mxu0 0.0
    %2261 = vmatpush1.msra.mxu0 0.0
    %2262 = vmatprep.subr.mxu0 0.0
    %2263 = vmatpush1.msra.mxu0 0.0
    %2264 = vmatprep.subr.mxu0 0.0
    %2265 = vmatpush1.msra.mxu0 0.0
    %2266 = vmatprep.subr.mxu0 0.0
    %2267 = vmatpush1.msra.mxu0 0.0
    %2268 = vmatprep.subr.mxu0 0.0
    %2269 = vmatpush1.msra.mxu0 0.0
    %2270 = vmatprep.subr.mxu0 0.0
    %2271 = vmatpush1.msra.mxu0 0.0
    %2272 = vmatprep.subr.mxu0 0.0
    %2273 = vmatpush1.msra.mxu0 0.0
    %2274 = vmatprep.subr.mxu0 0.0
    %2275 = vmatpush1.msra.mxu0 %v2237
    %2276 = vmatprep.subr.mxu0 0.0
    %2277 = vmatpush1.msra.mxu0 %v2236
    %2278 = vmatprep.subr.mxu0 0.0
    %2279 = vmatpush1.msra.mxu0 %v2235
    %2280 = vmatprep.subr.mxu0 0.0
    %2281 = vmatpush1.msra.mxu0 %v2234
    %2282 = vmatprep.subr.mxu0 0.0
    %2283 = vmatpush2.msra.mxu0 0.0
    %2284 = vmatprep.subr.mxu0 0.0
    %2285 = vmatpush2.msra.mxu0 0.0
    %2286 = vmatprep.subr.mxu0 0.0
    %2287 = vmatpush2.msra.mxu0 0.0
    %2288 = vmatprep.subr.mxu0 0.0
    %2289 = vmatpush2.msra.mxu0 0.0
    %2290 = vmatprep.subr.mxu0 0.0
    %2291 = vmatpush2.msra.mxu0 0.0
    %2292 = vmatprep.subr.mxu0 0.0
    %2293 = vmatpush2.msra.mxu0 0.0
    %2294 = vmatprep.subr.mxu0 0.0
    %2295 = vmatpush2.msra.mxu0 0.0
    %2296 = vmatprep.subr.mxu0 0.0
    %2297 = vmatpush2.msra.mxu0 0.0
    %2298 = vmatprep.subr.mxu0 0.0
    %2299 = vmatpush2.msra.mxu0 0.0
    %2300 = vmatprep.subr.mxu0 0.0
    %2301 = vmatpush2.msra.mxu0 0.0
    %2302 = vmatprep.subr.mxu0 0.0
    %2303 = vmatpush2.msra.mxu0 0.0
    %2304 = vmatprep.subr.mxu0 0.0
    %2305 = vmatpush2.msra.mxu0 0.0
    %2306 = vmatprep.subr.mxu0 0.0
    %2307 = vmatpush2.msra.mxu0 0.0
    %2308 = vmatprep.subr.mxu0 0.0
    %2309 = vmatpush2.msra.mxu0 0.0
    %2310 = vmatprep.subr.mxu0 0.0
    %2311 = vmatpush2.msra.mxu0 0.0
    %2312 = vmatprep.subr.mxu0 0.0
    %2313 = vmatpush2.msra.mxu0 0.0
    %2314 = vmatprep.mubr.f32.mxu0 0.0
    %2315 = vmatmul.mubr.f32.gmra.mxu0 %v2239
    %v2316 = vpop.f32.mrf.mxu0
    %v2317 = vadd.f32 0.0, %v2316
    %v2318 = vpop.f32.mrf.mxu0
    %2319 = vmatprep.mubr.f32.mxu0 0.0
    %2320 = vmatmul.mubr.f32.gmra.mxu0 %v2242
    %v2321 = vpop.f32.mrf.mxu0
    %v2322 = vadd.f32 0.0, %v2321
    %v2323 = vpop.f32.mrf.mxu0
    %2324 = vmatprep.mubr.f32.mxu0 0.0
    %2325 = vmatmul.mubr.f32.gmra.mxu0 %v2245
    %v2326 = vpop.f32.mrf.mxu0
    %v2327 = vadd.f32 0.0, %v2326
    %v2328 = vpop.f32.mrf.mxu0
    %2329 = vmatprep.mubr.f32.mxu0 0.0
    %2330 = vmatmul.mubr.f32.gmra.mxu0 %v2248
    %v2331 = vpop.f32.mrf.mxu0
    %v2332 = vadd.f32 0.0, %v2331
    %v2333 = vpop.f32.mrf.mxu0
    %2334 = vdwg.mxu0
    %v2335 = vmul.f32 %v2317, 0.25
    %v2336 = vmul.f32 %v2322, 0.25
    %v2337 = vmul.f32 %v2327, 0.25
    %v2338 = vmul.f32 %v2332, 0.25
    %s2339 = scalar_lea.vmem %s6, 64
    %v2340 = vld [vmem:[%s2339] sm:$0xff]
    %v2341 = vld [vmem:[%s2339 + $0x8] sm:$0xff]
    %v2342 = vld [vmem:[%s2339 + $0x10] sm:$0xff]
    %v2343 = vld [vmem:[%s2339 + $0x18] sm:$0xff]
    %2344 = vmatprep.subr.mxu0 0.0
    %2345 = vmatpush1.msra.mxu0 0.0
    %2346 = vmatprep.subr.mxu0 0.0
    %2347 = vmatpush1.msra.mxu0 0.0
    %2348 = vmatprep.subr.mxu0 0.0
    %2349 = vmatpush1.msra.mxu0 0.0
    %2350 = vmatprep.subr.mxu0 0.0
    %2351 = vmatpush1.msra.mxu0 0.0
    %2352 = vmatprep.subr.mxu0 0.0
    %2353 = vmatpush1.msra.mxu0 0.0
    %2354 = vmatprep.subr.mxu0 0.0
    %2355 = vmatpush1.msra.mxu0 0.0
    %2356 = vmatprep.subr.mxu0 0.0
    %2357 = vmatpush1.msra.mxu0 0.0
    %2358 = vmatprep.subr.mxu0 0.0
    %2359 = vmatpush1.msra.mxu0 0.0
    %2360 = vmatprep.subr.mxu0 0.0
    %2361 = vmatpush1.msra.mxu0 0.0
    %2362 = vmatprep.subr.mxu0 0.0
    %2363 = vmatpush1.msra.mxu0 0.0
    %2364 = vmatprep.subr.mxu0 0.0
    %2365 = vmatpush1.msra.mxu0 0.0
    %2366 = vmatprep.subr.mxu0 0.0
    %2367 = vmatpush1.msra.mxu0 0.0
    %2368 = vmatprep.subr.mxu0 0.0
    %2369 = vmatpush1.msra.mxu0 %v2343
    %2370 = vmatprep.subr.mxu0 0.0
    %2371 = vmatpush1.msra.mxu0 %v2342
    %2372 = vmatprep.subr.mxu0 0.0
    %2373 = vmatpush1.msra.mxu0 %v2341
    %2374 = vmatprep.subr.mxu0 0.0
    %2375 = vmatpush1.msra.mxu0 %v2340
    %2376 = vmatprep.subr.mxu0 0.0
    %2377 = vmatpush2.msra.mxu0 0.0
    %2378 = vmatprep.subr.mxu0 0.0
    %2379 = vmatpush2.msra.mxu0 0.0
    %2380 = vmatprep.subr.mxu0 0.0
    %2381 = vmatpush2.msra.mxu0 0.0
    %2382 = vmatprep.subr.mxu0 0.0
    %2383 = vmatpush2.msra.mxu0 0.0
    %2384 = vmatprep.subr.mxu0 0.0
    %2385 = vmatpush2.msra.mxu0 0.0
    %2386 = vmatprep.subr.mxu0 0.0
    %2387 = vmatpush2.msra.mxu0 0.0
    %2388 = vmatprep.subr.mxu0 0.0
    %2389 = vmatpush2.msra.mxu0 0.0
    %2390 = vmatprep.subr.mxu0 0.0
    %2391 = vmatpush2.msra.mxu0 0.0
    %2392 = vmatprep.subr.mxu0 0.0
    %2393 = vmatpush2.msra.mxu0 0.0
    %2394 = vmatprep.subr.mxu0 0.0
    %2395 = vmatpush2.msra.mxu0 0.0
    %2396 = vmatprep.subr.mxu0 0.0
    %2397 = vmatpush2.msra.mxu0 0.0
    %2398 = vmatprep.subr.mxu0 0.0
    %2399 = vmatpush2.msra.mxu0 0.0
    %2400 = vmatprep.subr.mxu0 0.0
    %2401 = vmatpush2.msra.mxu0 0.0
    %2402 = vmatprep.subr.mxu0 0.0
    %2403 = vmatpush2.msra.mxu0 0.0
    %2404 = vmatprep.subr.mxu0 0.0
    %2405 = vmatpush2.msra.mxu0 0.0
    %2406 = vmatprep.subr.mxu0 0.0
    %2407 = vmatpush2.msra.mxu0 0.0
    %2408 = vmatprep.mubr.f32.mxu0 0.0
    %2409 = vmatmul.mubr.f32.gmra.mxu0 %v2239
    %v2410 = vpop.f32.mrf.mxu0
    %v2411 = vadd.f32 0.0, %v2410
    %v2412 = vpop.f32.mrf.mxu0
    %2413 = vmatprep.mubr.f32.mxu0 0.0
    %2414 = vmatmul.mubr.f32.gmra.mxu0 %v2242
    %v2415 = vpop.f32.mrf.mxu0
    %v2416 = vadd.f32 0.0, %v2415
    %v2417 = vpop.f32.mrf.mxu0
    %2418 = vmatprep.mubr.f32.mxu0 0.0
    %2419 = vmatmul.mubr.f32.gmra.mxu0 %v2245
    %v2420 = vpop.f32.mrf.mxu0
    %v2421 = vadd.f32 0.0, %v2420
    %v2422 = vpop.f32.mrf.mxu0
    %2423 = vmatprep.mubr.f32.mxu0 0.0
    %2424 = vmatmul.mubr.f32.gmra.mxu0 %v2248
    %v2425 = vpop.f32.mrf.mxu0
    %v2426 = vadd.f32 0.0, %v2425
    %v2427 = vpop.f32.mrf.mxu0
    %2428 = vdwg.mxu0
    %s2429 = scalar_lea.vmem %s7, 64
    %v2430 = vld [vmem:[%s2429] sm:$0xff]
    %v2431 = vld [vmem:[%s2429 + $0x8] sm:$0xff]
    %v2432 = vld [vmem:[%s2429 + $0x10] sm:$0xff]
    %v2433 = vld [vmem:[%s2429 + $0x18] sm:$0xff]
    %2434 = vmatprep.subr.mxu0 0.0
    %2435 = vmatpush1.msra.mxu0 0.0
    %2436 = vmatprep.subr.mxu0 0.0
    %2437 = vmatpush1.msra.mxu0 0.0
    %2438 = vmatprep.subr.mxu0 0.0
    %2439 = vmatpush1.msra.mxu0 0.0
    %2440 = vmatprep.subr.mxu0 0.0
    %2441 = vmatpush1.msra.mxu0 0.0
    %2442 = vmatprep.subr.mxu0 0.0
    %2443 = vmatpush1.msra.mxu0 0.0
    %2444 = vmatprep.subr.mxu0 0.0
    %2445 = vmatpush1.msra.mxu0 0.0
    %2446 = vmatprep.subr.mxu0 0.0
    %2447 = vmatpush1.msra.mxu0 0.0
    %2448 = vmatprep.subr.mxu0 0.0
    %2449 = vmatpush1.msra.mxu0 0.0
    %2450 = vmatprep.subr.mxu0 0.0
    %2451 = vmatpush1.msra.mxu0 0.0
    %2452 = vmatprep.subr.mxu0 0.0
    %2453 = vmatpush1.msra.mxu0 0.0
    %2454 = vmatprep.subr.mxu0 0.0
    %2455 = vmatpush1.msra.mxu0 0.0
    %2456 = vmatprep.subr.mxu0 0.0
    %2457 = vmatpush1.msra.mxu0 0.0
    %2458 = vmatprep.subr.mxu0 0.0
    %2459 = vmatpush1.msra.mxu0 %v2433
    %2460 = vmatprep.subr.mxu0 0.0
    %2461 = vmatpush1.msra.mxu0 %v2432
    %2462 = vmatprep.subr.mxu0 0.0
    %2463 = vmatpush1.msra.mxu0 %v2431
    %2464 = vmatprep.subr.mxu0 0.0
    %2465 = vmatpush1.msra.mxu0 %v2430
    %2466 = vmatprep.subr.mxu0 0.0
    %2467 = vmatpush2.msra.mxu0 0.0
    %2468 = vmatprep.subr.mxu0 0.0
    %2469 = vmatpush2.msra.mxu0 0.0
    %2470 = vmatprep.subr.mxu0 0.0
    %2471 = vmatpush2.msra.mxu0 0.0
    %2472 = vmatprep.subr.mxu0 0.0
    %2473 = vmatpush2.msra.mxu0 0.0
    %2474 = vmatprep.subr.mxu0 0.0
    %2475 = vmatpush2.msra.mxu0 0.0
    %2476 = vmatprep.subr.mxu0 0.0
    %2477 = vmatpush2.msra.mxu0 0.0
    %2478 = vmatprep.subr.mxu0 0.0
    %2479 = vmatpush2.msra.mxu0 0.0
    %2480 = vmatprep.subr.mxu0 0.0
    %2481 = vmatpush2.msra.mxu0 0.0
    %2482 = vmatprep.subr.mxu0 0.0
    %2483 = vmatpush2.msra.mxu0 0.0
    %2484 = vmatprep.subr.mxu0 0.0
    %2485 = vmatpush2.msra.mxu0 0.0
    %2486 = vmatprep.subr.mxu0 0.0
    %2487 = vmatpush2.msra.mxu0 0.0
    %2488 = vmatprep.subr.mxu0 0.0
    %2489 = vmatpush2.msra.mxu0 0.0
    %2490 = vmatprep.subr.mxu0 0.0
    %2491 = vmatpush2.msra.mxu0 0.0
    %2492 = vmatprep.subr.mxu0 0.0
    %2493 = vmatpush2.msra.mxu0 0.0
    %2494 = vmatprep.subr.mxu0 0.0
    %2495 = vmatpush2.msra.mxu0 0.0
    %2496 = vmatprep.subr.mxu0 0.0
    %2497 = vmatpush2.msra.mxu0 0.0
    %2498 = vmatprep.mubr.f32.mxu0 0.0
    %2499 = vmatmul.mubr.f32.gmra.mxu0 %v2239
    %v2500 = vpop.f32.mrf.mxu0
    %v2501 = vadd.f32 0.0, %v2500
    %v2502 = vpop.f32.mrf.mxu0
    %2503 = vmatprep.mubr.f32.mxu0 0.0
    %2504 = vmatmul.mubr.f32.gmra.mxu0 %v2242
    %v2505 = vpop.f32.mrf.mxu0
    %v2506 = vadd.f32 0.0, %v2505
    %v2507 = vpop.f32.mrf.mxu0
    %2508 = vmatprep.mubr.f32.mxu0 0.0
    %2509 = vmatmul.mubr.f32.gmra.mxu0 %v2245
    %v2510 = vpop.f32.mrf.mxu0
    %v2511 = vadd.f32 0.0, %v2510
    %v2512 = vpop.f32.mrf.mxu0
    %2513 = vmatprep.mubr.f32.mxu0 0.0
    %2514 = vmatmul.mubr.f32.gmra.mxu0 %v2248
    %v2515 = vpop.f32.mrf.mxu0
    %v2516 = vadd.f32 0.0, %v2515
    %v2517 = vpop.f32.mrf.mxu0
    %2518 = vdwg.mxu0
    %v2520 = vsel %vm603, %v2335, 0
    %v2523 = vsel %vm603, %v2336, 0
    %v2526 = vsel %vm603, %v2411, 0
    %v2529 = vsel %vm603, %v2416, 0
    %2531 = vmatprep.subr.mxu0 0.0
    %2532 = vmatpush1.xpose.msra.mxu0 0.0
    %2533 = vmatprep.subr.mxu0 0.0
    %2534 = vmatpush1.xpose.msra.mxu0 0.0
    %2535 = vmatprep.subr.mxu0 0.0
    %2536 = vmatpush1.xpose.msra.mxu0 0.0
    %2537 = vmatprep.subr.mxu0 0.0
    %2538 = vmatpush1.xpose.msra.mxu0 0.0
    %2539 = vmatprep.subr.mxu0 0.0
    %2540 = vmatpush1.xpose.msra.mxu0 0.0
    %2541 = vmatprep.subr.mxu0 0.0
    %2542 = vmatpush1.xpose.msra.mxu0 0.0
    %2543 = vmatprep.subr.mxu0 0.0
    %2544 = vmatpush1.xpose.msra.mxu0 0.0
    %2545 = vmatprep.subr.mxu0 0.0
    %2546 = vmatpush1.xpose.msra.mxu0 0.0
    %2547 = vmatprep.subr.mxu0 0.0
    %2548 = vmatpush1.xpose.msra.mxu0 0.0
    %2549 = vmatprep.subr.mxu0 0.0
    %2550 = vmatpush1.xpose.msra.mxu0 0.0
    %2551 = vmatprep.subr.mxu0 0.0
    %2552 = vmatpush1.xpose.msra.mxu0 0.0
    %2553 = vmatprep.subr.mxu0 0.0
    %2554 = vmatpush1.xpose.msra.mxu0 0.0
    %2555 = vmatprep.subr.mxu0 0.0
    %2556 = vmatpush1.xpose.msra.mxu0 0.0
    %2557 = vmatprep.subr.mxu0 0.0
    %2558 = vmatpush1.xpose.msra.mxu0 0.0
    %2559 = vmatprep.subr.mxu0 0.0
    %2560 = vmatpush1.xpose.msra.mxu0 %v2529
    %2561 = vmatprep.subr.mxu0 0.0
    %2562 = vmatpush1.xpose.msra.mxu0 %v2526
    %2563 = vmatprep.subr.mxu0 0.0
    %2564 = vmatpush2.xpose.msra.mxu0 0.0
    %2565 = vmatprep.subr.mxu0 0.0
    %2566 = vmatpush2.xpose.msra.mxu0 0.0
    %2567 = vmatprep.subr.mxu0 0.0
    %2568 = vmatpush2.xpose.msra.mxu0 0.0
    %2569 = vmatprep.subr.mxu0 0.0
    %2570 = vmatpush2.xpose.msra.mxu0 0.0
    %2571 = vmatprep.subr.mxu0 0.0
    %2572 = vmatpush2.xpose.msra.mxu0 0.0
    %2573 = vmatprep.subr.mxu0 0.0
    %2574 = vmatpush2.xpose.msra.mxu0 0.0
    %2575 = vmatprep.subr.mxu0 0.0
    %2576 = vmatpush2.xpose.msra.mxu0 0.0
    %2577 = vmatprep.subr.mxu0 0.0
    %2578 = vmatpush2.xpose.msra.mxu0 0.0
    %2579 = vmatprep.subr.mxu0 0.0
    %2580 = vmatpush2.xpose.msra.mxu0 0.0
    %2581 = vmatprep.subr.mxu0 0.0
    %2582 = vmatpush2.xpose.msra.mxu0 0.0
    %2583 = vmatprep.subr.mxu0 0.0
    %2584 = vmatpush2.xpose.msra.mxu0 0.0
    %2585 = vmatprep.subr.mxu0 0.0
    %2586 = vmatpush2.xpose.msra.mxu0 0.0
    %2587 = vmatprep.subr.mxu0 0.0
    %2588 = vmatpush2.xpose.msra.mxu0 0.0
    %2589 = vmatprep.subr.mxu0 0.0
    %2590 = vmatpush2.xpose.msra.mxu0 0.0
    %2591 = vmatprep.subr.mxu0 0.0
    %2592 = vmatpush2.xpose.msra.mxu0 0.0
    %2593 = vmatprep.subr.mxu0 0.0
    %2594 = vmatpush2.xpose.msra.mxu0 0.0
    %2595 = vmatprep.mubr.f32.mxu0 0.0
    %2596 = vmatmul.mubr.f32.gmra.mxu0 %v2520
    %v2597 = vpop.f32.mrf.mxu0
    %v2598 = vadd.f32 0.0, %v2597
    %v2599 = vpop.f32.mrf.mxu0
    %2600 = vmatprep.mubr.f32.mxu0 0.0
    %2601 = vmatmul.mubr.f32.gmra.mxu0 %v2523
    %v2602 = vpop.f32.mrf.mxu0
    %v2603 = vadd.f32 0.0, %v2602
    %v2604 = vpop.f32.mrf.mxu0
    %2605 = vdwg.mxu0
    %v2607 = vsel %vm603, %v2337, 0
    %v2610 = vsel %vm603, %v2338, 0
    %v2613 = vsel %vm603, %v2421, 0
    %v2616 = vsel %vm603, %v2426, 0
    %2618 = vmatprep.subr.mxu0 0.0
    %2619 = vmatpush1.xpose.msra.mxu0 0.0
    %2620 = vmatprep.subr.mxu0 0.0
    %2621 = vmatpush1.xpose.msra.mxu0 0.0
    %2622 = vmatprep.subr.mxu0 0.0
    %2623 = vmatpush1.xpose.msra.mxu0 0.0
    %2624 = vmatprep.subr.mxu0 0.0
    %2625 = vmatpush1.xpose.msra.mxu0 0.0
    %2626 = vmatprep.subr.mxu0 0.0
    %2627 = vmatpush1.xpose.msra.mxu0 0.0
    %2628 = vmatprep.subr.mxu0 0.0
    %2629 = vmatpush1.xpose.msra.mxu0 0.0
    %2630 = vmatprep.subr.mxu0 0.0
    %2631 = vmatpush1.xpose.msra.mxu0 0.0
    %2632 = vmatprep.subr.mxu0 0.0
    %2633 = vmatpush1.xpose.msra.mxu0 0.0
    %2634 = vmatprep.subr.mxu0 0.0
    %2635 = vmatpush1.xpose.msra.mxu0 0.0
    %2636 = vmatprep.subr.mxu0 0.0
    %2637 = vmatpush1.xpose.msra.mxu0 0.0
    %2638 = vmatprep.subr.mxu0 0.0
    %2639 = vmatpush1.xpose.msra.mxu0 0.0
    %2640 = vmatprep.subr.mxu0 0.0
    %2641 = vmatpush1.xpose.msra.mxu0 0.0
    %2642 = vmatprep.subr.mxu0 0.0
    %2643 = vmatpush1.xpose.msra.mxu0 0.0
    %2644 = vmatprep.subr.mxu0 0.0
    %2645 = vmatpush1.xpose.msra.mxu0 0.0
    %2646 = vmatprep.subr.mxu0 0.0
    %2647 = vmatpush1.xpose.msra.mxu0 %v2616
    %2648 = vmatprep.subr.mxu0 0.0
    %2649 = vmatpush1.xpose.msra.mxu0 %v2613
    %2650 = vmatprep.subr.mxu0 0.0
    %2651 = vmatpush2.xpose.msra.mxu0 0.0
    %2652 = vmatprep.subr.mxu0 0.0
    %2653 = vmatpush2.xpose.msra.mxu0 0.0
    %2654 = vmatprep.subr.mxu0 0.0
    %2655 = vmatpush2.xpose.msra.mxu0 0.0
    %2656 = vmatprep.subr.mxu0 0.0
    %2657 = vmatpush2.xpose.msra.mxu0 0.0
    %2658 = vmatprep.subr.mxu0 0.0
    %2659 = vmatpush2.xpose.msra.mxu0 0.0
    %2660 = vmatprep.subr.mxu0 0.0
    %2661 = vmatpush2.xpose.msra.mxu0 0.0
    %2662 = vmatprep.subr.mxu0 0.0
    %2663 = vmatpush2.xpose.msra.mxu0 0.0
    %2664 = vmatprep.subr.mxu0 0.0
    %2665 = vmatpush2.xpose.msra.mxu0 0.0
    %2666 = vmatprep.subr.mxu0 0.0
    %2667 = vmatpush2.xpose.msra.mxu0 0.0
    %2668 = vmatprep.subr.mxu0 0.0
    %2669 = vmatpush2.xpose.msra.mxu0 0.0
    %2670 = vmatprep.subr.mxu0 0.0
    %2671 = vmatpush2.xpose.msra.mxu0 0.0
    %2672 = vmatprep.subr.mxu0 0.0
    %2673 = vmatpush2.xpose.msra.mxu0 0.0
    %2674 = vmatprep.subr.mxu0 0.0
    %2675 = vmatpush2.xpose.msra.mxu0 0.0
    %2676 = vmatprep.subr.mxu0 0.0
    %2677 = vmatpush2.xpose.msra.mxu0 0.0
    %2678 = vmatprep.subr.mxu0 0.0
    %2679 = vmatpush2.xpose.msra.mxu0 0.0
    %2680 = vmatprep.subr.mxu0 0.0
    %2681 = vmatpush2.xpose.msra.mxu0 0.0
    %2682 = vmatprep.mubr.f32.mxu0 0.0
    %2683 = vmatmul.mubr.f32.gmra.mxu0 %v2607
    %v2684 = vpop.f32.mrf.mxu0
    %v2685 = vadd.f32 0.0, %v2684
    %v2686 = vpop.f32.mrf.mxu0
    %2687 = vmatprep.mubr.f32.mxu0 0.0
    %2688 = vmatmul.mubr.f32.gmra.mxu0 %v2610
    %v2689 = vpop.f32.mrf.mxu0
    %v2690 = vadd.f32 0.0, %v2689
    %v2691 = vpop.f32.mrf.mxu0
    %2692 = vdwg.mxu0
    %v2693 = vsel %vm603, %v2598, -inf
    %2694 = vmax.xlane.f32.xlu0 %v2693
    %v2695 = vpop.xlane.xlu0 %2694
    %v2696 = vsel %vm603, %v2603, -inf
    %2697 = vmax.xlane.f32.xlu0 %v2696
    %v2698 = vpop.xlane.xlu0 %2697
    %v2699 = vsel %vm603, %v2685, -inf
    %2700 = vmax.xlane.f32.xlu0 %v2699
    %v2701 = vpop.xlane.xlu0 %2700
    %v2702 = vsel %vm603, %v2690, -inf
    %2703 = vmax.xlane.f32.xlu0 %v2702
    %v2704 = vpop.xlane.xlu0 %2703
    %v2705 = vsub.f32 %v2598, %v2695
    %v2706 = vsub.f32 %v2603, %v2698
    %v2707 = vsub.f32 %v2685, %v2701
    %v2708 = vsub.f32 %v2690, %v2704
    %v2709 = vmul.f32 %v2705, 1.442695
    %v2710 = vpow.pop %v2709
    %v2711 = vmul.f32 %v2706, 1.442695
    %v2712 = vpow.pop %v2711
    %v2713 = vmul.f32 %v2707, 1.442695
    %v2714 = vpow.pop %v2713
    %v2715 = vmul.f32 %v2708, 1.442695
    %v2716 = vpow.pop %v2715
    %v2717 = vsel %vm603, %v2710, 0.0
    %2718 = vadd.xlane.f32.xlu0 %v2717
    %v2719 = vpop.xlane.xlu0 %2718
    %v2720 = vsel %vm603, %v2712, 0.0
    %2721 = vadd.xlane.f32.xlu0 %v2720
    %v2722 = vpop.xlane.xlu0 %2721
    %v2723 = vsel %vm603, %v2714, 0.0
    %2724 = vadd.xlane.f32.xlu0 %v2723
    %v2725 = vpop.xlane.xlu0 %2724
    %v2726 = vsel %vm603, %v2716, 0.0
    %2727 = vadd.xlane.f32.xlu0 %v2726
    %v2728 = vpop.xlane.xlu0 %2727
    %v2729 = vrcp.pop %v2719
    %v2730 = vrcp.pop %v2722
    %v2731 = vrcp.pop %v2725
    %v2732 = vrcp.pop %v2728
    %v2733 = vmul.f32 %v2710, %v2729
    %v2734 = vmul.f32 %v2712, %v2730
    %v2735 = vmul.f32 %v2714, %v2731
    %v2736 = vmul.f32 %v2716, %v2732
    %v2738 = vsel %vm603, %v2733, 0
    %v2741 = vsel %vm603, %v2734, 0
    %2743 = vmatprep.subr.mxu0 0.0
    %2744 = vmatpush1.msra.mxu0 0.0
    %2745 = vmatprep.subr.mxu0 0.0
    %2746 = vmatpush1.msra.mxu0 0.0
    %2747 = vmatprep.subr.mxu0 0.0
    %2748 = vmatpush1.msra.mxu0 0.0
    %2749 = vmatprep.subr.mxu0 0.0
    %2750 = vmatpush1.msra.mxu0 0.0
    %2751 = vmatprep.subr.mxu0 0.0
    %2752 = vmatpush1.msra.mxu0 0.0
    %2753 = vmatprep.subr.mxu0 0.0
    %2754 = vmatpush1.msra.mxu0 0.0
    %2755 = vmatprep.subr.mxu0 0.0
    %2756 = vmatpush1.msra.mxu0 0.0
    %2757 = vmatprep.subr.mxu0 0.0
    %2758 = vmatpush1.msra.mxu0 0.0
    %2759 = vmatprep.subr.mxu0 0.0
    %2760 = vmatpush1.msra.mxu0 0.0
    %2761 = vmatprep.subr.mxu0 0.0
    %2762 = vmatpush1.msra.mxu0 0.0
    %2763 = vmatprep.subr.mxu0 0.0
    %2764 = vmatpush1.msra.mxu0 0.0
    %2765 = vmatprep.subr.mxu0 0.0
    %2766 = vmatpush1.msra.mxu0 0.0
    %2767 = vmatprep.subr.mxu0 0.0
    %2768 = vmatpush1.msra.mxu0 0.0
    %2769 = vmatprep.subr.mxu0 0.0
    %2770 = vmatpush1.msra.mxu0 0.0
    %2771 = vmatprep.subr.mxu0 0.0
    %2772 = vmatpush1.msra.mxu0 %v2506
    %2773 = vmatprep.subr.mxu0 0.0
    %2774 = vmatpush1.msra.mxu0 %v2501
    %2775 = vmatprep.subr.mxu0 0.0
    %2776 = vmatpush2.msra.mxu0 0.0
    %2777 = vmatprep.subr.mxu0 0.0
    %2778 = vmatpush2.msra.mxu0 0.0
    %2779 = vmatprep.subr.mxu0 0.0
    %2780 = vmatpush2.msra.mxu0 0.0
    %2781 = vmatprep.subr.mxu0 0.0
    %2782 = vmatpush2.msra.mxu0 0.0
    %2783 = vmatprep.subr.mxu0 0.0
    %2784 = vmatpush2.msra.mxu0 0.0
    %2785 = vmatprep.subr.mxu0 0.0
    %2786 = vmatpush2.msra.mxu0 0.0
    %2787 = vmatprep.subr.mxu0 0.0
    %2788 = vmatpush2.msra.mxu0 0.0
    %2789 = vmatprep.subr.mxu0 0.0
    %2790 = vmatpush2.msra.mxu0 0.0
    %2791 = vmatprep.subr.mxu0 0.0
    %2792 = vmatpush2.msra.mxu0 0.0
    %2793 = vmatprep.subr.mxu0 0.0
    %2794 = vmatpush2.msra.mxu0 0.0
    %2795 = vmatprep.subr.mxu0 0.0
    %2796 = vmatpush2.msra.mxu0 0.0
    %2797 = vmatprep.subr.mxu0 0.0
    %2798 = vmatpush2.msra.mxu0 0.0
    %2799 = vmatprep.subr.mxu0 0.0
    %2800 = vmatpush2.msra.mxu0 0.0
    %2801 = vmatprep.subr.mxu0 0.0
    %2802 = vmatpush2.msra.mxu0 0.0
    %2803 = vmatprep.subr.mxu0 0.0
    %2804 = vmatpush2.msra.mxu0 0.0
    %2805 = vmatprep.subr.mxu0 0.0
    %2806 = vmatpush2.msra.mxu0 0.0
    %2807 = vmatprep.mubr.f32.mxu0 0.0
    %2808 = vmatmul.mubr.f32.gmra.mxu0 %v2738
    %v2809 = vpop.f32.mrf.mxu0
    %v2810 = vadd.f32 0.0, %v2809
    %v2811 = vpop.f32.mrf.mxu0
    %2812 = vmatprep.mubr.f32.mxu0 0.0
    %2813 = vmatmul.mubr.f32.gmra.mxu0 %v2741
    %v2814 = vpop.f32.mrf.mxu0
    %v2815 = vadd.f32 0.0, %v2814
    %v2816 = vpop.f32.mrf.mxu0
    %2817 = vdwg.mxu0
    %v2819 = vsel %vm603, %v2735, 0
    %v2822 = vsel %vm603, %v2736, 0
    %2824 = vmatprep.subr.mxu0 0.0
    %2825 = vmatpush1.msra.mxu0 0.0
    %2826 = vmatprep.subr.mxu0 0.0
    %2827 = vmatpush1.msra.mxu0 0.0
    %2828 = vmatprep.subr.mxu0 0.0
    %2829 = vmatpush1.msra.mxu0 0.0
    %2830 = vmatprep.subr.mxu0 0.0
    %2831 = vmatpush1.msra.mxu0 0.0
    %2832 = vmatprep.subr.mxu0 0.0
    %2833 = vmatpush1.msra.mxu0 0.0
    %2834 = vmatprep.subr.mxu0 0.0
    %2835 = vmatpush1.msra.mxu0 0.0
    %2836 = vmatprep.subr.mxu0 0.0
    %2837 = vmatpush1.msra.mxu0 0.0
    %2838 = vmatprep.subr.mxu0 0.0
    %2839 = vmatpush1.msra.mxu0 0.0
    %2840 = vmatprep.subr.mxu0 0.0
    %2841 = vmatpush1.msra.mxu0 0.0
    %2842 = vmatprep.subr.mxu0 0.0
    %2843 = vmatpush1.msra.mxu0 0.0
    %2844 = vmatprep.subr.mxu0 0.0
    %2845 = vmatpush1.msra.mxu0 0.0
    %2846 = vmatprep.subr.mxu0 0.0
    %2847 = vmatpush1.msra.mxu0 0.0
    %2848 = vmatprep.subr.mxu0 0.0
    %2849 = vmatpush1.msra.mxu0 0.0
    %2850 = vmatprep.subr.mxu0 0.0
    %2851 = vmatpush1.msra.mxu0 0.0
    %2852 = vmatprep.subr.mxu0 0.0
    %2853 = vmatpush1.msra.mxu0 %v2516
    %2854 = vmatprep.subr.mxu0 0.0
    %2855 = vmatpush1.msra.mxu0 %v2511
    %2856 = vmatprep.subr.mxu0 0.0
    %2857 = vmatpush2.msra.mxu0 0.0
    %2858 = vmatprep.subr.mxu0 0.0
    %2859 = vmatpush2.msra.mxu0 0.0
    %2860 = vmatprep.subr.mxu0 0.0
    %2861 = vmatpush2.msra.mxu0 0.0
    %2862 = vmatprep.subr.mxu0 0.0
    %2863 = vmatpush2.msra.mxu0 0.0
    %2864 = vmatprep.subr.mxu0 0.0
    %2865 = vmatpush2.msra.mxu0 0.0
    %2866 = vmatprep.subr.mxu0 0.0
    %2867 = vmatpush2.msra.mxu0 0.0
    %2868 = vmatprep.subr.mxu0 0.0
    %2869 = vmatpush2.msra.mxu0 0.0
    %2870 = vmatprep.subr.mxu0 0.0
    %2871 = vmatpush2.msra.mxu0 0.0
    %2872 = vmatprep.subr.mxu0 0.0
    %2873 = vmatpush2.msra.mxu0 0.0
    %2874 = vmatprep.subr.mxu0 0.0
    %2875 = vmatpush2.msra.mxu0 0.0
    %2876 = vmatprep.subr.mxu0 0.0
    %2877 = vmatpush2.msra.mxu0 0.0
    %2878 = vmatprep.subr.mxu0 0.0
    %2879 = vmatpush2.msra.mxu0 0.0
    %2880 = vmatprep.subr.mxu0 0.0
    %2881 = vmatpush2.msra.mxu0 0.0
    %2882 = vmatprep.subr.mxu0 0.0
    %2883 = vmatpush2.msra.mxu0 0.0
    %2884 = vmatprep.subr.mxu0 0.0
    %2885 = vmatpush2.msra.mxu0 0.0
    %2886 = vmatprep.subr.mxu0 0.0
    %2887 = vmatpush2.msra.mxu0 0.0
    %2888 = vmatprep.mubr.f32.mxu0 0.0
    %2889 = vmatmul.mubr.f32.gmra.mxu0 %v2819
    %v2890 = vpop.f32.mrf.mxu0
    %v2891 = vadd.f32 0.0, %v2890
    %v2892 = vpop.f32.mrf.mxu0
    %2893 = vmatprep.mubr.f32.mxu0 0.0
    %2894 = vmatmul.mubr.f32.gmra.mxu0 %v2822
    %v2895 = vpop.f32.mrf.mxu0
    %v2896 = vadd.f32 0.0, %v2895
    %v2897 = vpop.f32.mrf.mxu0
    %2898 = vdwg.mxu0
    %s2899 = scalar_lea.vmem %s8, 32
    %v2900 = vld [vmem:[%s2899] sm:$0xff]
    %v2901 = vld [vmem:[%s2899 + $0x8] sm:$0xff]
    %s2902 = scalar_lea.vmem %s5, 96
    %v2903 = vld [vmem:[%s2902] sm:$0xff]
    %v2904 = vld [vmem:[%s2902 + $0x8] sm:$0xff]
    %v2905 = vld [vmem:[%s2902 + $0x10] sm:$0xff]
    %v2906 = vld [vmem:[%s2902 + $0x18] sm:$0xff]
    %2907 = vmatprep.subr.mxu0 0.0
    %2908 = vmatpush1.msra.mxu0 0.0
    %2909 = vmatprep.subr.mxu0 0.0
    %2910 = vmatpush1.msra.mxu0 0.0
    %2911 = vmatprep.subr.mxu0 0.0
    %2912 = vmatpush1.msra.mxu0 0.0
    %2913 = vmatprep.subr.mxu0 0.0
    %2914 = vmatpush1.msra.mxu0 0.0
    %2915 = vmatprep.subr.mxu0 0.0
    %2916 = vmatpush1.msra.mxu0 0.0
    %2917 = vmatprep.subr.mxu0 0.0
    %2918 = vmatpush1.msra.mxu0 0.0
    %2919 = vmatprep.subr.mxu0 0.0
    %2920 = vmatpush1.msra.mxu0 0.0
    %2921 = vmatprep.subr.mxu0 0.0
    %2922 = vmatpush1.msra.mxu0 0.0
    %2923 = vmatprep.subr.mxu0 0.0
    %2924 = vmatpush1.msra.mxu0 0.0
    %2925 = vmatprep.subr.mxu0 0.0
    %2926 = vmatpush1.msra.mxu0 0.0
    %2927 = vmatprep.subr.mxu0 0.0
    %2928 = vmatpush1.msra.mxu0 0.0
    %2929 = vmatprep.subr.mxu0 0.0
    %2930 = vmatpush1.msra.mxu0 0.0
    %2931 = vmatprep.subr.mxu0 0.0
    %2932 = vmatpush1.msra.mxu0 %v2906
    %2933 = vmatprep.subr.mxu0 0.0
    %2934 = vmatpush1.msra.mxu0 %v2905
    %2935 = vmatprep.subr.mxu0 0.0
    %2936 = vmatpush1.msra.mxu0 %v2904
    %2937 = vmatprep.subr.mxu0 0.0
    %2938 = vmatpush1.msra.mxu0 %v2903
    %2939 = vmatprep.subr.mxu0 0.0
    %2940 = vmatpush2.msra.mxu0 0.0
    %2941 = vmatprep.subr.mxu0 0.0
    %2942 = vmatpush2.msra.mxu0 0.0
    %2943 = vmatprep.subr.mxu0 0.0
    %2944 = vmatpush2.msra.mxu0 0.0
    %2945 = vmatprep.subr.mxu0 0.0
    %2946 = vmatpush2.msra.mxu0 0.0
    %2947 = vmatprep.subr.mxu0 0.0
    %2948 = vmatpush2.msra.mxu0 0.0
    %2949 = vmatprep.subr.mxu0 0.0
    %2950 = vmatpush2.msra.mxu0 0.0
    %2951 = vmatprep.subr.mxu0 0.0
    %2952 = vmatpush2.msra.mxu0 0.0
    %2953 = vmatprep.subr.mxu0 0.0
    %2954 = vmatpush2.msra.mxu0 0.0
    %2955 = vmatprep.subr.mxu0 0.0
    %2956 = vmatpush2.msra.mxu0 0.0
    %2957 = vmatprep.subr.mxu0 0.0
    %2958 = vmatpush2.msra.mxu0 0.0
    %2959 = vmatprep.subr.mxu0 0.0
    %2960 = vmatpush2.msra.mxu0 0.0
    %2961 = vmatprep.subr.mxu0 0.0
    %2962 = vmatpush2.msra.mxu0 0.0
    %2963 = vmatprep.subr.mxu0 0.0
    %2964 = vmatpush2.msra.mxu0 0.0
    %2965 = vmatprep.subr.mxu0 0.0
    %2966 = vmatpush2.msra.mxu0 0.0
    %2967 = vmatprep.subr.mxu0 0.0
    %2968 = vmatpush2.msra.mxu0 0.0
    %2969 = vmatprep.subr.mxu0 0.0
    %2970 = vmatpush2.msra.mxu0 0.0
    %2971 = vmatprep.mubr.f32.mxu0 0.0
    %2972 = vmatmul.mubr.f32.gmra.mxu0 %v2239
    %v2973 = vpop.f32.mrf.mxu0
    %v2974 = vadd.f32 0.0, %v2973
    %v2975 = vpop.f32.mrf.mxu0
    %2976 = vmatprep.mubr.f32.mxu0 0.0
    %2977 = vmatmul.mubr.f32.gmra.mxu0 %v2242
    %v2978 = vpop.f32.mrf.mxu0
    %v2979 = vadd.f32 0.0, %v2978
    %v2980 = vpop.f32.mrf.mxu0
    %2981 = vmatprep.mubr.f32.mxu0 0.0
    %2982 = vmatmul.mubr.f32.gmra.mxu0 %v2245
    %v2983 = vpop.f32.mrf.mxu0
    %v2984 = vadd.f32 0.0, %v2983
    %v2985 = vpop.f32.mrf.mxu0
    %2986 = vmatprep.mubr.f32.mxu0 0.0
    %2987 = vmatmul.mubr.f32.gmra.mxu0 %v2248
    %v2988 = vpop.f32.mrf.mxu0
    %v2989 = vadd.f32 0.0, %v2988
    %v2990 = vpop.f32.mrf.mxu0
    %2991 = vdwg.mxu0
    %v2992 = vmul.f32 %v2974, 0.25
    %v2993 = vmul.f32 %v2979, 0.25
    %v2994 = vmul.f32 %v2984, 0.25
    %v2995 = vmul.f32 %v2989, 0.25
    %s2996 = scalar_lea.vmem %s6, 96
    %v2997 = vld [vmem:[%s2996] sm:$0xff]
    %v2998 = vld [vmem:[%s2996 + $0x8] sm:$0xff]
    %v2999 = vld [vmem:[%s2996 + $0x10] sm:$0xff]
    %v3000 = vld [vmem:[%s2996 + $0x18] sm:$0xff]
    %3001 = vmatprep.subr.mxu0 0.0
    %3002 = vmatpush1.msra.mxu0 0.0
    %3003 = vmatprep.subr.mxu0 0.0
    %3004 = vmatpush1.msra.mxu0 0.0
    %3005 = vmatprep.subr.mxu0 0.0
    %3006 = vmatpush1.msra.mxu0 0.0
    %3007 = vmatprep.subr.mxu0 0.0
    %3008 = vmatpush1.msra.mxu0 0.0
    %3009 = vmatprep.subr.mxu0 0.0
    %3010 = vmatpush1.msra.mxu0 0.0
    %3011 = vmatprep.subr.mxu0 0.0
    %3012 = vmatpush1.msra.mxu0 0.0
    %3013 = vmatprep.subr.mxu0 0.0
    %3014 = vmatpush1.msra.mxu0 0.0
    %3015 = vmatprep.subr.mxu0 0.0
    %3016 = vmatpush1.msra.mxu0 0.0
    %3017 = vmatprep.subr.mxu0 0.0
    %3018 = vmatpush1.msra.mxu0 0.0
    %3019 = vmatprep.subr.mxu0 0.0
    %3020 = vmatpush1.msra.mxu0 0.0
    %3021 = vmatprep.subr.mxu0 0.0
    %3022 = vmatpush1.msra.mxu0 0.0
    %3023 = vmatprep.subr.mxu0 0.0
    %3024 = vmatpush1.msra.mxu0 0.0
    %3025 = vmatprep.subr.mxu0 0.0
    %3026 = vmatpush1.msra.mxu0 %v3000
    %3027 = vmatprep.subr.mxu0 0.0
    %3028 = vmatpush1.msra.mxu0 %v2999
    %3029 = vmatprep.subr.mxu0 0.0
    %3030 = vmatpush1.msra.mxu0 %v2998
    %3031 = vmatprep.subr.mxu0 0.0
    %3032 = vmatpush1.msra.mxu0 %v2997
    %3033 = vmatprep.subr.mxu0 0.0
    %3034 = vmatpush2.msra.mxu0 0.0
    %3035 = vmatprep.subr.mxu0 0.0
    %3036 = vmatpush2.msra.mxu0 0.0
    %3037 = vmatprep.subr.mxu0 0.0
    %3038 = vmatpush2.msra.mxu0 0.0
    %3039 = vmatprep.subr.mxu0 0.0
    %3040 = vmatpush2.msra.mxu0 0.0
    %3041 = vmatprep.subr.mxu0 0.0
    %3042 = vmatpush2.msra.mxu0 0.0
    %3043 = vmatprep.subr.mxu0 0.0
    %3044 = vmatpush2.msra.mxu0 0.0
    %3045 = vmatprep.subr.mxu0 0.0
    %3046 = vmatpush2.msra.mxu0 0.0
    %3047 = vmatprep.subr.mxu0 0.0
    %3048 = vmatpush2.msra.mxu0 0.0
    %3049 = vmatprep.subr.mxu0 0.0
    %3050 = vmatpush2.msra.mxu0 0.0
    %3051 = vmatprep.subr.mxu0 0.0
    %3052 = vmatpush2.msra.mxu0 0.0
    %3053 = vmatprep.subr.mxu0 0.0
    %3054 = vmatpush2.msra.mxu0 0.0
    %3055 = vmatprep.subr.mxu0 0.0
    %3056 = vmatpush2.msra.mxu0 0.0
    %3057 = vmatprep.subr.mxu0 0.0
    %3058 = vmatpush2.msra.mxu0 0.0
    %3059 = vmatprep.subr.mxu0 0.0
    %3060 = vmatpush2.msra.mxu0 0.0
    %3061 = vmatprep.subr.mxu0 0.0
    %3062 = vmatpush2.msra.mxu0 0.0
    %3063 = vmatprep.subr.mxu0 0.0
    %3064 = vmatpush2.msra.mxu0 0.0
    %3065 = vmatprep.mubr.f32.mxu0 0.0
    %3066 = vmatmul.mubr.f32.gmra.mxu0 %v2239
    %v3067 = vpop.f32.mrf.mxu0
    %v3068 = vadd.f32 0.0, %v3067
    %v3069 = vpop.f32.mrf.mxu0
    %3070 = vmatprep.mubr.f32.mxu0 0.0
    %3071 = vmatmul.mubr.f32.gmra.mxu0 %v2242
    %v3072 = vpop.f32.mrf.mxu0
    %v3073 = vadd.f32 0.0, %v3072
    %v3074 = vpop.f32.mrf.mxu0
    %3075 = vmatprep.mubr.f32.mxu0 0.0
    %3076 = vmatmul.mubr.f32.gmra.mxu0 %v2245
    %v3077 = vpop.f32.mrf.mxu0
    %v3078 = vadd.f32 0.0, %v3077
    %v3079 = vpop.f32.mrf.mxu0
    %3080 = vmatprep.mubr.f32.mxu0 0.0
    %3081 = vmatmul.mubr.f32.gmra.mxu0 %v2248
    %v3082 = vpop.f32.mrf.mxu0
    %v3083 = vadd.f32 0.0, %v3082
    %v3084 = vpop.f32.mrf.mxu0
    %3085 = vdwg.mxu0
    %s3086 = scalar_lea.vmem %s7, 96
    %v3087 = vld [vmem:[%s3086] sm:$0xff]
    %v3088 = vld [vmem:[%s3086 + $0x8] sm:$0xff]
    %v3089 = vld [vmem:[%s3086 + $0x10] sm:$0xff]
    %v3090 = vld [vmem:[%s3086 + $0x18] sm:$0xff]
    %3091 = vmatprep.subr.mxu0 0.0
    %3092 = vmatpush1.msra.mxu0 0.0
    %3093 = vmatprep.subr.mxu0 0.0
    %3094 = vmatpush1.msra.mxu0 0.0
    %3095 = vmatprep.subr.mxu0 0.0
    %3096 = vmatpush1.msra.mxu0 0.0
    %3097 = vmatprep.subr.mxu0 0.0
    %3098 = vmatpush1.msra.mxu0 0.0
    %3099 = vmatprep.subr.mxu0 0.0
    %3100 = vmatpush1.msra.mxu0 0.0
    %3101 = vmatprep.subr.mxu0 0.0
    %3102 = vmatpush1.msra.mxu0 0.0
    %3103 = vmatprep.subr.mxu0 0.0
    %3104 = vmatpush1.msra.mxu0 0.0
    %3105 = vmatprep.subr.mxu0 0.0
    %3106 = vmatpush1.msra.mxu0 0.0
    %3107 = vmatprep.subr.mxu0 0.0
    %3108 = vmatpush1.msra.mxu0 0.0
    %3109 = vmatprep.subr.mxu0 0.0
    %3110 = vmatpush1.msra.mxu0 0.0
    %3111 = vmatprep.subr.mxu0 0.0
    %3112 = vmatpush1.msra.mxu0 0.0
    %3113 = vmatprep.subr.mxu0 0.0
    %3114 = vmatpush1.msra.mxu0 0.0
    %3115 = vmatprep.subr.mxu0 0.0
    %3116 = vmatpush1.msra.mxu0 %v3090
    %3117 = vmatprep.subr.mxu0 0.0
    %3118 = vmatpush1.msra.mxu0 %v3089
    %3119 = vmatprep.subr.mxu0 0.0
    %3120 = vmatpush1.msra.mxu0 %v3088
    %3121 = vmatprep.subr.mxu0 0.0
    %3122 = vmatpush1.msra.mxu0 %v3087
    %3123 = vmatprep.subr.mxu0 0.0
    %3124 = vmatpush2.msra.mxu0 0.0
    %3125 = vmatprep.subr.mxu0 0.0
    %3126 = vmatpush2.msra.mxu0 0.0
    %3127 = vmatprep.subr.mxu0 0.0
    %3128 = vmatpush2.msra.mxu0 0.0
    %3129 = vmatprep.subr.mxu0 0.0
    %3130 = vmatpush2.msra.mxu0 0.0
    %3131 = vmatprep.subr.mxu0 0.0
    %3132 = vmatpush2.msra.mxu0 0.0
    %3133 = vmatprep.subr.mxu0 0.0
    %3134 = vmatpush2.msra.mxu0 0.0
    %3135 = vmatprep.subr.mxu0 0.0
    %3136 = vmatpush2.msra.mxu0 0.0
    %3137 = vmatprep.subr.mxu0 0.0
    %3138 = vmatpush2.msra.mxu0 0.0
    %3139 = vmatprep.subr.mxu0 0.0
    %3140 = vmatpush2.msra.mxu0 0.0
    %3141 = vmatprep.subr.mxu0 0.0
    %3142 = vmatpush2.msra.mxu0 0.0
    %3143 = vmatprep.subr.mxu0 0.0
    %3144 = vmatpush2.msra.mxu0 0.0
    %3145 = vmatprep.subr.mxu0 0.0
    %3146 = vmatpush2.msra.mxu0 0.0
    %3147 = vmatprep.subr.mxu0 0.0
    %3148 = vmatpush2.msra.mxu0 0.0
    %3149 = vmatprep.subr.mxu0 0.0
    %3150 = vmatpush2.msra.mxu0 0.0
    %3151 = vmatprep.subr.mxu0 0.0
    %3152 = vmatpush2.msra.mxu0 0.0
    %3153 = vmatprep.subr.mxu0 0.0
    %3154 = vmatpush2.msra.mxu0 0.0
    %3155 = vmatprep.mubr.f32.mxu0 0.0
    %3156 = vmatmul.mubr.f32.gmra.mxu0 %v2239
    %v3157 = vpop.f32.mrf.mxu0
    %v3158 = vadd.f32 0.0, %v3157
    %v3159 = vpop.f32.mrf.mxu0
    %3160 = vmatprep.mubr.f32.mxu0 0.0
    %3161 = vmatmul.mubr.f32.gmra.mxu0 %v2242
    %v3162 = vpop.f32.mrf.mxu0
    %v3163 = vadd.f32 0.0, %v3162
    %v3164 = vpop.f32.mrf.mxu0
    %3165 = vmatprep.mubr.f32.mxu0 0.0
    %3166 = vmatmul.mubr.f32.gmra.mxu0 %v2245
    %v3167 = vpop.f32.mrf.mxu0
    %v3168 = vadd.f32 0.0, %v3167
    %v3169 = vpop.f32.mrf.mxu0
    %3170 = vmatprep.mubr.f32.mxu0 0.0
    %3171 = vmatmul.mubr.f32.gmra.mxu0 %v2248
    %v3172 = vpop.f32.mrf.mxu0
    %v3173 = vadd.f32 0.0, %v3172
    %v3174 = vpop.f32.mrf.mxu0
    %3175 = vdwg.mxu0
    %v3177 = vsel %vm603, %v2992, 0
    %v3180 = vsel %vm603, %v2993, 0
    %v3183 = vsel %vm603, %v3068, 0
    %v3186 = vsel %vm603, %v3073, 0
    %3188 = vmatprep.subr.mxu0 0.0
    %3189 = vmatpush1.xpose.msra.mxu0 0.0
    %3190 = vmatprep.subr.mxu0 0.0
    %3191 = vmatpush1.xpose.msra.mxu0 0.0
    %3192 = vmatprep.subr.mxu0 0.0
    %3193 = vmatpush1.xpose.msra.mxu0 0.0
    %3194 = vmatprep.subr.mxu0 0.0
    %3195 = vmatpush1.xpose.msra.mxu0 0.0
    %3196 = vmatprep.subr.mxu0 0.0
    %3197 = vmatpush1.xpose.msra.mxu0 0.0
    %3198 = vmatprep.subr.mxu0 0.0
    %3199 = vmatpush1.xpose.msra.mxu0 0.0
    %3200 = vmatprep.subr.mxu0 0.0
    %3201 = vmatpush1.xpose.msra.mxu0 0.0
    %3202 = vmatprep.subr.mxu0 0.0
    %3203 = vmatpush1.xpose.msra.mxu0 0.0
    %3204 = vmatprep.subr.mxu0 0.0
    %3205 = vmatpush1.xpose.msra.mxu0 0.0
    %3206 = vmatprep.subr.mxu0 0.0
    %3207 = vmatpush1.xpose.msra.mxu0 0.0
    %3208 = vmatprep.subr.mxu0 0.0
    %3209 = vmatpush1.xpose.msra.mxu0 0.0
    %3210 = vmatprep.subr.mxu0 0.0
    %3211 = vmatpush1.xpose.msra.mxu0 0.0
    %3212 = vmatprep.subr.mxu0 0.0
    %3213 = vmatpush1.xpose.msra.mxu0 0.0
    %3214 = vmatprep.subr.mxu0 0.0
    %3215 = vmatpush1.xpose.msra.mxu0 0.0
    %3216 = vmatprep.subr.mxu0 0.0
    %3217 = vmatpush1.xpose.msra.mxu0 %v3186
    %3218 = vmatprep.subr.mxu0 0.0
    %3219 = vmatpush1.xpose.msra.mxu0 %v3183
    %3220 = vmatprep.subr.mxu0 0.0
    %3221 = vmatpush2.xpose.msra.mxu0 0.0
    %3222 = vmatprep.subr.mxu0 0.0
    %3223 = vmatpush2.xpose.msra.mxu0 0.0
    %3224 = vmatprep.subr.mxu0 0.0
    %3225 = vmatpush2.xpose.msra.mxu0 0.0
    %3226 = vmatprep.subr.mxu0 0.0
    %3227 = vmatpush2.xpose.msra.mxu0 0.0
    %3228 = vmatprep.subr.mxu0 0.0
    %3229 = vmatpush2.xpose.msra.mxu0 0.0
    %3230 = vmatprep.subr.mxu0 0.0
    %3231 = vmatpush2.xpose.msra.mxu0 0.0
    %3232 = vmatprep.subr.mxu0 0.0
    %3233 = vmatpush2.xpose.msra.mxu0 0.0
    %3234 = vmatprep.subr.mxu0 0.0
    %3235 = vmatpush2.xpose.msra.mxu0 0.0
    %3236 = vmatprep.subr.mxu0 0.0
    %3237 = vmatpush2.xpose.msra.mxu0 0.0
    %3238 = vmatprep.subr.mxu0 0.0
    %3239 = vmatpush2.xpose.msra.mxu0 0.0
    %3240 = vmatprep.subr.mxu0 0.0
    %3241 = vmatpush2.xpose.msra.mxu0 0.0
    %3242 = vmatprep.subr.mxu0 0.0
    %3243 = vmatpush2.xpose.msra.mxu0 0.0
    %3244 = vmatprep.subr.mxu0 0.0
    %3245 = vmatpush2.xpose.msra.mxu0 0.0
    %3246 = vmatprep.subr.mxu0 0.0
    %3247 = vmatpush2.xpose.msra.mxu0 0.0
    %3248 = vmatprep.subr.mxu0 0.0
    %3249 = vmatpush2.xpose.msra.mxu0 0.0
    %3250 = vmatprep.subr.mxu0 0.0
    %3251 = vmatpush2.xpose.msra.mxu0 0.0
    %3252 = vmatprep.mubr.f32.mxu0 0.0
    %3253 = vmatmul.mubr.f32.gmra.mxu0 %v3177
    %v3254 = vpop.f32.mrf.mxu0
    %v3255 = vadd.f32 0.0, %v3254
    %v3256 = vpop.f32.mrf.mxu0
    %3257 = vmatprep.mubr.f32.mxu0 0.0
    %3258 = vmatmul.mubr.f32.gmra.mxu0 %v3180
    %v3259 = vpop.f32.mrf.mxu0
    %v3260 = vadd.f32 0.0, %v3259
    %v3261 = vpop.f32.mrf.mxu0
    %3262 = vdwg.mxu0
    %v3264 = vsel %vm603, %v2994, 0
    %v3267 = vsel %vm603, %v2995, 0
    %v3270 = vsel %vm603, %v3078, 0
    %v3273 = vsel %vm603, %v3083, 0
    %3275 = vmatprep.subr.mxu0 0.0
    %3276 = vmatpush1.xpose.msra.mxu0 0.0
    %3277 = vmatprep.subr.mxu0 0.0
    %3278 = vmatpush1.xpose.msra.mxu0 0.0
    %3279 = vmatprep.subr.mxu0 0.0
    %3280 = vmatpush1.xpose.msra.mxu0 0.0
    %3281 = vmatprep.subr.mxu0 0.0
    %3282 = vmatpush1.xpose.msra.mxu0 0.0
    %3283 = vmatprep.subr.mxu0 0.0
    %3284 = vmatpush1.xpose.msra.mxu0 0.0
    %3285 = vmatprep.subr.mxu0 0.0
    %3286 = vmatpush1.xpose.msra.mxu0 0.0
    %3287 = vmatprep.subr.mxu0 0.0
    %3288 = vmatpush1.xpose.msra.mxu0 0.0
    %3289 = vmatprep.subr.mxu0 0.0
    %3290 = vmatpush1.xpose.msra.mxu0 0.0
    %3291 = vmatprep.subr.mxu0 0.0
    %3292 = vmatpush1.xpose.msra.mxu0 0.0
    %3293 = vmatprep.subr.mxu0 0.0
    %3294 = vmatpush1.xpose.msra.mxu0 0.0
    %3295 = vmatprep.subr.mxu0 0.0
    %3296 = vmatpush1.xpose.msra.mxu0 0.0
    %3297 = vmatprep.subr.mxu0 0.0
    %3298 = vmatpush1.xpose.msra.mxu0 0.0
    %3299 = vmatprep.subr.mxu0 0.0
    %3300 = vmatpush1.xpose.msra.mxu0 0.0
    %3301 = vmatprep.subr.mxu0 0.0
    %3302 = vmatpush1.xpose.msra.mxu0 0.0
    %3303 = vmatprep.subr.mxu0 0.0
    %3304 = vmatpush1.xpose.msra.mxu0 %v3273
    %3305 = vmatprep.subr.mxu0 0.0
    %3306 = vmatpush1.xpose.msra.mxu0 %v3270
    %3307 = vmatprep.subr.mxu0 0.0
    %3308 = vmatpush2.xpose.msra.mxu0 0.0
    %3309 = vmatprep.subr.mxu0 0.0
    %3310 = vmatpush2.xpose.msra.mxu0 0.0
    %3311 = vmatprep.subr.mxu0 0.0
    %3312 = vmatpush2.xpose.msra.mxu0 0.0
    %3313 = vmatprep.subr.mxu0 0.0
    %3314 = vmatpush2.xpose.msra.mxu0 0.0
    %3315 = vmatprep.subr.mxu0 0.0
    %3316 = vmatpush2.xpose.msra.mxu0 0.0
    %3317 = vmatprep.subr.mxu0 0.0
    %3318 = vmatpush2.xpose.msra.mxu0 0.0
    %3319 = vmatprep.subr.mxu0 0.0
    %3320 = vmatpush2.xpose.msra.mxu0 0.0
    %3321 = vmatprep.subr.mxu0 0.0
    %3322 = vmatpush2.xpose.msra.mxu0 0.0
    %3323 = vmatprep.subr.mxu0 0.0
    %3324 = vmatpush2.xpose.msra.mxu0 0.0
    %3325 = vmatprep.subr.mxu0 0.0
    %3326 = vmatpush2.xpose.msra.mxu0 0.0
    %3327 = vmatprep.subr.mxu0 0.0
    %3328 = vmatpush2.xpose.msra.mxu0 0.0
    %3329 = vmatprep.subr.mxu0 0.0
    %3330 = vmatpush2.xpose.msra.mxu0 0.0
    %3331 = vmatprep.subr.mxu0 0.0
    %3332 = vmatpush2.xpose.msra.mxu0 0.0
    %3333 = vmatprep.subr.mxu0 0.0
    %3334 = vmatpush2.xpose.msra.mxu0 0.0
    %3335 = vmatprep.subr.mxu0 0.0
    %3336 = vmatpush2.xpose.msra.mxu0 0.0
    %3337 = vmatprep.subr.mxu0 0.0
    %3338 = vmatpush2.xpose.msra.mxu0 0.0
    %3339 = vmatprep.mubr.f32.mxu0 0.0
    %3340 = vmatmul.mubr.f32.gmra.mxu0 %v3264
    %v3341 = vpop.f32.mrf.mxu0
    %v3342 = vadd.f32 0.0, %v3341
    %v3343 = vpop.f32.mrf.mxu0
    %3344 = vmatprep.mubr.f32.mxu0 0.0
    %3345 = vmatmul.mubr.f32.gmra.mxu0 %v3267
    %v3346 = vpop.f32.mrf.mxu0
    %v3347 = vadd.f32 0.0, %v3346
    %v3348 = vpop.f32.mrf.mxu0
    %3349 = vdwg.mxu0
    %v3350 = vsel %vm603, %v3255, -inf
    %3351 = vmax.xlane.f32.xlu0 %v3350
    %v3352 = vpop.xlane.xlu0 %3351
    %v3353 = vsel %vm603, %v3260, -inf
    %3354 = vmax.xlane.f32.xlu0 %v3353
    %v3355 = vpop.xlane.xlu0 %3354
    %v3356 = vsel %vm603, %v3342, -inf
    %3357 = vmax.xlane.f32.xlu0 %v3356
    %v3358 = vpop.xlane.xlu0 %3357
    %v3359 = vsel %vm603, %v3347, -inf
    %3360 = vmax.xlane.f32.xlu0 %v3359
    %v3361 = vpop.xlane.xlu0 %3360
    %v3362 = vsub.f32 %v3255, %v3352
    %v3363 = vsub.f32 %v3260, %v3355
    %v3364 = vsub.f32 %v3342, %v3358
    %v3365 = vsub.f32 %v3347, %v3361
    %v3366 = vmul.f32 %v3362, 1.442695
    %v3367 = vpow.pop %v3366
    %v3368 = vmul.f32 %v3363, 1.442695
    %v3369 = vpow.pop %v3368
    %v3370 = vmul.f32 %v3364, 1.442695
    %v3371 = vpow.pop %v3370
    %v3372 = vmul.f32 %v3365, 1.442695
    %v3373 = vpow.pop %v3372
    %v3374 = vsel %vm603, %v3367, 0.0
    %3375 = vadd.xlane.f32.xlu0 %v3374
    %v3376 = vpop.xlane.xlu0 %3375
    %v3377 = vsel %vm603, %v3369, 0.0
    %3378 = vadd.xlane.f32.xlu0 %v3377
    %v3379 = vpop.xlane.xlu0 %3378
    %v3380 = vsel %vm603, %v3371, 0.0
    %3381 = vadd.xlane.f32.xlu0 %v3380
    %v3382 = vpop.xlane.xlu0 %3381
    %v3383 = vsel %vm603, %v3373, 0.0
    %3384 = vadd.xlane.f32.xlu0 %v3383
    %v3385 = vpop.xlane.xlu0 %3384
    %v3386 = vrcp.pop %v3376
    %v3387 = vrcp.pop %v3379
    %v3388 = vrcp.pop %v3382
    %v3389 = vrcp.pop %v3385
    %v3390 = vmul.f32 %v3367, %v3386
    %v3391 = vmul.f32 %v3369, %v3387
    %v3392 = vmul.f32 %v3371, %v3388
    %v3393 = vmul.f32 %v3373, %v3389
    %v3395 = vsel %vm603, %v3390, 0
    %v3398 = vsel %vm603, %v3391, 0
    %3400 = vmatprep.subr.mxu0 0.0
    %3401 = vmatpush1.msra.mxu0 0.0
    %3402 = vmatprep.subr.mxu0 0.0
    %3403 = vmatpush1.msra.mxu0 0.0
    %3404 = vmatprep.subr.mxu0 0.0
    %3405 = vmatpush1.msra.mxu0 0.0
    %3406 = vmatprep.subr.mxu0 0.0
    %3407 = vmatpush1.msra.mxu0 0.0
    %3408 = vmatprep.subr.mxu0 0.0
    %3409 = vmatpush1.msra.mxu0 0.0
    %3410 = vmatprep.subr.mxu0 0.0
    %3411 = vmatpush1.msra.mxu0 0.0
    %3412 = vmatprep.subr.mxu0 0.0
    %3413 = vmatpush1.msra.mxu0 0.0
    %3414 = vmatprep.subr.mxu0 0.0
    %3415 = vmatpush1.msra.mxu0 0.0
    %3416 = vmatprep.subr.mxu0 0.0
    %3417 = vmatpush1.msra.mxu0 0.0
    %3418 = vmatprep.subr.mxu0 0.0
    %3419 = vmatpush1.msra.mxu0 0.0
    %3420 = vmatprep.subr.mxu0 0.0
    %3421 = vmatpush1.msra.mxu0 0.0
    %3422 = vmatprep.subr.mxu0 0.0
    %3423 = vmatpush1.msra.mxu0 0.0
    %3424 = vmatprep.subr.mxu0 0.0
    %3425 = vmatpush1.msra.mxu0 0.0
    %3426 = vmatprep.subr.mxu0 0.0
    %3427 = vmatpush1.msra.mxu0 0.0
    %3428 = vmatprep.subr.mxu0 0.0
    %3429 = vmatpush1.msra.mxu0 %v3163
    %3430 = vmatprep.subr.mxu0 0.0
    %3431 = vmatpush1.msra.mxu0 %v3158
    %3432 = vmatprep.subr.mxu0 0.0
    %3433 = vmatpush2.msra.mxu0 0.0
    %3434 = vmatprep.subr.mxu0 0.0
    %3435 = vmatpush2.msra.mxu0 0.0
    %3436 = vmatprep.subr.mxu0 0.0
    %3437 = vmatpush2.msra.mxu0 0.0
    %3438 = vmatprep.subr.mxu0 0.0
    %3439 = vmatpush2.msra.mxu0 0.0
    %3440 = vmatprep.subr.mxu0 0.0
    %3441 = vmatpush2.msra.mxu0 0.0
    %3442 = vmatprep.subr.mxu0 0.0
    %3443 = vmatpush2.msra.mxu0 0.0
    %3444 = vmatprep.subr.mxu0 0.0
    %3445 = vmatpush2.msra.mxu0 0.0
    %3446 = vmatprep.subr.mxu0 0.0
    %3447 = vmatpush2.msra.mxu0 0.0
    %3448 = vmatprep.subr.mxu0 0.0
    %3449 = vmatpush2.msra.mxu0 0.0
    %3450 = vmatprep.subr.mxu0 0.0
    %3451 = vmatpush2.msra.mxu0 0.0
    %3452 = vmatprep.subr.mxu0 0.0
    %3453 = vmatpush2.msra.mxu0 0.0
    %3454 = vmatprep.subr.mxu0 0.0
    %3455 = vmatpush2.msra.mxu0 0.0
    %3456 = vmatprep.subr.mxu0 0.0
    %3457 = vmatpush2.msra.mxu0 0.0
    %3458 = vmatprep.subr.mxu0 0.0
    %3459 = vmatpush2.msra.mxu0 0.0
    %3460 = vmatprep.subr.mxu0 0.0
    %3461 = vmatpush2.msra.mxu0 0.0
    %3462 = vmatprep.subr.mxu0 0.0
    %3463 = vmatpush2.msra.mxu0 0.0
    %3464 = vmatprep.mubr.f32.mxu0 0.0
    %3465 = vmatmul.mubr.f32.gmra.mxu0 %v3395
    %v3466 = vpop.f32.mrf.mxu0
    %v3467 = vadd.f32 0.0, %v3466
    %v3468 = vpop.f32.mrf.mxu0
    %3469 = vmatprep.mubr.f32.mxu0 0.0
    %3470 = vmatmul.mubr.f32.gmra.mxu0 %v3398
    %v3471 = vpop.f32.mrf.mxu0
    %v3472 = vadd.f32 0.0, %v3471
    %v3473 = vpop.f32.mrf.mxu0
    %3474 = vdwg.mxu0
    %v3476 = vsel %vm603, %v3392, 0
    %v3479 = vsel %vm603, %v3393, 0
    %3481 = vmatprep.subr.mxu0 0.0
    %3482 = vmatpush1.msra.mxu0 0.0
    %3483 = vmatprep.subr.mxu0 0.0
    %3484 = vmatpush1.msra.mxu0 0.0
    %3485 = vmatprep.subr.mxu0 0.0
    %3486 = vmatpush1.msra.mxu0 0.0
    %3487 = vmatprep.subr.mxu0 0.0
    %3488 = vmatpush1.msra.mxu0 0.0
    %3489 = vmatprep.subr.mxu0 0.0
    %3490 = vmatpush1.msra.mxu0 0.0
    %3491 = vmatprep.subr.mxu0 0.0
    %3492 = vmatpush1.msra.mxu0 0.0
    %3493 = vmatprep.subr.mxu0 0.0
    %3494 = vmatpush1.msra.mxu0 0.0
    %3495 = vmatprep.subr.mxu0 0.0
    %3496 = vmatpush1.msra.mxu0 0.0
    %3497 = vmatprep.subr.mxu0 0.0
    %3498 = vmatpush1.msra.mxu0 0.0
    %3499 = vmatprep.subr.mxu0 0.0
    %3500 = vmatpush1.msra.mxu0 0.0
    %3501 = vmatprep.subr.mxu0 0.0
    %3502 = vmatpush1.msra.mxu0 0.0
    %3503 = vmatprep.subr.mxu0 0.0
    %3504 = vmatpush1.msra.mxu0 0.0
    %3505 = vmatprep.subr.mxu0 0.0
    %3506 = vmatpush1.msra.mxu0 0.0
    %3507 = vmatprep.subr.mxu0 0.0
    %3508 = vmatpush1.msra.mxu0 0.0
    %3509 = vmatprep.subr.mxu0 0.0
    %3510 = vmatpush1.msra.mxu0 %v3173
    %3511 = vmatprep.subr.mxu0 0.0
    %3512 = vmatpush1.msra.mxu0 %v3168
    %3513 = vmatprep.subr.mxu0 0.0
    %3514 = vmatpush2.msra.mxu0 0.0
    %3515 = vmatprep.subr.mxu0 0.0
    %3516 = vmatpush2.msra.mxu0 0.0
    %3517 = vmatprep.subr.mxu0 0.0
    %3518 = vmatpush2.msra.mxu0 0.0
    %3519 = vmatprep.subr.mxu0 0.0
    %3520 = vmatpush2.msra.mxu0 0.0
    %3521 = vmatprep.subr.mxu0 0.0
    %3522 = vmatpush2.msra.mxu0 0.0
    %3523 = vmatprep.subr.mxu0 0.0
    %3524 = vmatpush2.msra.mxu0 0.0
    %3525 = vmatprep.subr.mxu0 0.0
    %3526 = vmatpush2.msra.mxu0 0.0
    %3527 = vmatprep.subr.mxu0 0.0
    %3528 = vmatpush2.msra.mxu0 0.0
    %3529 = vmatprep.subr.mxu0 0.0
    %3530 = vmatpush2.msra.mxu0 0.0
    %3531 = vmatprep.subr.mxu0 0.0
    %3532 = vmatpush2.msra.mxu0 0.0
    %3533 = vmatprep.subr.mxu0 0.0
    %3534 = vmatpush2.msra.mxu0 0.0
    %3535 = vmatprep.subr.mxu0 0.0
    %3536 = vmatpush2.msra.mxu0 0.0
    %3537 = vmatprep.subr.mxu0 0.0
    %3538 = vmatpush2.msra.mxu0 0.0
    %3539 = vmatprep.subr.mxu0 0.0
    %3540 = vmatpush2.msra.mxu0 0.0
    %3541 = vmatprep.subr.mxu0 0.0
    %3542 = vmatpush2.msra.mxu0 0.0
    %3543 = vmatprep.subr.mxu0 0.0
    %3544 = vmatpush2.msra.mxu0 0.0
    %3545 = vmatprep.mubr.f32.mxu0 0.0
    %3546 = vmatmul.mubr.f32.gmra.mxu0 %v3476
    %v3547 = vpop.f32.mrf.mxu0
    %v3548 = vadd.f32 0.0, %v3547
    %v3549 = vpop.f32.mrf.mxu0
    %3550 = vmatprep.mubr.f32.mxu0 0.0
    %3551 = vmatmul.mubr.f32.gmra.mxu0 %v3479
    %v3552 = vpop.f32.mrf.mxu0
    %v3553 = vadd.f32 0.0, %v3552
    %v3554 = vpop.f32.mrf.mxu0
    %3555 = vdwg.mxu0
    %s3556 = scalar_lea.vmem %s8, 48
    %v3557 = vld [vmem:[%s3556] sm:$0xff]
    %v3558 = vld [vmem:[%s3556 + $0x8] sm:$0xff]
    %v3560 = vsel %vm603, %v3467, 0
    %v3563 = vsel %vm603, %v3472, 0
    %v3566 = vsel %vm603, %v3548, 0
    %v3569 = vsel %vm603, %v3553, 0
    %3571 = vmatprep.subr.mxu0 0.0
    %3572 = vmatpush1.msra.mxu0 0.0
    %3573 = vmatprep.subr.mxu0 0.0
    %3574 = vmatpush1.msra.mxu0 0.0
    %3575 = vmatprep.subr.mxu0 0.0
    %3576 = vmatpush1.msra.mxu0 0.0
    %3577 = vmatprep.subr.mxu0 0.0
    %3578 = vmatpush1.msra.mxu0 0.0
    %3579 = vmatprep.subr.mxu0 0.0
    %3580 = vmatpush1.msra.mxu0 0.0
    %3581 = vmatprep.subr.mxu0 0.0
    %3582 = vmatpush1.msra.mxu0 0.0
    %3583 = vmatprep.subr.mxu0 0.0
    %3584 = vmatpush1.msra.mxu0 0.0
    %3585 = vmatprep.subr.mxu0 0.0
    %3586 = vmatpush1.msra.mxu0 0.0
    %3587 = vmatprep.subr.mxu0 0.0
    %3588 = vmatpush1.msra.mxu0 0.0
    %3589 = vmatprep.subr.mxu0 0.0
    %3590 = vmatpush1.msra.mxu0 0.0
    %3591 = vmatprep.subr.mxu0 0.0
    %3592 = vmatpush1.msra.mxu0 0.0
    %3593 = vmatprep.subr.mxu0 0.0
    %3594 = vmatpush1.msra.mxu0 0.0
    %3595 = vmatprep.subr.mxu0 0.0
    %3596 = vmatpush1.msra.mxu0 0.0
    %3597 = vmatprep.subr.mxu0 0.0
    %3598 = vmatpush1.msra.mxu0 0.0
    %3599 = vmatprep.subr.mxu0 0.0
    %3600 = vmatpush1.msra.mxu0 %v3558
    %3601 = vmatprep.subr.mxu0 0.0
    %3602 = vmatpush1.msra.mxu0 %v3557
    %3603 = vmatprep.subr.mxu0 0.0
    %3604 = vmatpush2.msra.mxu0 0.0
    %3605 = vmatprep.subr.mxu0 0.0
    %3606 = vmatpush2.msra.mxu0 0.0
    %3607 = vmatprep.subr.mxu0 0.0
    %3608 = vmatpush2.msra.mxu0 0.0
    %3609 = vmatprep.subr.mxu0 0.0
    %3610 = vmatpush2.msra.mxu0 0.0
    %3611 = vmatprep.subr.mxu0 0.0
    %3612 = vmatpush2.msra.mxu0 0.0
    %3613 = vmatprep.subr.mxu0 0.0
    %3614 = vmatpush2.msra.mxu0 0.0
    %3615 = vmatprep.subr.mxu0 0.0
    %3616 = vmatpush2.msra.mxu0 0.0
    %3617 = vmatprep.subr.mxu0 0.0
    %3618 = vmatpush2.msra.mxu0 0.0
    %3619 = vmatprep.subr.mxu0 0.0
    %3620 = vmatpush2.msra.mxu0 0.0
    %3621 = vmatprep.subr.mxu0 0.0
    %3622 = vmatpush2.msra.mxu0 0.0
    %3623 = vmatprep.subr.mxu0 0.0
    %3624 = vmatpush2.msra.mxu0 0.0
    %3625 = vmatprep.subr.mxu0 0.0
    %3626 = vmatpush2.msra.mxu0 0.0
    %3627 = vmatprep.subr.mxu0 0.0
    %3628 = vmatpush2.msra.mxu0 0.0
    %3629 = vmatprep.subr.mxu0 0.0
    %3630 = vmatpush2.msra.mxu0 0.0
    %3631 = vmatprep.subr.mxu0 0.0
    %3632 = vmatpush2.msra.mxu0 0.0
    %3633 = vmatprep.subr.mxu0 0.0
    %3634 = vmatpush2.msra.mxu0 0.0
    %3635 = vmatprep.mubr.f32.mxu0 0.0
    %3636 = vmatmul.mubr.f32.gmra.mxu0 %v3560
    %v3637 = vpop.f32.mrf.mxu0
    %v3638 = vadd.f32 0.0, %v3637
    %v3639 = vpop.f32.mrf.mxu0
    %3640 = vmatprep.mubr.f32.mxu0 0.0
    %3641 = vmatmul.mubr.f32.gmra.mxu0 %v3563
    %v3642 = vpop.f32.mrf.mxu0
    %v3643 = vadd.f32 0.0, %v3642
    %v3644 = vpop.f32.mrf.mxu0
    %3645 = vmatprep.mubr.f32.mxu0 0.0
    %3646 = vmatmul.mubr.f32.gmra.mxu0 %v3566
    %v3647 = vpop.f32.mrf.mxu0
    %v3648 = vadd.f32 0.0, %v3647
    %v3649 = vpop.f32.mrf.mxu0
    %3650 = vmatprep.mubr.f32.mxu0 0.0
    %3651 = vmatmul.mubr.f32.gmra.mxu0 %v3569
    %v3652 = vpop.f32.mrf.mxu0
    %v3653 = vadd.f32 0.0, %v3652
    %v3654 = vpop.f32.mrf.mxu0
    %3655 = vdwg.mxu0
    %v3657 = vsel %vm603, %v2810, 0
    %v3660 = vsel %vm603, %v2815, 0
    %v3663 = vsel %vm603, %v2891, 0
    %v3666 = vsel %vm603, %v2896, 0
    %3668 = vmatprep.subr.mxu0 0.0
    %3669 = vmatpush1.msra.mxu0 0.0
    %3670 = vmatprep.subr.mxu0 0.0
    %3671 = vmatpush1.msra.mxu0 0.0
    %3672 = vmatprep.subr.mxu0 0.0
    %3673 = vmatpush1.msra.mxu0 0.0
    %3674 = vmatprep.subr.mxu0 0.0
    %3675 = vmatpush1.msra.mxu0 0.0
    %3676 = vmatprep.subr.mxu0 0.0
    %3677 = vmatpush1.msra.mxu0 0.0
    %3678 = vmatprep.subr.mxu0 0.0
    %3679 = vmatpush1.msra.mxu0 0.0
    %3680 = vmatprep.subr.mxu0 0.0
    %3681 = vmatpush1.msra.mxu0 0.0
    %3682 = vmatprep.subr.mxu0 0.0
    %3683 = vmatpush1.msra.mxu0 0.0
    %3684 = vmatprep.subr.mxu0 0.0
    %3685 = vmatpush1.msra.mxu0 0.0
    %3686 = vmatprep.subr.mxu0 0.0
    %3687 = vmatpush1.msra.mxu0 0.0
    %3688 = vmatprep.subr.mxu0 0.0
    %3689 = vmatpush1.msra.mxu0 0.0
    %3690 = vmatprep.subr.mxu0 0.0
    %3691 = vmatpush1.msra.mxu0 0.0
    %3692 = vmatprep.subr.mxu0 0.0
    %3693 = vmatpush1.msra.mxu0 0.0
    %3694 = vmatprep.subr.mxu0 0.0
    %3695 = vmatpush1.msra.mxu0 0.0
    %3696 = vmatprep.subr.mxu0 0.0
    %3697 = vmatpush1.msra.mxu0 %v2901
    %3698 = vmatprep.subr.mxu0 0.0
    %3699 = vmatpush1.msra.mxu0 %v2900
    %3700 = vmatprep.subr.mxu0 0.0
    %3701 = vmatpush2.msra.mxu0 0.0
    %3702 = vmatprep.subr.mxu0 0.0
    %3703 = vmatpush2.msra.mxu0 0.0
    %3704 = vmatprep.subr.mxu0 0.0
    %3705 = vmatpush2.msra.mxu0 0.0
    %3706 = vmatprep.subr.mxu0 0.0
    %3707 = vmatpush2.msra.mxu0 0.0
    %3708 = vmatprep.subr.mxu0 0.0
    %3709 = vmatpush2.msra.mxu0 0.0
    %3710 = vmatprep.subr.mxu0 0.0
    %3711 = vmatpush2.msra.mxu0 0.0
    %3712 = vmatprep.subr.mxu0 0.0
    %3713 = vmatpush2.msra.mxu0 0.0
    %3714 = vmatprep.subr.mxu0 0.0
    %3715 = vmatpush2.msra.mxu0 0.0
    %3716 = vmatprep.subr.mxu0 0.0
    %3717 = vmatpush2.msra.mxu0 0.0
    %3718 = vmatprep.subr.mxu0 0.0
    %3719 = vmatpush2.msra.mxu0 0.0
    %3720 = vmatprep.subr.mxu0 0.0
    %3721 = vmatpush2.msra.mxu0 0.0
    %3722 = vmatprep.subr.mxu0 0.0
    %3723 = vmatpush2.msra.mxu0 0.0
    %3724 = vmatprep.subr.mxu0 0.0
    %3725 = vmatpush2.msra.mxu0 0.0
    %3726 = vmatprep.subr.mxu0 0.0
    %3727 = vmatpush2.msra.mxu0 0.0
    %3728 = vmatprep.subr.mxu0 0.0
    %3729 = vmatpush2.msra.mxu0 0.0
    %3730 = vmatprep.subr.mxu0 0.0
    %3731 = vmatpush2.msra.mxu0 0.0
    %3732 = vmatprep.mubr.f32.mxu0 0.0
    %3733 = vmatmul.mubr.f32.gmra.mxu0 %v3657
    %v3734 = vpop.f32.mrf.mxu0
    %v3735 = vadd.f32 %v3638, %v3734
    %v3736 = vpop.f32.mrf.mxu0
    %3737 = vmatprep.mubr.f32.mxu0 0.0
    %3738 = vmatmul.mubr.f32.gmra.mxu0 %v3660
    %v3739 = vpop.f32.mrf.mxu0
    %v3740 = vadd.f32 %v3643, %v3739
    %v3741 = vpop.f32.mrf.mxu0
    %3742 = vmatprep.mubr.f32.mxu0 0.0
    %3743 = vmatmul.mubr.f32.gmra.mxu0 %v3663
    %v3744 = vpop.f32.mrf.mxu0
    %v3745 = vadd.f32 %v3648, %v3744
    %v3746 = vpop.f32.mrf.mxu0
    %3747 = vmatprep.mubr.f32.mxu0 0.0
    %3748 = vmatmul.mubr.f32.gmra.mxu0 %v3666
    %v3749 = vpop.f32.mrf.mxu0
    %v3750 = vadd.f32 %v3653, %v3749
    %v3751 = vpop.f32.mrf.mxu0
    %3752 = vdwg.mxu0
    %v3753 = vadd.f32 %v2153, %v3735
    %v3754 = vadd.f32 %v2154, %v3740
    %v3755 = vadd.f32 %v2155, %v3745
    %v3756 = vadd.f32 %v2156, %v3750
    %s3757 = scalar_lea.vmem %s13, 1
    %v3758 = vld [vmem:[%s3757] sm:$0x1]
    %s3759 = scalar_lea.vmem %s14, 1
    %v3760 = vld [vmem:[%s3759] sm:$0x1]
    %v3761 = vsel %vm246, %v3753, 0.0
    %3762 = vadd.xlane.f32.xlu0 %v3761
    %v3763 = vpop.xlane.xlu0 %3762
    %v3764 = vsel %vm246, %v3754, 0.0
    %3765 = vadd.xlane.f32.xlu0 %v3764
    %v3766 = vpop.xlane.xlu0 %3765
    %v3767 = vsel %vm246, %v3755, 0.0
    %3768 = vadd.xlane.f32.xlu0 %v3767
    %v3769 = vpop.xlane.xlu0 %3768
    %v3770 = vsel %vm246, %v3756, 0.0
    %3771 = vadd.xlane.f32.xlu0 %v3770
    %v3772 = vpop.xlane.xlu0 %3771
    %v3773 = vmul.f32 %v3763, %v259
    %v3774 = vmul.f32 %v3766, %v259
    %v3775 = vmul.f32 %v3769, %v259
    %v3776 = vmul.f32 %v3772, %v259
    %v3777 = vsub.f32 %v3753, %v3773
    %v3778 = vsub.f32 %v3754, %v3774
    %v3779 = vsub.f32 %v3755, %v3775
    %v3780 = vsub.f32 %v3756, %v3776
    %v3781 = vmul.f32 %v3777, %v3777
    %v3782 = vmul.f32 %v3778, %v3778
    %v3783 = vmul.f32 %v3779, %v3779
    %v3784 = vmul.f32 %v3780, %v3780
    %v3785 = vsel %vm246, %v3781, 0.0
    %3786 = vadd.xlane.f32.xlu0 %v3785
    %v3787 = vpop.xlane.xlu0 %3786
    %v3788 = vsel %vm246, %v3782, 0.0
    %3789 = vadd.xlane.f32.xlu0 %v3788
    %v3790 = vpop.xlane.xlu0 %3789
    %v3791 = vsel %vm246, %v3783, 0.0
    %3792 = vadd.xlane.f32.xlu0 %v3791
    %v3793 = vpop.xlane.xlu0 %3792
    %v3794 = vsel %vm246, %v3784, 0.0
    %3795 = vadd.xlane.f32.xlu0 %v3794
    %v3796 = vpop.xlane.xlu0 %3795
    %v3797 = vmul.f32 %v3787, %v259
    %v3798 = vmul.f32 %v3790, %v259
    %v3799 = vmul.f32 %v3793, %v259
    %v3800 = vmul.f32 %v3796, %v259
    %v3801 = vadd.f32 %v3797, 1e-06
    %v3802 = vadd.f32 %v3798, 1e-06
    %v3803 = vadd.f32 %v3799, 1e-06
    %v3804 = vadd.f32 %v3800, 1e-06
    %v3805 = vrsqrt.pop %v3801
    %v3806 = vrsqrt.pop %v3802
    %v3807 = vrsqrt.pop %v3803
    %v3808 = vrsqrt.pop %v3804
    %v3809 = vmul.f32 %v3777, %v3805
    %v3810 = vmul.f32 %v3778, %v3806
    %v3811 = vmul.f32 %v3779, %v3807
    %v3812 = vmul.f32 %v3780, %v3808
    %v3814 = vlaneseq
    %v3815 = vshrl.u32 %v3814, 7
    %v3816 = vsub.s32 0, %v3815
    %v3817 = vrot.slane %v3758, %v3816
    %v3819 = vmul.f32 %v3809, %v3817
    %v3820 = vmul.f32 %v3810, %v3817
    %v3821 = vmul.f32 %v3811, %v3817
    %v3822 = vmul.f32 %v3812, %v3817
    %v3824 = vlaneseq
    %v3825 = vshrl.u32 %v3824, 7
    %v3826 = vsub.s32 0, %v3825
    %v3827 = vrot.slane %v3760, %v3826
    %v3829 = vadd.f32 %v3819, %v3827
    %v3830 = vadd.f32 %v3820, %v3827
    %v3831 = vadd.f32 %v3821, %v3827
    %v3832 = vadd.f32 %v3822, %v3827
    %s3833 = scalar_lea.vmem %s9, 32
    %v3834 = vld [vmem:[%s3833] sm:$0xff]
    %v3835 = vld [vmem:[%s3833 + $0x8] sm:$0xff]
    %v3836 = vld [vmem:[%s3833 + $0x10] sm:$0xff]
    %v3837 = vld [vmem:[%s3833 + $0x18] sm:$0xff]
    %v3839 = vsel %vm246, %v3829, 0
    %v3842 = vsel %vm246, %v3830, 0
    %v3845 = vsel %vm246, %v3831, 0
    %v3848 = vsel %vm246, %v3832, 0
    %3850 = vmatprep.subr.mxu0 0.0
    %3851 = vmatpush1.msra.mxu0 0.0
    %3852 = vmatprep.subr.mxu0 0.0
    %3853 = vmatpush1.msra.mxu0 0.0
    %3854 = vmatprep.subr.mxu0 0.0
    %3855 = vmatpush1.msra.mxu0 0.0
    %3856 = vmatprep.subr.mxu0 0.0
    %3857 = vmatpush1.msra.mxu0 0.0
    %3858 = vmatprep.subr.mxu0 0.0
    %3859 = vmatpush1.msra.mxu0 0.0
    %3860 = vmatprep.subr.mxu0 0.0
    %3861 = vmatpush1.msra.mxu0 0.0
    %3862 = vmatprep.subr.mxu0 0.0
    %3863 = vmatpush1.msra.mxu0 0.0
    %3864 = vmatprep.subr.mxu0 0.0
    %3865 = vmatpush1.msra.mxu0 0.0
    %3866 = vmatprep.subr.mxu0 0.0
    %3867 = vmatpush1.msra.mxu0 0.0
    %3868 = vmatprep.subr.mxu0 0.0
    %3869 = vmatpush1.msra.mxu0 0.0
    %3870 = vmatprep.subr.mxu0 0.0
    %3871 = vmatpush1.msra.mxu0 0.0
    %3872 = vmatprep.subr.mxu0 0.0
    %3873 = vmatpush1.msra.mxu0 0.0
    %3874 = vmatprep.subr.mxu0 0.0
    %3875 = vmatpush1.msra.mxu0 %v3837
    %3876 = vmatprep.subr.mxu0 0.0
    %3877 = vmatpush1.msra.mxu0 %v3836
    %3878 = vmatprep.subr.mxu0 0.0
    %3879 = vmatpush1.msra.mxu0 %v3835
    %3880 = vmatprep.subr.mxu0 0.0
    %3881 = vmatpush1.msra.mxu0 %v3834
    %3882 = vmatprep.subr.mxu0 0.0
    %3883 = vmatpush2.msra.mxu0 0.0
    %3884 = vmatprep.subr.mxu0 0.0
    %3885 = vmatpush2.msra.mxu0 0.0
    %3886 = vmatprep.subr.mxu0 0.0
    %3887 = vmatpush2.msra.mxu0 0.0
    %3888 = vmatprep.subr.mxu0 0.0
    %3889 = vmatpush2.msra.mxu0 0.0
    %3890 = vmatprep.subr.mxu0 0.0
    %3891 = vmatpush2.msra.mxu0 0.0
    %3892 = vmatprep.subr.mxu0 0.0
    %3893 = vmatpush2.msra.mxu0 0.0
    %3894 = vmatprep.subr.mxu0 0.0
    %3895 = vmatpush2.msra.mxu0 0.0
    %3896 = vmatprep.subr.mxu0 0.0
    %3897 = vmatpush2.msra.mxu0 0.0
    %3898 = vmatprep.subr.mxu0 0.0
    %3899 = vmatpush2.msra.mxu0 0.0
    %3900 = vmatprep.subr.mxu0 0.0
    %3901 = vmatpush2.msra.mxu0 0.0
    %3902 = vmatprep.subr.mxu0 0.0
    %3903 = vmatpush2.msra.mxu0 0.0
    %3904 = vmatprep.subr.mxu0 0.0
    %3905 = vmatpush2.msra.mxu0 0.0
    %3906 = vmatprep.subr.mxu0 0.0
    %3907 = vmatpush2.msra.mxu0 0.0
    %3908 = vmatprep.subr.mxu0 0.0
    %3909 = vmatpush2.msra.mxu0 0.0
    %3910 = vmatprep.subr.mxu0 0.0
    %3911 = vmatpush2.msra.mxu0 0.0
    %3912 = vmatprep.subr.mxu0 0.0
    %3913 = vmatpush2.msra.mxu0 0.0
    %3914 = vmatprep.mubr.f32.mxu0 0.0
    %3915 = vmatmul.mubr.f32.gmra.mxu0 %v3839
    %v3916 = vpop.f32.mrf.mxu0
    %v3917 = vadd.f32 0.0, %v3916
    %v3918 = vpop.f32.mrf.mxu0
    %3919 = vmatprep.mubr.f32.mxu0 0.0
    %3920 = vmatmul.mubr.f32.gmra.mxu0 %v3842
    %v3921 = vpop.f32.mrf.mxu0
    %v3922 = vadd.f32 0.0, %v3921
    %v3923 = vpop.f32.mrf.mxu0
    %3924 = vmatprep.mubr.f32.mxu0 0.0
    %3925 = vmatmul.mubr.f32.gmra.mxu0 %v3845
    %v3926 = vpop.f32.mrf.mxu0
    %v3927 = vadd.f32 0.0, %v3926
    %v3928 = vpop.f32.mrf.mxu0
    %3929 = vmatprep.mubr.f32.mxu0 0.0
    %3930 = vmatmul.mubr.f32.gmra.mxu0 %v3848
    %v3931 = vpop.f32.mrf.mxu0
    %v3932 = vadd.f32 0.0, %v3931
    %v3933 = vpop.f32.mrf.mxu0
    %3934 = vdwg.mxu0
    %v3935 = vmul.f32 %v3917, %v3917
    %v3936 = vmul.f32 %v3922, %v3922
    %v3937 = vmul.f32 %v3927, %v3927
    %v3938 = vmul.f32 %v3932, %v3932
    %v3939 = vmul.f32 %v3917, %v3935
    %v3940 = vmul.f32 %v3922, %v3936
    %v3941 = vmul.f32 %v3927, %v3937
    %v3942 = vmul.f32 %v3932, %v3938
    %v3943 = vmul.f32 %v3939, 0.044715
    %v3944 = vmul.f32 %v3940, 0.044715
    %v3945 = vmul.f32 %v3941, 0.044715
    %v3946 = vmul.f32 %v3942, 0.044715
    %v3947 = vadd.f32 %v3917, %v3943
    %v3948 = vadd.f32 %v3922, %v3944
    %v3949 = vadd.f32 %v3927, %v3945
    %v3950 = vadd.f32 %v3932, %v3946
    %v3951 = vmul.f32 %v3947, 0.7978846
    %v3952 = vmul.f32 %v3948, 0.7978846
    %v3953 = vmul.f32 %v3949, 0.7978846
    %v3954 = vmul.f32 %v3950, 0.7978846
    %v3955 = vtanh.pop %v3951
    %v3956 = vtanh.pop %v3952
    %v3957 = vtanh.pop %v3953
    %v3958 = vtanh.pop %v3954
    %v3959 = vadd.f32 %v3955, 1.0
    %v3960 = vadd.f32 %v3956, 1.0
    %v3961 = vadd.f32 %v3957, 1.0
    %v3962 = vadd.f32 %v3958, 1.0
    %v3963 = vmul.f32 %v3959, 0.5
    %v3964 = vmul.f32 %v3960, 0.5
    %v3965 = vmul.f32 %v3961, 0.5
    %v3966 = vmul.f32 %v3962, 0.5
    %v3967 = vmul.f32 %v3917, %v3963
    %v3968 = vmul.f32 %v3922, %v3964
    %v3969 = vmul.f32 %v3927, %v3965
    %v3970 = vmul.f32 %v3932, %v3966
    %s3971 = scalar_lea.vmem %s10, 128
    %v3972 = vld [vmem:[%s3971] sm:$0xff]
    %v3973 = vld [vmem:[%s3971 + $0x8] sm:$0xff]
    %v3974 = vld [vmem:[%s3971 + $0x10] sm:$0xff]
    %v3975 = vld [vmem:[%s3971 + $0x18] sm:$0xff]
    %v3976 = vld [vmem:[%s3971 + $0x20] sm:$0xff]
    %v3977 = vld [vmem:[%s3971 + $0x28] sm:$0xff]
    %v3978 = vld [vmem:[%s3971 + $0x30] sm:$0xff]
    %v3979 = vld [vmem:[%s3971 + $0x38] sm:$0xff]
    %v3980 = vld [vmem:[%s3971 + $0x40] sm:$0xff]
    %v3981 = vld [vmem:[%s3971 + $0x48] sm:$0xff]
    %v3982 = vld [vmem:[%s3971 + $0x50] sm:$0xff]
    %v3983 = vld [vmem:[%s3971 + $0x58] sm:$0xff]
    %v3984 = vld [vmem:[%s3971 + $0x60] sm:$0xff]
    %v3985 = vld [vmem:[%s3971 + $0x68] sm:$0xff]
    %v3986 = vld [vmem:[%s3971 + $0x70] sm:$0xff]
    %v3987 = vld [vmem:[%s3971 + $0x78] sm:$0xff]
    %3988 = vmatprep.subr.mxu0 0.0
    %3989 = vmatpush1.msra.mxu0 %v3987
    %3990 = vmatprep.subr.mxu0 0.0
    %3991 = vmatpush1.msra.mxu0 %v3986
    %3992 = vmatprep.subr.mxu0 0.0
    %3993 = vmatpush1.msra.mxu0 %v3985
    %3994 = vmatprep.subr.mxu0 0.0
    %3995 = vmatpush1.msra.mxu0 %v3984
    %3996 = vmatprep.subr.mxu0 0.0
    %3997 = vmatpush1.msra.mxu0 %v3983
    %3998 = vmatprep.subr.mxu0 0.0
    %3999 = vmatpush1.msra.mxu0 %v3982
    %4000 = vmatprep.subr.mxu0 0.0
    %4001 = vmatpush1.msra.mxu0 %v3981
    %4002 = vmatprep.subr.mxu0 0.0
    %4003 = vmatpush1.msra.mxu0 %v3980
    %4004 = vmatprep.subr.mxu0 0.0
    %4005 = vmatpush1.msra.mxu0 %v3979
    %4006 = vmatprep.subr.mxu0 0.0
    %4007 = vmatpush1.msra.mxu0 %v3978
    %4008 = vmatprep.subr.mxu0 0.0
    %4009 = vmatpush1.msra.mxu0 %v3977
    %4010 = vmatprep.subr.mxu0 0.0
    %4011 = vmatpush1.msra.mxu0 %v3976
    %4012 = vmatprep.subr.mxu0 0.0
    %4013 = vmatpush1.msra.mxu0 %v3975
    %4014 = vmatprep.subr.mxu0 0.0
    %4015 = vmatpush1.msra.mxu0 %v3974
    %4016 = vmatprep.subr.mxu0 0.0
    %4017 = vmatpush1.msra.mxu0 %v3973
    %4018 = vmatprep.subr.mxu0 0.0
    %4019 = vmatpush1.msra.mxu0 %v3972
    %4020 = vmatprep.subr.mxu0 0.0
    %4021 = vmatpush2.msra.mxu0 0.0
    %4022 = vmatprep.subr.mxu0 0.0
    %4023 = vmatpush2.msra.mxu0 0.0
    %4024 = vmatprep.subr.mxu0 0.0
    %4025 = vmatpush2.msra.mxu0 0.0
    %4026 = vmatprep.subr.mxu0 0.0
    %4027 = vmatpush2.msra.mxu0 0.0
    %4028 = vmatprep.subr.mxu0 0.0
    %4029 = vmatpush2.msra.mxu0 0.0
    %4030 = vmatprep.subr.mxu0 0.0
    %4031 = vmatpush2.msra.mxu0 0.0
    %4032 = vmatprep.subr.mxu0 0.0
    %4033 = vmatpush2.msra.mxu0 0.0
    %4034 = vmatprep.subr.mxu0 0.0
    %4035 = vmatpush2.msra.mxu0 0.0
    %4036 = vmatprep.subr.mxu0 0.0
    %4037 = vmatpush2.msra.mxu0 0.0
    %4038 = vmatprep.subr.mxu0 0.0
    %4039 = vmatpush2.msra.mxu0 0.0
    %4040 = vmatprep.subr.mxu0 0.0
    %4041 = vmatpush2.msra.mxu0 0.0
    %4042 = vmatprep.subr.mxu0 0.0
    %4043 = vmatpush2.msra.mxu0 0.0
    %4044 = vmatprep.subr.mxu0 0.0
    %4045 = vmatpush2.msra.mxu0 0.0
    %4046 = vmatprep.subr.mxu0 0.0
    %4047 = vmatpush2.msra.mxu0 0.0
    %4048 = vmatprep.subr.mxu0 0.0
    %4049 = vmatpush2.msra.mxu0 0.0
    %4050 = vmatprep.subr.mxu0 0.0
    %4051 = vmatpush2.msra.mxu0 0.0
    %4052 = vmatprep.mubr.f32.mxu0 0.0
    %4053 = vmatmul.mubr.f32.gmra.mxu0 %v3967
    %v4054 = vpop.f32.mrf.mxu0
    %v4055 = vadd.f32 0.0, %v4054
    %v4056 = vpop.f32.mrf.mxu0
    %4057 = vmatprep.mubr.f32.mxu0 0.0
    %4058 = vmatmul.mubr.f32.gmra.mxu0 %v3968
    %v4059 = vpop.f32.mrf.mxu0
    %v4060 = vadd.f32 0.0, %v4059
    %v4061 = vpop.f32.mrf.mxu0
    %4062 = vmatprep.mubr.f32.mxu0 0.0
    %4063 = vmatmul.mubr.f32.gmra.mxu0 %v3969
    %v4064 = vpop.f32.mrf.mxu0
    %v4065 = vadd.f32 0.0, %v4064
    %v4066 = vpop.f32.mrf.mxu0
    %4067 = vmatprep.mubr.f32.mxu0 0.0
    %4068 = vmatmul.mubr.f32.gmra.mxu0 %v3970
    %v4069 = vpop.f32.mrf.mxu0
    %v4070 = vadd.f32 0.0, %v4069
    %v4071 = vpop.f32.mrf.mxu0
    %4072 = vdwg.mxu0
    %v4073 = vadd.f32 %v3753, %v4055
    %v4074 = vadd.f32 %v3754, %v4060
    %v4075 = vadd.f32 %v3755, %v4065
    %v4076 = vadd.f32 %v3756, %v4070
    %v4077 = vld [vmem:[%s15] sm:$0x1]
    %v4078 = vld [vmem:[%s16] sm:$0x1]
    %v4079 = vsel %vm246, %v4073, 0.0
    %4080 = vadd.xlane.f32.xlu0 %v4079
    %v4081 = vpop.xlane.xlu0 %4080
    %v4082 = vsel %vm246, %v4074, 0.0
    %4083 = vadd.xlane.f32.xlu0 %v4082
    %v4084 = vpop.xlane.xlu0 %4083
    %v4085 = vsel %vm246, %v4075, 0.0
    %4086 = vadd.xlane.f32.xlu0 %v4085
    %v4087 = vpop.xlane.xlu0 %4086
    %v4088 = vsel %vm246, %v4076, 0.0
    %4089 = vadd.xlane.f32.xlu0 %v4088
    %v4090 = vpop.xlane.xlu0 %4089
    %v4091 = vmul.f32 %v4081, %v259
    %v4092 = vmul.f32 %v4084, %v259
    %v4093 = vmul.f32 %v4087, %v259
    %v4094 = vmul.f32 %v4090, %v259
    %v4095 = vsub.f32 %v4073, %v4091
    %v4096 = vsub.f32 %v4074, %v4092
    %v4097 = vsub.f32 %v4075, %v4093
    %v4098 = vsub.f32 %v4076, %v4094
    %v4099 = vmul.f32 %v4095, %v4095
    %v4100 = vmul.f32 %v4096, %v4096
    %v4101 = vmul.f32 %v4097, %v4097
    %v4102 = vmul.f32 %v4098, %v4098
    %v4103 = vsel %vm246, %v4099, 0.0
    %4104 = vadd.xlane.f32.xlu0 %v4103
    %v4105 = vpop.xlane.xlu0 %4104
    %v4106 = vsel %vm246, %v4100, 0.0
    %4107 = vadd.xlane.f32.xlu0 %v4106
    %v4108 = vpop.xlane.xlu0 %4107
    %v4109 = vsel %vm246, %v4101, 0.0
    %4110 = vadd.xlane.f32.xlu0 %v4109
    %v4111 = vpop.xlane.xlu0 %4110
    %v4112 = vsel %vm246, %v4102, 0.0
    %4113 = vadd.xlane.f32.xlu0 %v4112
    %v4114 = vpop.xlane.xlu0 %4113
    %v4115 = vmul.f32 %v4105, %v259
    %v4116 = vmul.f32 %v4108, %v259
    %v4117 = vmul.f32 %v4111, %v259
    %v4118 = vmul.f32 %v4114, %v259
    %v4119 = vadd.f32 %v4115, 1e-06
    %v4120 = vadd.f32 %v4116, 1e-06
    %v4121 = vadd.f32 %v4117, 1e-06
    %v4122 = vadd.f32 %v4118, 1e-06
    %v4123 = vrsqrt.pop %v4119
    %v4124 = vrsqrt.pop %v4120
    %v4125 = vrsqrt.pop %v4121
    %v4126 = vrsqrt.pop %v4122
    %v4127 = vmul.f32 %v4095, %v4123
    %v4128 = vmul.f32 %v4096, %v4124
    %v4129 = vmul.f32 %v4097, %v4125
    %v4130 = vmul.f32 %v4098, %v4126
    %v4132 = vlaneseq
    %v4133 = vshrl.u32 %v4132, 7
    %v4134 = vsub.s32 0, %v4133
    %v4135 = vrot.slane %v4077, %v4134
    %v4137 = vmul.f32 %v4127, %v4135
    %v4138 = vmul.f32 %v4128, %v4135
    %v4139 = vmul.f32 %v4129, %v4135
    %v4140 = vmul.f32 %v4130, %v4135
    %v4142 = vlaneseq
    %v4143 = vshrl.u32 %v4142, 7
    %v4144 = vsub.s32 0, %v4143
    %v4145 = vrot.slane %v4078, %v4144
    %v4147 = vadd.f32 %v4137, %v4145
    %v4148 = vadd.f32 %v4138, %v4145
    %v4149 = vadd.f32 %v4139, %v4145
    %v4150 = vadd.f32 %v4140, %v4145
    %v4151 = vld [vmem:[%s17] sm:$0xff]
    %v4152 = vld [vmem:[%s17 + $0x8] sm:$0xff]
    %v4153 = vld [vmem:[%s17 + $0x10] sm:$0xff]
    %v4154 = vld [vmem:[%s17 + $0x18] sm:$0xff]
    %v4156 = vsel %vm246, %v4147, 0
    %v4159 = vsel %vm246, %v4148, 0
    %v4162 = vsel %vm246, %v4149, 0
    %v4165 = vsel %vm246, %v4150, 0
    %4167 = vmatprep.subr.mxu0 0.0
    %4168 = vmatpush1.msra.mxu0 0.0
    %4169 = vmatprep.subr.mxu0 0.0
    %4170 = vmatpush1.msra.mxu0 0.0
    %4171 = vmatprep.subr.mxu0 0.0
    %4172 = vmatpush1.msra.mxu0 0.0
    %4173 = vmatprep.subr.mxu0 0.0
    %4174 = vmatpush1.msra.mxu0 0.0
    %4175 = vmatprep.subr.mxu0 0.0
    %4176 = vmatpush1.msra.mxu0 0.0
    %4177 = vmatprep.subr.mxu0 0.0
    %4178 = vmatpush1.msra.mxu0 0.0
    %4179 = vmatprep.subr.mxu0 0.0
    %4180 = vmatpush1.msra.mxu0 0.0
    %4181 = vmatprep.subr.mxu0 0.0
    %4182 = vmatpush1.msra.mxu0 0.0
    %4183 = vmatprep.subr.mxu0 0.0
    %4184 = vmatpush1.msra.mxu0 0.0
    %4185 = vmatprep.subr.mxu0 0.0
    %4186 = vmatpush1.msra.mxu0 0.0
    %4187 = vmatprep.subr.mxu0 0.0
    %4188 = vmatpush1.msra.mxu0 0.0
    %4189 = vmatprep.subr.mxu0 0.0
    %4190 = vmatpush1.msra.mxu0 0.0
    %4191 = vmatprep.subr.mxu0 0.0
    %4192 = vmatpush1.msra.mxu0 %v4154
    %4193 = vmatprep.subr.mxu0 0.0
    %4194 = vmatpush1.msra.mxu0 %v4153
    %4195 = vmatprep.subr.mxu0 0.0
    %4196 = vmatpush1.msra.mxu0 %v4152
    %4197 = vmatprep.subr.mxu0 0.0
    %4198 = vmatpush1.msra.mxu0 %v4151
    %4199 = vmatprep.subr.mxu0 0.0
    %4200 = vmatpush2.msra.mxu0 0.0
    %4201 = vmatprep.subr.mxu0 0.0
    %4202 = vmatpush2.msra.mxu0 0.0
    %4203 = vmatprep.subr.mxu0 0.0
    %4204 = vmatpush2.msra.mxu0 0.0
    %4205 = vmatprep.subr.mxu0 0.0
    %4206 = vmatpush2.msra.mxu0 0.0
    %4207 = vmatprep.subr.mxu0 0.0
    %4208 = vmatpush2.msra.mxu0 0.0
    %4209 = vmatprep.subr.mxu0 0.0
    %4210 = vmatpush2.msra.mxu0 0.0
    %4211 = vmatprep.subr.mxu0 0.0
    %4212 = vmatpush2.msra.mxu0 0.0
    %4213 = vmatprep.subr.mxu0 0.0
    %4214 = vmatpush2.msra.mxu0 0.0
    %4215 = vmatprep.subr.mxu0 0.0
    %4216 = vmatpush2.msra.mxu0 0.0
    %4217 = vmatprep.subr.mxu0 0.0
    %4218 = vmatpush2.msra.mxu0 0.0
    %4219 = vmatprep.subr.mxu0 0.0
    %4220 = vmatpush2.msra.mxu0 0.0
    %4221 = vmatprep.subr.mxu0 0.0
    %4222 = vmatpush2.msra.mxu0 0.0
    %4223 = vmatprep.subr.mxu0 0.0
    %4224 = vmatpush2.msra.mxu0 0.0
    %4225 = vmatprep.subr.mxu0 0.0
    %4226 = vmatpush2.msra.mxu0 0.0
    %4227 = vmatprep.subr.mxu0 0.0
    %4228 = vmatpush2.msra.mxu0 0.0
    %4229 = vmatprep.subr.mxu0 0.0
    %4230 = vmatpush2.msra.mxu0 0.0
    %4231 = vmatprep.mubr.f32.mxu0 0.0
    %4232 = vmatmul.mubr.f32.gmra.mxu0 %v4156
    %v4233 = vpop.f32.mrf.mxu0
    %v4234 = vadd.f32 0.0, %v4233
    %v4235 = vpop.f32.mrf.mxu0
    %4236 = vmatprep.mubr.f32.mxu0 0.0
    %4237 = vmatmul.mubr.f32.gmra.mxu0 %v4159
    %v4238 = vpop.f32.mrf.mxu0
    %v4239 = vadd.f32 0.0, %v4238
    %v4240 = vpop.f32.mrf.mxu0
    %4241 = vmatprep.mubr.f32.mxu0 0.0
    %4242 = vmatmul.mubr.f32.gmra.mxu0 %v4162
    %v4243 = vpop.f32.mrf.mxu0
    %v4244 = vadd.f32 0.0, %v4243
    %v4245 = vpop.f32.mrf.mxu0
    %4246 = vmatprep.mubr.f32.mxu0 0.0
    %4247 = vmatmul.mubr.f32.gmra.mxu0 %v4165
    %v4248 = vpop.f32.mrf.mxu0
    %v4249 = vadd.f32 0.0, %v4248
    %v4250 = vpop.f32.mrf.mxu0
    %4251 = vdwg.mxu0
    %4252 = vst [vmem:[#allocation2] sm:$0xff] %v4234
    %4253 = vst [vmem:[#allocation2 + $0x8] sm:$0xff] %v4239
    %4254 = vst [vmem:[#allocation2 + $0x10] sm:$0xff] %v4244
    %4255 = vst [vmem:[#allocation2 + $0x18] sm:$0xff] %v4249
    %vm4256 = vcmp.lt.s32.totalorder %v76, 64
    %v4257 = vsel %vm4256, %v4234, -1e+30
    %v4258 = vsel %vm4256, %v4239, -1e+30
    %v4259 = vsel %vm4256, %v4244, -1e+30
    %v4260 = vsel %vm4256, %v4249, -1e+30
    %v4261 = vsel %vm71, %v63, 4294967196
    %v4262 = vsel %vm72, %v64, 4294967196
    %v4263 = vsel %vm73, %v65, 4294967196
    %v4264 = vsel %vm74, %v66, 4294967196
    %4265 = vmax.xlane.f32.xlu0 %v4257
    %v4266 = vpop.xlane.xlu0 %4265
    %4267 = vmax.xlane.f32.xlu0 %v4258
    %v4268 = vpop.xlane.xlu0 %4267
    %4269 = vmax.xlane.f32.xlu0 %v4259
    %v4270 = vpop.xlane.xlu0 %4269
    %4271 = vmax.xlane.f32.xlu0 %v4260
    %v4272 = vpop.xlane.xlu0 %4271
    %v4273 = vsub.f32 %v4257, %v4266
    %v4274 = vsub.f32 %v4258, %v4268
    %v4275 = vsub.f32 %v4259, %v4270
    %v4276 = vsub.f32 %v4260, %v4272
    %v4277 = vmul.f32 %v4273, 1.442695
    %v4278 = vpow.pop %v4277
    %v4279 = vmul.f32 %v4274, 1.442695
    %v4280 = vpow.pop %v4279
    %v4281 = vmul.f32 %v4275, 1.442695
    %v4282 = vpow.pop %v4281
    %v4283 = vmul.f32 %v4276, 1.442695
    %v4284 = vpow.pop %v4283
    %4285 = vadd.xlane.f32.xlu0 %v4278
    %v4286 = vpop.xlane.xlu0 %4285
    %4287 = vadd.xlane.f32.xlu0 %v4280
    %v4288 = vpop.xlane.xlu0 %4287
    %4289 = vadd.xlane.f32.xlu0 %v4282
    %v4290 = vpop.xlane.xlu0 %4289
    %4291 = vadd.xlane.f32.xlu0 %v4284
    %v4292 = vpop.xlane.xlu0 %4291
    %v4293 = vlog2.pop %v4286
    %v4294 = vmul.f32 %v4293, 0.6931472
    %v4295 = vlog2.pop %v4288
    %v4296 = vmul.f32 %v4295, 0.6931472
    %v4297 = vlog2.pop %v4290
    %v4298 = vmul.f32 %v4297, 0.6931472
    %v4299 = vlog2.pop %v4292
    %v4300 = vmul.f32 %v4299, 0.6931472
    %v4301 = vadd.f32 %v4294, %v4266
    %v4302 = vadd.f32 %v4296, %v4268
    %v4303 = vadd.f32 %v4298, %v4270
    %v4304 = vadd.f32 %v4300, %v4272
    %4305 = vset.pattern.permute.xlu0 0
    %4306 = vperm.xlu0 %4305, %v4261
    %v4307 = vpop.permute.xlu0 %4306
    %4308 = vset.pattern.permute.xlu0 0
    %4309 = vperm.xlu0 %4308, %v4262
    %v4310 = vpop.permute.xlu0 %4309
    %4311 = vset.pattern.permute.xlu0 0
    %4312 = vperm.xlu0 %4311, %v4263
    %v4313 = vpop.permute.xlu0 %4312
    %4314 = vset.pattern.permute.xlu0 0
    %4315 = vperm.xlu0 %4314, %v4264
    %v4316 = vpop.permute.xlu0 %4315
    %vm4317 = vcmp.eq.s32.totalorder %v76, %v4307
    %vm4318 = vcmp.eq.s32.totalorder %v76, %v4310
    %vm4319 = vcmp.eq.s32.totalorder %v76, %v4313
    %vm4320 = vcmp.eq.s32.totalorder %v76, %v4316
    %v4321 = vsel %vm4317, %v4234, 0.0
    %v4322 = vsel %vm4318, %v4239, 0.0
    %v4323 = vsel %vm4319, %v4244, 0.0
    %v4324 = vsel %vm4320, %v4249, 0.0
    %4325 = vadd.xlane.f32.xlu0 %v4321
    %v4326 = vpop.xlane.xlu0 %4325
    %4327 = vadd.xlane.f32.xlu0 %v4322
    %v4328 = vpop.xlane.xlu0 %4327
    %4329 = vadd.xlane.f32.xlu0 %v4323
    %v4330 = vpop.xlane.xlu0 %4329
    %4331 = vadd.xlane.f32.xlu0 %v4324
    %v4332 = vpop.xlane.xlu0 %4331
    %vm4333 = vcmp.ne.s32.totalorder %v4261, 4294967196
    %vm4334 = vcmp.ne.s32.totalorder %v4262, 4294967196
    %vm4335 = vcmp.ne.s32.totalorder %v4263, 4294967196
    %vm4336 = vcmp.ne.s32.totalorder %v4264, 4294967196
    %v4337 = vsub.f32 %v4301, %v4326
    %v4338 = vsub.f32 %v4302, %v4328
    %v4339 = vsub.f32 %v4303, %v4330
    %v4340 = vsub.f32 %v4304, %v4332
    %v4341 = vsel %vm4333, %v4337, 0.0
    %v4342 = vsel %vm4334, %v4338, 0.0
    %v4343 = vsel %vm4335, %v4339, 0.0
    %v4344 = vsel %vm4336, %v4340, 0.0
    %vm4345 = vcmask 7168
    %v4346 = vsel %vm4345, %v4341, 0.0
    %v4347 = vsel %vm4345, %v4342, 0.0
    %v4348 = vadd.f32 %v4346, %v4347
    %v4349 = vsel %vm4345, %v4343, 0.0
    %v4350 = vadd.f32 %v4348, %v4349
    %v4351 = vsel %vm4345, %v4344, 0.0
    %v4352 = vadd.f32 %v4350, %v4351
    %4353 = vadd.xlane.f32.xlu0 %v4352
    %v4354 = vpop.xlane.xlu0 %4353
    %v4355 = vrot.slane %v4354, 4
    %v4356 = vadd.f32 %v4354, %v4355
    %v4357 = vrot.slane %v4356, 2
    %v4358 = vadd.f32 %v4356, %v4357
    %v4359 = vrot.slane %v4358, 1
    %v4360 = vadd.f32 %v4358, %v4359
    %s4361 = vtos %v4360
    %v4362 = vstv %s4361
    %v4363 = vsel %vm4333, 1, 0
    %v4364 = vsel %vm4334, 1, 0
    %v4365 = vsel %vm4335, 1, 0
    %v4366 = vsel %vm4336, 1, 0
    %v4367 = vcvt.s32.f32 %v4363
    %v4368 = vcvt.s32.f32 %v4364
    %v4369 = vcvt.s32.f32 %v4365
    %v4370 = vcvt.s32.f32 %v4366
    %v4371 = vsel %vm4345, %v4367, 0.0
    %v4372 = vsel %vm4345, %v4368, 0.0
    %v4373 = vadd.f32 %v4371, %v4372
    %v4374 = vsel %vm4345, %v4369, 0.0
    %v4375 = vadd.f32 %v4373, %v4374
    %v4376 = vsel %vm4345, %v4370, 0.0
    %v4377 = vadd.f32 %v4375, %v4376
    %4378 = vadd.xlane.f32.xlu0 %v4377
    %v4379 = vpop.xlane.xlu0 %4378
    %v4380 = vrot.slane %v4379, 4
    %v4381 = vadd.f32 %v4379, %v4380
    %v4382 = vrot.slane %v4381, 2
    %v4383 = vadd.f32 %v4381, %v4382
    %v4384 = vrot.slane %v4383, 1
    %v4385 = vadd.f32 %v4383, %v4384
    %s4386 = vtos %v4385
    %v4387 = vstv %s4386
    %v4388 = vmax.f32 %v4387, 1.0
    %v4389 = vrcp.pop %v4388
    %v4390 = vmul.f32 %v4362, %v4389
    %vm4391 = vcmask 0
    %4392 = vst.msk [vmem:[#allocation4] sm:$0x1] %vm4391, %v4390
    // Predicated region
    $region74: #{maskgit_forward.1} parent=1 // pred_check
      _
    $region75: #{maskgit_forward.1} parent=1 // pred_check_branch
      %4394 = sbr.rel (0) target = $region77
    $region76: #{maskgit_forward.1} parent=1 // pred_region
      %s4396 = ssub.s32 512, 512
      %4397 = vsyncadd [#allocation3], %s4396
      %s4398 = sshll.u32 [#allocation2], 4
      %s4399 = int_to_ptr.vmem [resolvable:$true] %s4398
      %4404 = dma.vmem_to_hbm [thread:$0]  %s4399, 512, %s18, [#allocation3], 128, 128, 8
    $region77: #{maskgit_forward.1} parent=1 // pred_fallthru
      _
    // Predicated region
    $region78: #{maskgit_forward.1} parent=1 // pred_check
      _
    $region79: #{maskgit_forward.1} parent=1 // pred_check_branch
      %4406 = sbr.rel (0) target = $region81
    $region80: #{maskgit_forward.1} parent=1 // pred_region
      %s4408 = ssub.s32 16, 16
      %4409 = vsyncadd [#allocation5], %s4408
      %s4411 = sshll.u32 [#allocation4], 4
      %s4412 = int_to_ptr.vmem [resolvable:$true] %s4411
      %4414 = dma.vmem_to_hbm [thread:$0]  %s4412, 16, %s19, [#allocation5]
    $region81: #{maskgit_forward.1} parent=1 // pred_fallthru
      _
    // Predicated region
    $region82: #{maskgit_forward.1} parent=1 // pred_check
      _
    $region83: #{maskgit_forward.1} parent=1 // pred_check_branch
      %4416 = sbr.rel (0) target = $region85
    $region84: #{maskgit_forward.1} parent=1 // pred_region
      %4417 = dma.done [#allocation3], 512
    $region85: #{maskgit_forward.1} parent=1 // pred_fallthru
      _
    // Predicated region
    $region86: #{maskgit_forward.1} parent=1 // pred_check
      _
    $region87: #{maskgit_forward.1} parent=1 // pred_check_branch
      %4419 = sbr.rel (0) target = $region89
    $region88: #{maskgit_forward.1} parent=1 // pred_region
      %4420 = dma.done [#allocation5], 16
    $region89: #{maskgit_forward.1} parent=1 // pred_fallthru
      _
    %4421 = vsyncpa [#allocation3], 1
    %4422 = vsyncpa [#allocation5], 1

</llo_original>
